<compile_context>
chip_gen: v6e
topology: v6e:2x2x1
jax: 0.10.0
libtpu: 0.0.40
codegen_flags: <defaults>
</compile_context>

<pallas_src>
import functools
import math

import jax
import jax.numpy as jnp
from jax.experimental import pallas as pl
from jax.experimental.pallas import tpu as pltpu

_EPS = 1e-5
_VMEM_LIMIT = 32 * 1024 * 1024


def _ds(start, size, stride):
    """pl.ds that only passes a stride when it is non-trivial."""
    return pl.ds(start, size) if stride == 1 else pl.ds(start, size, stride)


# ---------------------------------------------------------------------------
# Kernel 1: fused 1x1 pointwise conv + strided 3x3 depthwise conv + statistics
# ---------------------------------------------------------------------------
def _ftm_conv_kernel(x_ref, pww_ref, pwb_ref, dww_ref,        # inputs
                     dw_ref, s1_ref, s2_ref,                  # outputs
                     buf_ref,                                 # VMEM scratch
                     *, stride, padding, Ho, Wo):
    H, W, Cin = x_ref.shape[1], x_ref.shape[2], x_ref.shape[3]
    K = pww_ref.shape[1]
    x = x_ref[0]                                              # (H, W, Cin)

    # 1x1 pointwise conv as a VPU broadcast-MAC (Cin/K far too small for the MXU).
    # TODO(synk): for real ResNet channel widths switch to an MXU matmul over
    #             (H*W, Cin) x (Cin, K) tiles with an f32 accumulator.
    pw = jnp.zeros((H, W, K), jnp.float32) + pwb_ref[0, :]
    for c in range(Cin):
        pw = pw + x[:, :, c:c + 1] * pww_ref[c, :]

    # Zero-padded staging buffer in VMEM for the depthwise conv.
    buf_ref[...] = jnp.zeros(buf_ref.shape, buf_ref.dtype)
    buf_ref[pl.ds(padding, H), pl.ds(padding, W), :] = pw

    # 3x3 depthwise conv; only strided output positions are computed (no 4x waste).
    acc = jnp.zeros((Ho, Wo, K), jnp.float32)
    for di in range(3):
        for dj in range(3):
            win = buf_ref[_ds(di, Ho, stride), _ds(dj, Wo, stride), :]
            acc = acc + win * dww_ref[di * 3 + dj, :]
    dw_ref[0] = acc

    # Per-image per-channel statistics while the tile is still resident in VMEM:
    #   s1 -> NeighborFusion global-average-pool and BN mean
    #   s2 -> BN variance
    s1_ref[0, 0] = jnp.sum(jnp.sum(acc, axis=0), axis=0)
    s2_ref[0, 0] = jnp.sum(jnp.sum(acc * acc, axis=0), axis=0)


def _ftm_conv(x_nhwc, p, stride, padding):
    N, H, W, Cin = x_nhwc.shape
    K = p['pw1_w'].shape[1]
    Ho = (H + 2 * padding - 3) // stride + 1
    Wo = (W + 2 * padding - 3) // stride + 1
    kern = functools.partial(_ftm_conv_kernel, stride=stride, padding=padding,
                             Ho=Ho, Wo=Wo)
    dw, s1, s2 = pl.pallas_call(
        kern,
        grid=(N,),
        in_specs=[
            pl.BlockSpec((1, H, W, Cin), lambda n: (n, 0, 0, 0)),
            pl.BlockSpec((Cin, K), lambda n: (0, 0)),
            pl.BlockSpec((1, K), lambda n: (0, 0)),
            pl.BlockSpec((9, K), lambda n: (0, 0)),
        ],
        out_specs=[
            pl.BlockSpec((1, Ho, Wo, K), lambda n: (n, 0, 0, 0)),
            pl.BlockSpec((1, 1, K), lambda n: (n, 0, 0)),
            pl.BlockSpec((1, 1, K), lambda n: (n, 0, 0)),
        ],
        out_shape=(
            jax.ShapeDtypeStruct((N, Ho, Wo, K), jnp.float32),
            jax.ShapeDtypeStruct((N, 1, K), jnp.float32),
            jax.ShapeDtypeStruct((N, 1, K), jnp.float32),
        ),
        scratch_shapes=[
            pltpu.VMEM((H + 2 * padding, W + 2 * padding, K), jnp.float32)],
        compiler_params=pltpu.CompilerParams(
            dimension_semantics=("parallel",),
            vmem_limit_bytes=_VMEM_LIMIT),
    )(x_nhwc, p['pw1_w'], p['pw1_b'].reshape(1, K), p['dw_w'].reshape(9, K))
    return dw, s1, s2


# ---------------------------------------------------------------------------
# Kernel 2: fused NeighborFusion gate + BatchNorm affine + concat/slice
#           (+ residual add) + ReLU, streaming over (batch, row-tile) grid.
# ---------------------------------------------------------------------------
def _nf_bn_act_kernel(dw_ref, a_ref, b_ref, o_ref, *, c2):
    d = dw_ref[0]                                             # (TH, Wo, K)
    full = jnp.concatenate([d, d[:, :, :c2]], axis=-1)        # (TH, Wo, C)
    o_ref[0] = jnp.maximum(full * a_ref[0, 0] + b_ref[0, 0], 0.0)


def _nf_bn_add_act_kernel(dw_ref, a_ref, b_ref, r_ref, o_ref, *, c2):
    d = dw_ref[0]
    full = jnp.concatenate([d, d[:, :, :c2]], axis=-1)
    o_ref[0] = jnp.maximum(full * a_ref[0, 0] + b_ref[0, 0] + r_ref[0], 0.0)


def _apply_nf_bn_act(dw, A, B, planes, res=None):
    N, Ho, Wo, K = dw.shape
    c2 = planes - K
    TH = 8 if Ho % 8 == 0 else Ho
    grid = (N, Ho // TH)
    in_specs = [
        pl.BlockSpec((1, TH, Wo, K), lambda n, r: (n, r, 0, 0)),
        pl.BlockSpec((1, 1, planes), lambda n, r: (n, 0, 0)),
        pl.BlockSpec((1, 1, planes), lambda n, r: (0, 0, 0)),
    ]
    args = [dw, A, B]
    if res is None:
        kern = functools.partial(_nf_bn_act_kernel, c2=c2)
    else:
        in_specs.append(
            pl.BlockSpec((1, TH, Wo, planes), lambda n, r: (n, r, 0, 0)))
        args.append(res)
        kern = functools.partial(_nf_bn_add_act_kernel, c2=c2)
    return pl.pallas_call(
        kern,
        grid=grid,
        in_specs=in_specs,
        out_specs=pl.BlockSpec((1, TH, Wo, planes), lambda n, r: (n, r, 0, 0)),
        out_shape=jax.ShapeDtypeStruct((N, Ho, Wo, planes), jnp.float32),
        compiler_params=pltpu.CompilerParams(
            dimension_semantics=("parallel", "parallel"),
            vmem_limit_bytes=_VMEM_LIMIT),
    )(*args)


# ---------------------------------------------------------------------------
# Tiny (N, K)-sized statistic folding done in plain JAX between the kernels.
# ---------------------------------------------------------------------------
def _fold_nf_bn(s1, s2, nf_w, gamma, beta, planes, hw):
    """Fold the NeighborFusion sigmoid gate and training-mode BatchNorm into a
    per-(image, out-channel) scale A and per-out-channel bias B."""
    s1 = s1[:, 0, :]                                          # (N, K)
    s2 = s2[:, 0, :]
    N, K = s1.shape
    c2 = planes - K
    p_total = N * hw

    gate = jax.nn.sigmoid(nf_w[0] * s1 / hw)                  # (N, K)
    mean = jnp.concatenate(
        [jnp.sum(s1, axis=0),
         jnp.sum(gate[:, :c2] * s1[:, :c2], axis=0)]) / p_total
    ex2 = jnp.concatenate(
        [jnp.sum(s2, axis=0),
         jnp.sum(gate[:, :c2] ** 2 * s2[:, :c2], axis=0)]) / p_total
    var = ex2 - mean * mean                                   # biased batch var
    g_eff = gamma * jax.lax.rsqrt(var + _EPS)                 # (planes,)
    b_eff = beta - mean * g_eff
    s_eff = jnp.concatenate(
        [jnp.ones((N, K), jnp.float32), gate[:, :c2]], axis=1)   # (N, planes)
    A = (s_eff * g_eff[None, :]).reshape(N, 1, planes)
    B = b_eff.reshape(1, 1, planes)
    return A, B


# ---------------------------------------------------------------------------
# BasicBlock forward
# ---------------------------------------------------------------------------
def basic_block_forward(x_nchw, params, in_planes, planes, stride):
    # TODO(synk): fold the boundary transposes into the first/last kernels.
    x = jnp.transpose(x_nchw, (0, 2, 3, 1))                   # NCHW -> NHWC

    # conv1 -> bn1 -> relu  (two fused pallas_calls)
    dw1, s11, s21 = _ftm_conv(x, params['conv1'], stride, 1)
    hw1 = dw1.shape[1] * dw1.shape[2]
    A1, B1 = _fold_nf_bn(s11, s21, params['conv1']['nf_w'],
                         params['bn1_g'], params['bn1_b'], planes, hw1)
    out = _apply_nf_bn_act(dw1, A1, B1, planes)

    # conv2 -> bn2 -> (+shortcut) -> relu  (two fused pallas_calls)
    dw2, s12, s22 = _ftm_conv(out, params['conv2'], 1, 1)
    hw2 = dw2.shape[1] * dw2.shape[2]
    A2, B2 = _fold_nf_bn(s12, s22, params['conv2']['nf_w'],
                         params['bn2_g'], params['bn2_b'], planes, hw2)

    if stride != 1 or in_planes != planes:
        # option 'A' shortcut: spatial subsample + zero-pad channels
        sc = x[:, ::2, ::2, :]
        cp = planes // 4
        sc = jnp.pad(sc, ((0, 0), (0, 0), (0, 0), (cp, cp)))
    else:
        sc = x
    out = _apply_nf_bn_act(dw2, A2, B2, planes, res=sc)
    return jnp.transpose(out, (0, 3, 1, 2))                   # NHWC -> NCHW


# ---------------------------------------------------------------------------
# Parameters & pure-JAX reference (for a correctness check in __main__)
# ---------------------------------------------------------------------------
def init_params(key, in_planes, planes):
    def ftm_params(k, cin, cout):
        kk = math.ceil(cout / 2)
        k1, k2, k3, k4 = jax.random.split(k, 4)
        return {
            'pw1_w': 0.2 * jax.random.normal(k1, (cin, kk), jnp.float32),
            'pw1_b': 0.1 * jax.random.normal(k2, (kk,), jnp.float32),
            'dw_w': 0.2 * jax.random.normal(k3, (3, 3, kk), jnp.float32),
            'nf_w': 0.5 * jax.random.normal(k4, (1,), jnp.float32),
        }
    ka, kb, kc, kd = jax.random.split(key, 4)
    return {
        'conv1': ftm_params(ka, in_planes, planes),
        'conv2': ftm_params(kb, planes, planes),
        'bn1_g': 1.0 + 0.1 * jax.random.normal(kc, (planes,), jnp.float32),
        'bn1_b': 0.1 * jax.random.normal(kd, (planes,), jnp.float32),
        'bn2_g': jnp.ones((planes,), jnp.float32),
        'bn2_b': jnp.zeros((planes,), jnp.float32),
    }


def _ref_ftm(x, p, stride, padding, planes):
    y = jnp.einsum('nhwc,ck->nhwk', x, p['pw1_w']) + p['pw1_b']
    yp = jnp.pad(y, ((0, 0), (padding, padding), (padding, padding), (0, 0)))
    Hp, Wp = yp.shape[1], yp.shape[2]
    Ho = (Hp - 3) // stride + 1
    Wo = (Wp - 3) // stride + 1
    dw = jnp.zeros((yp.shape[0], Ho, Wo, yp.shape[3]), jnp.float32)
    for di in range(3):
        for dj in range(3):
            win = yp[:, di:di + stride * (Ho - 1) + 1:stride,
                     dj:dj + stride * (Wo - 1) + 1:stride, :]
            dw = dw + win * p['dw_w'][di, dj]
    gate = jax.nn.sigmoid(p['nf_w'][0] * jnp.mean(dw, axis=(1, 2), keepdims=True))
    return jnp.concatenate([dw, dw * gate], axis=-1)[..., :planes]


def _ref_bn(x, g, b):
    mean = jnp.mean(x, axis=(0, 1, 2), keepdims=True)
    var = jnp.mean((x - mean) ** 2, axis=(0, 1, 2), keepdims=True)
    return (x - mean) * jax.lax.rsqrt(var + _EPS) * g + b


def _ref_block(x_nchw, params, in_planes, planes, stride):
    x = jnp.transpose(x_nchw, (0, 2, 3, 1))
    out = jax.nn.relu(_ref_bn(_ref_ftm(x, params['conv1'], stride, 1, planes),
                              params['bn1_g'], params['bn1_b']))
    out = _ref_bn(_ref_ftm(out, params['conv2'], 1, 1, planes),
                  params['bn2_g'], params['bn2_b'])
    if stride != 1 or in_planes != planes:
        sc = x[:, ::2, ::2, :]
        cp = planes // 4
        sc = jnp.pad(sc, ((0, 0), (0, 0), (0, 0), (cp, cp)))
    else:
        sc = x
    out = jax.nn.relu(out + sc)
    return jnp.transpose(out, (0, 3, 1, 2))


if __name__ == "__main__":
    key = jax.random.PRNGKey(0)
    kx, kp = jax.random.split(key)
    in_planes, planes, stride = 4, 8, 2
    x = jax.random.normal(kx, (2, in_planes, 16, 16), jnp.float32)  # NCHW, like PyTorch
    params = init_params(kp, in_planes, planes)

    fwd = jax.jit(functools.partial(basic_block_forward, in_planes=in_planes,
                                    planes=planes, stride=stride))
    out = jax.block_until_ready(fwd(x, params))

    assert out.shape == (2, planes, 8, 8), out.shape
    assert bool(jnp.all(jnp.isfinite(out)))
    ref = _ref_block(x, params, in_planes, planes, stride)
    err = float(jnp.max(jnp.abs(out - ref)))
    assert err < 2e-3, f"max abs error vs reference: {err}"
    print("KERNEL_OK")
</pallas_src>

<mosaic_0001>
module attributes {stable_mosaic.version = 11 : i64} {
  func.func @_ftm_conv_kernel(%arg0: i32, %arg1: memref<1x16x16x4xf32, #tpu.memory_space<vmem>>, %arg2: memref<4x4xf32, #tpu.memory_space<vmem>>, %arg3: memref<1x4xf32, #tpu.memory_space<vmem>>, %arg4: memref<9x4xf32, #tpu.memory_space<vmem>>, %arg5: memref<1x8x8x4xf32, #tpu.memory_space<vmem>>, %arg6: memref<1x1x4xf32, #tpu.memory_space<vmem>>, %arg7: memref<1x1x4xf32, #tpu.memory_space<vmem>>, %arg8: memref<18x18x4xf32, #tpu.memory_space<vmem>>) attributes {dimension_semantics = [#tpu.dimension_semantics<parallel>], iteration_bounds = array<i64: 2>, scalar_prefetch = 0 : i64, scratch_operands = 1 : i64, tpu.core_type = #tpu.core_type<tc>, window_params = [{transform_indices = @transform_0, window_bounds = array<i64: 1, 16, 16, 4>}, {pipeline_mode = #tpu.pipeline_mode<synchronous>, transform_indices = @transform_1, window_bounds = array<i64: 4, 4>}, {pipeline_mode = #tpu.pipeline_mode<synchronous>, transform_indices = @transform_2, window_bounds = array<i64: 1, 4>}, {pipeline_mode = #tpu.pipeline_mode<synchronous>, transform_indices = @transform_3, window_bounds = array<i64: 9, 4>}, {transform_indices = @transform_4, window_bounds = array<i64: 1, 8, 8, 4>}, {transform_indices = @transform_5, window_bounds = array<i64: 1, 1, 4>}, {transform_indices = @transform_6, window_bounds = array<i64: 1, 1, 4>}]} {
    %c0 = arith.constant 0 : index
    %c0_0 = arith.constant 0 : index
    %c0_1 = arith.constant 0 : index
    %c0_2 = arith.constant 0 : index
    %0 = vector.load %arg1[%c0, %c0_0, %c0_1, %c0_2] : memref<1x16x16x4xf32, #tpu.memory_space<vmem>>, vector<1x16x16x4xf32>
    %1 = vector.shape_cast %0 : vector<1x16x16x4xf32> to vector<16x16x4xf32>
    %cst = arith.constant 0.000000e+00 : f32
    %2 = vector.broadcast %cst : f32 to vector<16x16x4xf32>
    %c0_3 = arith.constant 0 : index
    %c0_4 = arith.constant 0 : index
    %3 = vector.load %arg3[%c0_3, %c0_4] : memref<1x4xf32, #tpu.memory_space<vmem>>, vector<1x4xf32>
    %4 = vector.shape_cast %3 : vector<1x4xf32> to vector<4xf32>
    %5 = vector.shape_cast %4 : vector<4xf32> to vector<1x1x4xf32>
    %6 = vector.broadcast %5 : vector<1x1x4xf32> to vector<16x16x4xf32>
    %7 = arith.addf %2, %6 : vector<16x16x4xf32>
    %8 = vector.extract_strided_slice %1 {offsets = [0, 0, 0], sizes = [16, 16, 1], strides = [1, 1, 1]} : vector<16x16x4xf32> to vector<16x16x1xf32>
    %c0_5 = arith.constant 0 : index
    %c0_6 = arith.constant 0 : index
    %9 = vector.load %arg2[%c0_5, %c0_6] : memref<4x4xf32, #tpu.memory_space<vmem>>, vector<1x4xf32>
    %10 = vector.shape_cast %9 : vector<1x4xf32> to vector<4xf32>
    %11 = vector.shape_cast %10 : vector<4xf32> to vector<1x1x4xf32>
    %12 = vector.broadcast %8 : vector<16x16x1xf32> to vector<16x16x4xf32>
    %13 = vector.broadcast %11 : vector<1x1x4xf32> to vector<16x16x4xf32>
    %14 = arith.mulf %12, %13 : vector<16x16x4xf32>
    %15 = arith.addf %7, %14 : vector<16x16x4xf32>
    %16 = vector.extract_strided_slice %1 {offsets = [0, 0, 1], sizes = [16, 16, 1], strides = [1, 1, 1]} : vector<16x16x4xf32> to vector<16x16x1xf32>
    %c1 = arith.constant 1 : index
    %c0_7 = arith.constant 0 : index
    %17 = vector.load %arg2[%c1, %c0_7] : memref<4x4xf32, #tpu.memory_space<vmem>>, vector<1x4xf32>
    %18 = vector.shape_cast %17 : vector<1x4xf32> to vector<4xf32>
    %19 = vector.shape_cast %18 : vector<4xf32> to vector<1x1x4xf32>
    %20 = vector.broadcast %16 : vector<16x16x1xf32> to vector<16x16x4xf32>
    %21 = vector.broadcast %19 : vector<1x1x4xf32> to vector<16x16x4xf32>
    %22 = arith.mulf %20, %21 : vector<16x16x4xf32>
    %23 = arith.addf %15, %22 : vector<16x16x4xf32>
    %24 = vector.extract_strided_slice %1 {offsets = [0, 0, 2], sizes = [16, 16, 1], strides = [1, 1, 1]} : vector<16x16x4xf32> to vector<16x16x1xf32>
    %c2 = arith.constant 2 : index
    %c0_8 = arith.constant 0 : index
    %25 = vector.load %arg2[%c2, %c0_8] : memref<4x4xf32, #tpu.memory_space<vmem>>, vector<1x4xf32>
    %26 = vector.shape_cast %25 : vector<1x4xf32> to vector<4xf32>
    %27 = vector.shape_cast %26 : vector<4xf32> to vector<1x1x4xf32>
    %28 = vector.broadcast %24 : vector<16x16x1xf32> to vector<16x16x4xf32>
    %29 = vector.broadcast %27 : vector<1x1x4xf32> to vector<16x16x4xf32>
    %30 = arith.mulf %28, %29 : vector<16x16x4xf32>
    %31 = arith.addf %23, %30 : vector<16x16x4xf32>
    %32 = vector.extract_strided_slice %1 {offsets = [0, 0, 3], sizes = [16, 16, 1], strides = [1, 1, 1]} : vector<16x16x4xf32> to vector<16x16x1xf32>
    %c3 = arith.constant 3 : index
    %c0_9 = arith.constant 0 : index
    %33 = vector.load %arg2[%c3, %c0_9] : memref<4x4xf32, #tpu.memory_space<vmem>>, vector<1x4xf32>
    %34 = vector.shape_cast %33 : vector<1x4xf32> to vector<4xf32>
    %35 = vector.shape_cast %34 : vector<4xf32> to vector<1x1x4xf32>
    %36 = vector.broadcast %32 : vector<16x16x1xf32> to vector<16x16x4xf32>
    %37 = vector.broadcast %35 : vector<1x1x4xf32> to vector<16x16x4xf32>
    %38 = arith.mulf %36, %37 : vector<16x16x4xf32>
    %39 = arith.addf %31, %38 : vector<16x16x4xf32>
    %cst_10 = arith.constant 0.000000e+00 : f32
    %40 = vector.broadcast %cst_10 : f32 to vector<18x18x4xf32>
    %c0_11 = arith.constant 0 : index
    %c0_12 = arith.constant 0 : index
    %c0_13 = arith.constant 0 : index
    %41 = vector.load %arg8[%c0_11, %c0_12, %c0_13] : memref<18x18x4xf32, #tpu.memory_space<vmem>>, vector<18x18x4xf32>
    tpu.vector_store %arg8[%c0_11, %c0_12, %c0_13], %40 {strides = array<i32>} : memref<18x18x4xf32, #tpu.memory_space<vmem>>, vector<18x18x4xf32>,
    %c1_14 = arith.constant 1 : index
    %c1_15 = arith.constant 1 : index
    %c0_16 = arith.constant 0 : index
    %42 = vector.load %arg8[%c1_14, %c1_15, %c0_16] : memref<18x18x4xf32, #tpu.memory_space<vmem>>, vector<16x16x4xf32>
    tpu.vector_store %arg8[%c1_14, %c1_15, %c0_16], %39 {strides = array<i32>} : memref<18x18x4xf32, #tpu.memory_space<vmem>>, vector<16x16x4xf32>,
    %cst_17 = arith.constant 0.000000e+00 : f32
    %43 = vector.broadcast %cst_17 : f32 to vector<8x8x4xf32>
    %c0_18 = arith.constant 0 : index
    %c0_19 = arith.constant 0 : index
    %c0_20 = arith.constant 0 : index
    %44 = tpu.strided_load %arg8[%c0_18, %c0_19, %c0_20] {strides = array<i32: 2, 2, 1>} : memref<18x18x4xf32, #tpu.memory_space<vmem>>, vector<8x8x4xf32>
    %c0_21 = arith.constant 0 : index
    %c0_22 = arith.constant 0 : index
    %45 = vector.load %arg4[%c0_21, %c0_22] : memref<9x4xf32, #tpu.memory_space<vmem>>, vector<1x4xf32>
    %46 = vector.shape_cast %45 : vector<1x4xf32> to vector<4xf32>
    %47 = vector.shape_cast %46 : vector<4xf32> to vector<1x1x4xf32>
    %48 = vector.broadcast %47 : vector<1x1x4xf32> to vector<8x8x4xf32>
    %49 = arith.mulf %44, %48 : vector<8x8x4xf32>
    %50 = arith.addf %43, %49 : vector<8x8x4xf32>
    %c0_23 = arith.constant 0 : index
    %c1_24 = arith.constant 1 : index
    %c0_25 = arith.constant 0 : index
    %51 = tpu.strided_load %arg8[%c0_23, %c1_24, %c0_25] {strides = array<i32: 2, 2, 1>} : memref<18x18x4xf32, #tpu.memory_space<vmem>>, vector<8x8x4xf32>
    %c1_26 = arith.constant 1 : index
    %c0_27 = arith.constant 0 : index
    %52 = vector.load %arg4[%c1_26, %c0_27] : memref<9x4xf32, #tpu.memory_space<vmem>>, vector<1x4xf32>
    %53 = vector.shape_cast %52 : vector<1x4xf32> to vector<4xf32>
    %54 = vector.shape_cast %53 : vector<4xf32> to vector<1x1x4xf32>
    %55 = vector.broadcast %54 : vector<1x1x4xf32> to vector<8x8x4xf32>
    %56 = arith.mulf %51, %55 : vector<8x8x4xf32>
    %57 = arith.addf %50, %56 : vector<8x8x4xf32>
    %c0_28 = arith.constant 0 : index
    %c2_29 = arith.constant 2 : index
    %c0_30 = arith.constant 0 : index
    %58 = tpu.strided_load %arg8[%c0_28, %c2_29, %c0_30] {strides = array<i32: 2, 2, 1>} : memref<18x18x4xf32, #tpu.memory_space<vmem>>, vector<8x8x4xf32>
    %c2_31 = arith.constant 2 : index
    %c0_32 = arith.constant 0 : index
    %59 = vector.load %arg4[%c2_31, %c0_32] : memref<9x4xf32, #tpu.memory_space<vmem>>, vector<1x4xf32>
    %60 = vector.shape_cast %59 : vector<1x4xf32> to vector<4xf32>
    %61 = vector.shape_cast %60 : vector<4xf32> to vector<1x1x4xf32>
    %62 = vector.broadcast %61 : vector<1x1x4xf32> to vector<8x8x4xf32>
    %63 = arith.mulf %58, %62 : vector<8x8x4xf32>
    %64 = arith.addf %57, %63 : vector<8x8x4xf32>
    %c1_33 = arith.constant 1 : index
    %c0_34 = arith.constant 0 : index
    %c0_35 = arith.constant 0 : index
    %65 = tpu.strided_load %arg8[%c1_33, %c0_34, %c0_35] {strides = array<i32: 2, 2, 1>} : memref<18x18x4xf32, #tpu.memory_space<vmem>>, vector<8x8x4xf32>
    %c3_36 = arith.constant 3 : index
    %c0_37 = arith.constant 0 : index
    %66 = vector.load %arg4[%c3_36, %c0_37] : memref<9x4xf32, #tpu.memory_space<vmem>>, vector<1x4xf32>
    %67 = vector.shape_cast %66 : vector<1x4xf32> to vector<4xf32>
    %68 = vector.shape_cast %67 : vector<4xf32> to vector<1x1x4xf32>
    %69 = vector.broadcast %68 : vector<1x1x4xf32> to vector<8x8x4xf32>
    %70 = arith.mulf %65, %69 : vector<8x8x4xf32>
    %71 = arith.addf %64, %70 : vector<8x8x4xf32>
    %c1_38 = arith.constant 1 : index
    %c1_39 = arith.constant 1 : index
    %c0_40 = arith.constant 0 : index
    %72 = tpu.strided_load %arg8[%c1_38, %c1_39, %c0_40] {strides = array<i32: 2, 2, 1>} : memref<18x18x4xf32, #tpu.memory_space<vmem>>, vector<8x8x4xf32>
    %c4 = arith.constant 4 : index
    %c0_41 = arith.constant 0 : index
    %73 = vector.load %arg4[%c4, %c0_41] : memref<9x4xf32, #tpu.memory_space<vmem>>, vector<1x4xf32>
    %74 = vector.shape_cast %73 : vector<1x4xf32> to vector<4xf32>
    %75 = vector.shape_cast %74 : vector<4xf32> to vector<1x1x4xf32>
    %76 = vector.broadcast %75 : vector<1x1x4xf32> to vector<8x8x4xf32>
    %77 = arith.mulf %72, %76 : vector<8x8x4xf32>
    %78 = arith.addf %71, %77 : vector<8x8x4xf32>
    %c1_42 = arith.constant 1 : index
    %c2_43 = arith.constant 2 : index
    %c0_44 = arith.constant 0 : index
    %79 = tpu.strided_load %arg8[%c1_42, %c2_43, %c0_44] {strides = array<i32: 2, 2, 1>} : memref<18x18x4xf32, #tpu.memory_space<vmem>>, vector<8x8x4xf32>
    %c5 = arith.constant 5 : index
    %c0_45 = arith.constant 0 : index
    %80 = vector.load %arg4[%c5, %c0_45] : memref<9x4xf32, #tpu.memory_space<vmem>>, vector<1x4xf32>
    %81 = vector.shape_cast %80 : vector<1x4xf32> to vector<4xf32>
    %82 = vector.shape_cast %81 : vector<4xf32> to vector<1x1x4xf32>
    %83 = vector.broadcast %82 : vector<1x1x4xf32> to vector<8x8x4xf32>
    %84 = arith.mulf %79, %83 : vector<8x8x4xf32>
    %85 = arith.addf %78, %84 : vector<8x8x4xf32>
    %c2_46 = arith.constant 2 : index
    %c0_47 = arith.constant 0 : index
    %c0_48 = arith.constant 0 : index
    %86 = tpu.strided_load %arg8[%c2_46, %c0_47, %c0_48] {strides = array<i32: 2, 2, 1>} : memref<18x18x4xf32, #tpu.memory_space<vmem>>, vector<8x8x4xf32>
    %c6 = arith.constant 6 : index
    %c0_49 = arith.constant 0 : index
    %87 = vector.load %arg4[%c6, %c0_49] : memref<9x4xf32, #tpu.memory_space<vmem>>, vector<1x4xf32>
    %88 = vector.shape_cast %87 : vector<1x4xf32> to vector<4xf32>
    %89 = vector.shape_cast %88 : vector<4xf32> to vector<1x1x4xf32>
    %90 = vector.broadcast %89 : vector<1x1x4xf32> to vector<8x8x4xf32>
    %91 = arith.mulf %86, %90 : vector<8x8x4xf32>
    %92 = arith.addf %85, %91 : vector<8x8x4xf32>
    %c2_50 = arith.constant 2 : index
    %c1_51 = arith.constant 1 : index
    %c0_52 = arith.constant 0 : index
    %93 = tpu.strided_load %arg8[%c2_50, %c1_51, %c0_52] {strides = array<i32: 2, 2, 1>} : memref<18x18x4xf32, #tpu.memory_space<vmem>>, vector<8x8x4xf32>
    %c7 = arith.constant 7 : index
    %c0_53 = arith.constant 0 : index
    %94 = vector.load %arg4[%c7, %c0_53] : memref<9x4xf32, #tpu.memory_space<vmem>>, vector<1x4xf32>
    %95 = vector.shape_cast %94 : vector<1x4xf32> to vector<4xf32>
    %96 = vector.shape_cast %95 : vector<4xf32> to vector<1x1x4xf32>
    %97 = vector.broadcast %96 : vector<1x1x4xf32> to vector<8x8x4xf32>
    %98 = arith.mulf %93, %97 : vector<8x8x4xf32>
    %99 = arith.addf %92, %98 : vector<8x8x4xf32>
    %c2_54 = arith.constant 2 : index
    %c2_55 = arith.constant 2 : index
    %c0_56 = arith.constant 0 : index
    %100 = tpu.strided_load %arg8[%c2_54, %c2_55, %c0_56] {strides = array<i32: 2, 2, 1>} : memref<18x18x4xf32, #tpu.memory_space<vmem>>, vector<8x8x4xf32>
    %c8 = arith.constant 8 : index
    %c0_57 = arith.constant 0 : index
    %101 = vector.load %arg4[%c8, %c0_57] : memref<9x4xf32, #tpu.memory_space<vmem>>, vector<1x4xf32>
    %102 = vector.shape_cast %101 : vector<1x4xf32> to vector<4xf32>
    %103 = vector.shape_cast %102 : vector<4xf32> to vector<1x1x4xf32>
    %104 = vector.broadcast %103 : vector<1x1x4xf32> to vector<8x8x4xf32>
    %105 = arith.mulf %100, %104 : vector<8x8x4xf32>
    %106 = arith.addf %99, %105 : vector<8x8x4xf32>
    %c0_58 = arith.constant 0 : index
    %c0_59 = arith.constant 0 : index
    %c0_60 = arith.constant 0 : index
    %c0_61 = arith.constant 0 : index
    %107 = vector.load %arg5[%c0_58, %c0_59, %c0_60, %c0_61] : memref<1x8x8x4xf32, #tpu.memory_space<vmem>>, vector<1x8x8x4xf32>
    %108 = vector.shape_cast %107 : vector<1x8x8x4xf32> to vector<8x8x4xf32>
    %109 = vector.shape_cast %106 : vector<8x8x4xf32> to vector<1x8x8x4xf32>
    tpu.vector_store %arg5[%c0_58, %c0_59, %c0_60, %c0_61], %109 {strides = array<i32>} : memref<1x8x8x4xf32, #tpu.memory_space<vmem>>, vector<1x8x8x4xf32>,
    %cst_62 = arith.constant dense<0.000000e+00> : vector<8x4xf32>
    %110 = vector.multi_reduction <add>, %106, %cst_62 [0] : vector<8x8x4xf32> to vector<8x4xf32>
    %cst_63 = arith.constant dense<0.000000e+00> : vector<4xf32>
    %111 = vector.multi_reduction <add>, %110, %cst_63 [0] : vector<8x4xf32> to vector<4xf32>
    %c0_64 = arith.constant 0 : index
    %c0_65 = arith.constant 0 : index
    %c0_66 = arith.constant 0 : index
    %112 = vector.load %arg6[%c0_64, %c0_65, %c0_66] : memref<1x1x4xf32, #tpu.memory_space<vmem>>, vector<1x1x4xf32>
    %113 = vector.shape_cast %112 : vector<1x1x4xf32> to vector<4xf32>
    %114 = vector.shape_cast %111 : vector<4xf32> to vector<1x1x4xf32>
    tpu.vector_store %arg6[%c0_64, %c0_65, %c0_66], %114 {strides = array<i32>} : memref<1x1x4xf32, #tpu.memory_space<vmem>>, vector<1x1x4xf32>,
    %115 = arith.mulf %106, %106 : vector<8x8x4xf32>
    %cst_67 = arith.constant dense<0.000000e+00> : vector<8x4xf32>
    %116 = vector.multi_reduction <add>, %115, %cst_67 [0] : vector<8x8x4xf32> to vector<8x4xf32>
    %cst_68 = arith.constant dense<0.000000e+00> : vector<4xf32>
    %117 = vector.multi_reduction <add>, %116, %cst_68 [0] : vector<8x4xf32> to vector<4xf32>
    %c0_69 = arith.constant 0 : index
    %c0_70 = arith.constant 0 : index
    %c0_71 = arith.constant 0 : index
    %118 = vector.load %arg7[%c0_69, %c0_70, %c0_71] : memref<1x1x4xf32, #tpu.memory_space<vmem>>, vector<1x1x4xf32>
    %119 = vector.shape_cast %118 : vector<1x1x4xf32> to vector<4xf32>
    %120 = vector.shape_cast %117 : vector<4xf32> to vector<1x1x4xf32>
    tpu.vector_store %arg7[%c0_69, %c0_70, %c0_71], %120 {strides = array<i32>} : memref<1x1x4xf32, #tpu.memory_space<vmem>>, vector<1x1x4xf32>,
    return
  }
  func.func @transform_0(%arg0: i32) -> (i32, i32, i32, i32) {
    %c0_i32 = arith.constant 0 : i32
    %c0_i32_0 = arith.constant 0 : i32
    %c0_i32_1 = arith.constant 0 : i32
    %c0_i32_2 = arith.constant 0 : i32
    return %arg0, %c0_i32, %c0_i32_0, %c0_i32_1 : i32, i32, i32, i32
  }
  func.func @transform_1(%arg0: i32) -> (i32, i32) {
    %c0_i32 = arith.constant 0 : i32
    %c0_i32_0 = arith.constant 0 : i32
    %c0_i32_1 = arith.constant 0 : i32
    return %c0_i32, %c0_i32_0 : i32, i32
  }
  func.func @transform_2(%arg0: i32) -> (i32, i32) {
    %c0_i32 = arith.constant 0 : i32
    %c0_i32_0 = arith.constant 0 : i32
    %c0_i32_1 = arith.constant 0 : i32
    return %c0_i32, %c0_i32_0 : i32, i32
  }
  func.func @transform_3(%arg0: i32) -> (i32, i32) {
    %c0_i32 = arith.constant 0 : i32
    %c0_i32_0 = arith.constant 0 : i32
    %c0_i32_1 = arith.constant 0 : i32
    return %c0_i32, %c0_i32_0 : i32, i32
  }
  func.func @transform_4(%arg0: i32) -> (i32, i32, i32, i32) {
    %c0_i32 = arith.constant 0 : i32
    %c0_i32_0 = arith.constant 0 : i32
    %c0_i32_1 = arith.constant 0 : i32
    %c0_i32_2 = arith.constant 0 : i32
    return %arg0, %c0_i32, %c0_i32_0, %c0_i32_1 : i32, i32, i32, i32
  }
  func.func @transform_5(%arg0: i32) -> (i32, i32, i32) {
    %c0_i32 = arith.constant 0 : i32
    %c0_i32_0 = arith.constant 0 : i32
    %c0_i32_1 = arith.constant 0 : i32
    return %arg0, %c0_i32, %c0_i32_0 : i32, i32, i32
  }
  func.func @transform_6(%arg0: i32) -> (i32, i32, i32) {
    %c0_i32 = arith.constant 0 : i32
    %c0_i32_0 = arith.constant 0 : i32
    %c0_i32_1 = arith.constant 0 : i32
    return %arg0, %c0_i32, %c0_i32_0 : i32, i32, i32
  }
}

module attributes {stable_mosaic.version = 11 : i64} {
  func.func @_nf_bn_act_kernel(%arg0: i32, %arg1: i32, %arg2: memref<1x8x8x4xf32, #tpu.memory_space<vmem>>, %arg3: memref<1x1x8xf32, #tpu.memory_space<vmem>>, %arg4: memref<1x1x8xf32, #tpu.memory_space<vmem>>, %arg5: memref<1x8x8x8xf32, #tpu.memory_space<vmem>>) attributes {dimension_semantics = [#tpu.dimension_semantics<parallel>, #tpu.dimension_semantics<parallel>], iteration_bounds = array<i64: 2, 1>, scalar_prefetch = 0 : i64, scratch_operands = 0 : i64, tpu.core_type = #tpu.core_type<tc>, window_params = [{transform_indices = @transform_0, window_bounds = array<i64: 1, 8, 8, 4>}, {transform_indices = @transform_1, window_bounds = array<i64: 1, 1, 8>}, {pipeline_mode = #tpu.pipeline_mode<synchronous>, transform_indices = @transform_2, window_bounds = array<i64: 1, 1, 8>}, {transform_indices = @transform_3, window_bounds = array<i64: 1, 8, 8, 8>}]} {
    %c0 = arith.constant 0 : index
    %c0_0 = arith.constant 0 : index
    %c0_1 = arith.constant 0 : index
    %c0_2 = arith.constant 0 : index
    %0 = vector.load %arg2[%c0, %c0_0, %c0_1, %c0_2] : memref<1x8x8x4xf32, #tpu.memory_space<vmem>>, vector<1x8x8x4xf32>
    %1 = vector.shape_cast %0 : vector<1x8x8x4xf32> to vector<8x8x4xf32>
    %2 = tpu.concatenate %1, %1 in 2 : vector<8x8x4xf32>, vector<8x8x4xf32> -> vector<8x8x8xf32>
    %c0_3 = arith.constant 0 : index
    %c0_4 = arith.constant 0 : index
    %c0_5 = arith.constant 0 : index
    %3 = vector.load %arg3[%c0_3, %c0_4, %c0_5] : memref<1x1x8xf32, #tpu.memory_space<vmem>>, vector<1x1x8xf32>
    %4 = vector.shape_cast %3 : vector<1x1x8xf32> to vector<8xf32>
    %5 = vector.shape_cast %4 : vector<8xf32> to vector<1x1x8xf32>
    %6 = vector.broadcast %5 : vector<1x1x8xf32> to vector<8x8x8xf32>
    %7 = arith.mulf %2, %6 : vector<8x8x8xf32>
    %c0_6 = arith.constant 0 : index
    %c0_7 = arith.constant 0 : index
    %c0_8 = arith.constant 0 : index
    %8 = vector.load %arg4[%c0_6, %c0_7, %c0_8] : memref<1x1x8xf32, #tpu.memory_space<vmem>>, vector<1x1x8xf32>
    %9 = vector.shape_cast %8 : vector<1x1x8xf32> to vector<8xf32>
    %10 = vector.shape_cast %9 : vector<8xf32> to vector<1x1x8xf32>
    %11 = vector.broadcast %10 : vector<1x1x8xf32> to vector<8x8x8xf32>
    %12 = arith.addf %7, %11 : vector<8x8x8xf32>
    %cst = arith.constant 0.000000e+00 : f32
    %13 = vector.broadcast %cst : f32 to vector<8x8x8xf32>
    %14 = arith.maximumf %12, %13 : vector<8x8x8xf32>
    %c0_9 = arith.constant 0 : index
    %c0_10 = arith.constant 0 : index
    %c0_11 = arith.constant 0 : index
    %c0_12 = arith.constant 0 : index
    %15 = vector.load %arg5[%c0_9, %c0_10, %c0_11, %c0_12] : memref<1x8x8x8xf32, #tpu.memory_space<vmem>>, vector<1x8x8x8xf32>
    %16 = vector.shape_cast %15 : vector<1x8x8x8xf32> to vector<8x8x8xf32>
    %17 = vector.shape_cast %14 : vector<8x8x8xf32> to vector<1x8x8x8xf32>
    tpu.vector_store %arg5[%c0_9, %c0_10, %c0_11, %c0_12], %17 {strides = array<i32>} : memref<1x8x8x8xf32, #tpu.memory_space<vmem>>, vector<1x8x8x8xf32>,
    return
  }
  func.func @transform_0(%arg0: i32, %arg1: i32) -> (i32, i32, i32, i32) {
    %c0_i32 = arith.constant 0 : i32
    %c0_i32_0 = arith.constant 0 : i32
    %c0_i32_1 = arith.constant 0 : i32
    return %arg0, %arg1, %c0_i32, %c0_i32_0 : i32, i32, i32, i32
  }
  func.func @transform_1(%arg0: i32, %arg1: i32) -> (i32, i32, i32) {
    %c0_i32 = arith.constant 0 : i32
    %c0_i32_0 = arith.constant 0 : i32
    %c0_i32_1 = arith.constant 0 : i32
    return %arg0, %c0_i32, %c0_i32_0 : i32, i32, i32
  }
  func.func @transform_2(%arg0: i32, %arg1: i32) -> (i32, i32, i32) {
    %c0_i32 = arith.constant 0 : i32
    %c0_i32_0 = arith.constant 0 : i32
    %c0_i32_1 = arith.constant 0 : i32
    %c0_i32_2 = arith.constant 0 : i32
    return %c0_i32, %c0_i32_0, %c0_i32_1 : i32, i32, i32
  }
  func.func @transform_3(%arg0: i32, %arg1: i32) -> (i32, i32, i32, i32) {
    %c0_i32 = arith.constant 0 : i32
    %c0_i32_0 = arith.constant 0 : i32
    %c0_i32_1 = arith.constant 0 : i32
    return %arg0, %arg1, %c0_i32, %c0_i32_0 : i32, i32, i32, i32
  }
}

module attributes {stable_mosaic.version = 11 : i64} {
  func.func @_ftm_conv_kernel(%arg0: i32, %arg1: memref<1x8x8x8xf32, #tpu.memory_space<vmem>>, %arg2: memref<8x4xf32, #tpu.memory_space<vmem>>, %arg3: memref<1x4xf32, #tpu.memory_space<vmem>>, %arg4: memref<9x4xf32, #tpu.memory_space<vmem>>, %arg5: memref<1x8x8x4xf32, #tpu.memory_space<vmem>>, %arg6: memref<1x1x4xf32, #tpu.memory_space<vmem>>, %arg7: memref<1x1x4xf32, #tpu.memory_space<vmem>>, %arg8: memref<10x10x4xf32, #tpu.memory_space<vmem>>) attributes {dimension_semantics = [#tpu.dimension_semantics<parallel>], iteration_bounds = array<i64: 2>, scalar_prefetch = 0 : i64, scratch_operands = 1 : i64, tpu.core_type = #tpu.core_type<tc>, window_params = [{transform_indices = @transform_0, window_bounds = array<i64: 1, 8, 8, 8>}, {pipeline_mode = #tpu.pipeline_mode<synchronous>, transform_indices = @transform_1, window_bounds = array<i64: 8, 4>}, {pipeline_mode = #tpu.pipeline_mode<synchronous>, transform_indices = @transform_2, window_bounds = array<i64: 1, 4>}, {pipeline_mode = #tpu.pipeline_mode<synchronous>, transform_indices = @transform_3, window_bounds = array<i64: 9, 4>}, {transform_indices = @transform_4, window_bounds = array<i64: 1, 8, 8, 4>}, {transform_indices = @transform_5, window_bounds = array<i64: 1, 1, 4>}, {transform_indices = @transform_6, window_bounds = array<i64: 1, 1, 4>}]} {
    %c0 = arith.constant 0 : index
    %c0_0 = arith.constant 0 : index
    %c0_1 = arith.constant 0 : index
    %c0_2 = arith.constant 0 : index
    %0 = vector.load %arg1[%c0, %c0_0, %c0_1, %c0_2] : memref<1x8x8x8xf32, #tpu.memory_space<vmem>>, vector<1x8x8x8xf32>
    %1 = vector.shape_cast %0 : vector<1x8x8x8xf32> to vector<8x8x8xf32>
    %cst = arith.constant 0.000000e+00 : f32
    %2 = vector.broadcast %cst : f32 to vector<8x8x4xf32>
    %c0_3 = arith.constant 0 : index
    %c0_4 = arith.constant 0 : index
    %3 = vector.load %arg3[%c0_3, %c0_4] : memref<1x4xf32, #tpu.memory_space<vmem>>, vector<1x4xf32>
    %4 = vector.shape_cast %3 : vector<1x4xf32> to vector<4xf32>
    %5 = vector.shape_cast %4 : vector<4xf32> to vector<1x1x4xf32>
    %6 = vector.broadcast %5 : vector<1x1x4xf32> to vector<8x8x4xf32>
    %7 = arith.addf %2, %6 : vector<8x8x4xf32>
    %8 = vector.extract_strided_slice %1 {offsets = [0, 0, 0], sizes = [8, 8, 1], strides = [1, 1, 1]} : vector<8x8x8xf32> to vector<8x8x1xf32>
    %c0_5 = arith.constant 0 : index
    %c0_6 = arith.constant 0 : index
    %9 = vector.load %arg2[%c0_5, %c0_6] : memref<8x4xf32, #tpu.memory_space<vmem>>, vector<1x4xf32>
    %10 = vector.shape_cast %9 : vector<1x4xf32> to vector<4xf32>
    %11 = vector.shape_cast %10 : vector<4xf32> to vector<1x1x4xf32>
    %12 = vector.broadcast %8 : vector<8x8x1xf32> to vector<8x8x4xf32>
    %13 = vector.broadcast %11 : vector<1x1x4xf32> to vector<8x8x4xf32>
    %14 = arith.mulf %12, %13 : vector<8x8x4xf32>
    %15 = arith.addf %7, %14 : vector<8x8x4xf32>
    %16 = vector.extract_strided_slice %1 {offsets = [0, 0, 1], sizes = [8, 8, 1], strides = [1, 1, 1]} : vector<8x8x8xf32> to vector<8x8x1xf32>
    %c1 = arith.constant 1 : index
    %c0_7 = arith.constant 0 : index
    %17 = vector.load %arg2[%c1, %c0_7] : memref<8x4xf32, #tpu.memory_space<vmem>>, vector<1x4xf32>
    %18 = vector.shape_cast %17 : vector<1x4xf32> to vector<4xf32>
    %19 = vector.shape_cast %18 : vector<4xf32> to vector<1x1x4xf32>
    %20 = vector.broadcast %16 : vector<8x8x1xf32> to vector<8x8x4xf32>
    %21 = vector.broadcast %19 : vector<1x1x4xf32> to vector<8x8x4xf32>
    %22 = arith.mulf %20, %21 : vector<8x8x4xf32>
    %23 = arith.addf %15, %22 : vector<8x8x4xf32>
    %24 = vector.extract_strided_slice %1 {offsets = [0, 0, 2], sizes = [8, 8, 1], strides = [1, 1, 1]} : vector<8x8x8xf32> to vector<8x8x1xf32>
    %c2 = arith.constant 2 : index
    %c0_8 = arith.constant 0 : index
    %25 = vector.load %arg2[%c2, %c0_8] : memref<8x4xf32, #tpu.memory_space<vmem>>, vector<1x4xf32>
    %26 = vector.shape_cast %25 : vector<1x4xf32> to vector<4xf32>
    %27 = vector.shape_cast %26 : vector<4xf32> to vector<1x1x4xf32>
    %28 = vector.broadcast %24 : vector<8x8x1xf32> to vector<8x8x4xf32>
    %29 = vector.broadcast %27 : vector<1x1x4xf32> to vector<8x8x4xf32>
    %30 = arith.mulf %28, %29 : vector<8x8x4xf32>
    %31 = arith.addf %23, %30 : vector<8x8x4xf32>
    %32 = vector.extract_strided_slice %1 {offsets = [0, 0, 3], sizes = [8, 8, 1], strides = [1, 1, 1]} : vector<8x8x8xf32> to vector<8x8x1xf32>
    %c3 = arith.constant 3 : index
    %c0_9 = arith.constant 0 : index
    %33 = vector.load %arg2[%c3, %c0_9] : memref<8x4xf32, #tpu.memory_space<vmem>>, vector<1x4xf32>
    %34 = vector.shape_cast %33 : vector<1x4xf32> to vector<4xf32>
    %35 = vector.shape_cast %34 : vector<4xf32> to vector<1x1x4xf32>
    %36 = vector.broadcast %32 : vector<8x8x1xf32> to vector<8x8x4xf32>
    %37 = vector.broadcast %35 : vector<1x1x4xf32> to vector<8x8x4xf32>
    %38 = arith.mulf %36, %37 : vector<8x8x4xf32>
    %39 = arith.addf %31, %38 : vector<8x8x4xf32>
    %40 = vector.extract_strided_slice %1 {offsets = [0, 0, 4], sizes = [8, 8, 1], strides = [1, 1, 1]} : vector<8x8x8xf32> to vector<8x8x1xf32>
    %c4 = arith.constant 4 : index
    %c0_10 = arith.constant 0 : index
    %41 = vector.load %arg2[%c4, %c0_10] : memref<8x4xf32, #tpu.memory_space<vmem>>, vector<1x4xf32>
    %42 = vector.shape_cast %41 : vector<1x4xf32> to vector<4xf32>
    %43 = vector.shape_cast %42 : vector<4xf32> to vector<1x1x4xf32>
    %44 = vector.broadcast %40 : vector<8x8x1xf32> to vector<8x8x4xf32>
    %45 = vector.broadcast %43 : vector<1x1x4xf32> to vector<8x8x4xf32>
    %46 = arith.mulf %44, %45 : vector<8x8x4xf32>
    %47 = arith.addf %39, %46 : vector<8x8x4xf32>
    %48 = vector.extract_strided_slice %1 {offsets = [0, 0, 5], sizes = [8, 8, 1], strides = [1, 1, 1]} : vector<8x8x8xf32> to vector<8x8x1xf32>
    %c5 = arith.constant 5 : index
    %c0_11 = arith.constant 0 : index
    %49 = vector.load %arg2[%c5, %c0_11] : memref<8x4xf32, #tpu.memory_space<vmem>>, vector<1x4xf32>
    %50 = vector.shape_cast %49 : vector<1x4xf32> to vector<4xf32>
    %51 = vector.shape_cast %50 : vector<4xf32> to vector<1x1x4xf32>
    %52 = vector.broadcast %48 : vector<8x8x1xf32> to vector<8x8x4xf32>
    %53 = vector.broadcast %51 : vector<1x1x4xf32> to vector<8x8x4xf32>
    %54 = arith.mulf %52, %53 : vector<8x8x4xf32>
    %55 = arith.addf %47, %54 : vector<8x8x4xf32>
    %56 = vector.extract_strided_slice %1 {offsets = [0, 0, 6], sizes = [8, 8, 1], strides = [1, 1, 1]} : vector<8x8x8xf32> to vector<8x8x1xf32>
    %c6 = arith.constant 6 : index
    %c0_12 = arith.constant 0 : index
    %57 = vector.load %arg2[%c6, %c0_12] : memref<8x4xf32, #tpu.memory_space<vmem>>, vector<1x4xf32>
    %58 = vector.shape_cast %57 : vector<1x4xf32> to vector<4xf32>
    %59 = vector.shape_cast %58 : vector<4xf32> to vector<1x1x4xf32>
    %60 = vector.broadcast %56 : vector<8x8x1xf32> to vector<8x8x4xf32>
    %61 = vector.broadcast %59 : vector<1x1x4xf32> to vector<8x8x4xf32>
    %62 = arith.mulf %60, %61 : vector<8x8x4xf32>
    %63 = arith.addf %55, %62 : vector<8x8x4xf32>
    %64 = vector.extract_strided_slice %1 {offsets = [0, 0, 7], sizes = [8, 8, 1], strides = [1, 1, 1]} : vector<8x8x8xf32> to vector<8x8x1xf32>
    %c7 = arith.constant 7 : index
    %c0_13 = arith.constant 0 : index
    %65 = vector.load %arg2[%c7, %c0_13] : memref<8x4xf32, #tpu.memory_space<vmem>>, vector<1x4xf32>
    %66 = vector.shape_cast %65 : vector<1x4xf32> to vector<4xf32>
    %67 = vector.shape_cast %66 : vector<4xf32> to vector<1x1x4xf32>
    %68 = vector.broadcast %64 : vector<8x8x1xf32> to vector<8x8x4xf32>
    %69 = vector.broadcast %67 : vector<1x1x4xf32> to vector<8x8x4xf32>
    %70 = arith.mulf %68, %69 : vector<8x8x4xf32>
    %71 = arith.addf %63, %70 : vector<8x8x4xf32>
    %cst_14 = arith.constant 0.000000e+00 : f32
    %72 = vector.broadcast %cst_14 : f32 to vector<10x10x4xf32>
    %c0_15 = arith.constant 0 : index
    %c0_16 = arith.constant 0 : index
    %c0_17 = arith.constant 0 : index
    %73 = vector.load %arg8[%c0_15, %c0_16, %c0_17] : memref<10x10x4xf32, #tpu.memory_space<vmem>>, vector<10x10x4xf32>
    tpu.vector_store %arg8[%c0_15, %c0_16, %c0_17], %72 {strides = array<i32>} : memref<10x10x4xf32, #tpu.memory_space<vmem>>, vector<10x10x4xf32>,
    %c1_18 = arith.constant 1 : index
    %c1_19 = arith.constant 1 : index
    %c0_20 = arith.constant 0 : index
    %74 = vector.load %arg8[%c1_18, %c1_19, %c0_20] : memref<10x10x4xf32, #tpu.memory_space<vmem>>, vector<8x8x4xf32>
    tpu.vector_store %arg8[%c1_18, %c1_19, %c0_20], %71 {strides = array<i32>} : memref<10x10x4xf32, #tpu.memory_space<vmem>>, vector<8x8x4xf32>,
    %cst_21 = arith.constant 0.000000e+00 : f32
    %75 = vector.broadcast %cst_21 : f32 to vector<8x8x4xf32>
    %c0_22 = arith.constant 0 : index
    %c0_23 = arith.constant 0 : index
    %c0_24 = arith.constant 0 : index
    %76 = vector.load %arg8[%c0_22, %c0_23, %c0_24] : memref<10x10x4xf32, #tpu.memory_space<vmem>>, vector<8x8x4xf32>
    %c0_25 = arith.constant 0 : index
    %c0_26 = arith.constant 0 : index
    %77 = vector.load %arg4[%c0_25, %c0_26] : memref<9x4xf32, #tpu.memory_space<vmem>>, vector<1x4xf32>
    %78 = vector.shape_cast %77 : vector<1x4xf32> to vector<4xf32>
    %79 = vector.shape_cast %78 : vector<4xf32> to vector<1x1x4xf32>
    %80 = vector.broadcast %79 : vector<1x1x4xf32> to vector<8x8x4xf32>
    %81 = arith.mulf %76, %80 : vector<8x8x4xf32>
    %82 = arith.addf %75, %81 : vector<8x8x4xf32>
    %c0_27 = arith.constant 0 : index
    %c1_28 = arith.constant 1 : index
    %c0_29 = arith.constant 0 : index
    %83 = vector.load %arg8[%c0_27, %c1_28, %c0_29] : memref<10x10x4xf32, #tpu.memory_space<vmem>>, vector<8x8x4xf32>
    %c1_30 = arith.constant 1 : index
    %c0_31 = arith.constant 0 : index
    %84 = vector.load %arg4[%c1_30, %c0_31] : memref<9x4xf32, #tpu.memory_space<vmem>>, vector<1x4xf32>
    %85 = vector.shape_cast %84 : vector<1x4xf32> to vector<4xf32>
    %86 = vector.shape_cast %85 : vector<4xf32> to vector<1x1x4xf32>
    %87 = vector.broadcast %86 : vector<1x1x4xf32> to vector<8x8x4xf32>
    %88 = arith.mulf %83, %87 : vector<8x8x4xf32>
    %89 = arith.addf %82, %88 : vector<8x8x4xf32>
    %c0_32 = arith.constant 0 : index
    %c2_33 = arith.constant 2 : index
    %c0_34 = arith.constant 0 : index
    %90 = vector.load %arg8[%c0_32, %c2_33, %c0_34] : memref<10x10x4xf32, #tpu.memory_space<vmem>>, vector<8x8x4xf32>
    %c2_35 = arith.constant 2 : index
    %c0_36 = arith.constant 0 : index
    %91 = vector.load %arg4[%c2_35, %c0_36] : memref<9x4xf32, #tpu.memory_space<vmem>>, vector<1x4xf32>
    %92 = vector.shape_cast %91 : vector<1x4xf32> to vector<4xf32>
    %93 = vector.shape_cast %92 : vector<4xf32> to vector<1x1x4xf32>
    %94 = vector.broadcast %93 : vector<1x1x4xf32> to vector<8x8x4xf32>
    %95 = arith.mulf %90, %94 : vector<8x8x4xf32>
    %96 = arith.addf %89, %95 : vector<8x8x4xf32>
    %c1_37 = arith.constant 1 : index
    %c0_38 = arith.constant 0 : index
    %c0_39 = arith.constant 0 : index
    %97 = vector.load %arg8[%c1_37, %c0_38, %c0_39] : memref<10x10x4xf32, #tpu.memory_space<vmem>>, vector<8x8x4xf32>
    %c3_40 = arith.constant 3 : index
    %c0_41 = arith.constant 0 : index
    %98 = vector.load %arg4[%c3_40, %c0_41] : memref<9x4xf32, #tpu.memory_space<vmem>>, vector<1x4xf32>
    %99 = vector.shape_cast %98 : vector<1x4xf32> to vector<4xf32>
    %100 = vector.shape_cast %99 : vector<4xf32> to vector<1x1x4xf32>
    %101 = vector.broadcast %100 : vector<1x1x4xf32> to vector<8x8x4xf32>
    %102 = arith.mulf %97, %101 : vector<8x8x4xf32>
    %103 = arith.addf %96, %102 : vector<8x8x4xf32>
    %c1_42 = arith.constant 1 : index
    %c1_43 = arith.constant 1 : index
    %c0_44 = arith.constant 0 : index
    %104 = vector.load %arg8[%c1_42, %c1_43, %c0_44] : memref<10x10x4xf32, #tpu.memory_space<vmem>>, vector<8x8x4xf32>
    %c4_45 = arith.constant 4 : index
    %c0_46 = arith.constant 0 : index
    %105 = vector.load %arg4[%c4_45, %c0_46] : memref<9x4xf32, #tpu.memory_space<vmem>>, vector<1x4xf32>
    %106 = vector.shape_cast %105 : vector<1x4xf32> to vector<4xf32>
    %107 = vector.shape_cast %106 : vector<4xf32> to vector<1x1x4xf32>
    %108 = vector.broadcast %107 : vector<1x1x4xf32> to vector<8x8x4xf32>
    %109 = arith.mulf %104, %108 : vector<8x8x4xf32>
    %110 = arith.addf %103, %109 : vector<8x8x4xf32>
    %c1_47 = arith.constant 1 : index
    %c2_48 = arith.constant 2 : index
    %c0_49 = arith.constant 0 : index
    %111 = vector.load %arg8[%c1_47, %c2_48, %c0_49] : memref<10x10x4xf32, #tpu.memory_space<vmem>>, vector<8x8x4xf32>
    %c5_50 = arith.constant 5 : index
    %c0_51 = arith.constant 0 : index
    %112 = vector.load %arg4[%c5_50, %c0_51] : memref<9x4xf32, #tpu.memory_space<vmem>>, vector<1x4xf32>
    %113 = vector.shape_cast %112 : vector<1x4xf32> to vector<4xf32>
    %114 = vector.shape_cast %113 : vector<4xf32> to vector<1x1x4xf32>
    %115 = vector.broadcast %114 : vector<1x1x4xf32> to vector<8x8x4xf32>
    %116 = arith.mulf %111, %115 : vector<8x8x4xf32>
    %117 = arith.addf %110, %116 : vector<8x8x4xf32>
    %c2_52 = arith.constant 2 : index
    %c0_53 = arith.constant 0 : index
    %c0_54 = arith.constant 0 : index
    %118 = vector.load %arg8[%c2_52, %c0_53, %c0_54] : memref<10x10x4xf32, #tpu.memory_space<vmem>>, vector<8x8x4xf32>
    %c6_55 = arith.constant 6 : index
    %c0_56 = arith.constant 0 : index
    %119 = vector.load %arg4[%c6_55, %c0_56] : memref<9x4xf32, #tpu.memory_space<vmem>>, vector<1x4xf32>
    %120 = vector.shape_cast %119 : vector<1x4xf32> to vector<4xf32>
    %121 = vector.shape_cast %120 : vector<4xf32> to vector<1x1x4xf32>
    %122 = vector.broadcast %121 : vector<1x1x4xf32> to vector<8x8x4xf32>
    %123 = arith.mulf %118, %122 : vector<8x8x4xf32>
    %124 = arith.addf %117, %123 : vector<8x8x4xf32>
    %c2_57 = arith.constant 2 : index
    %c1_58 = arith.constant 1 : index
    %c0_59 = arith.constant 0 : index
    %125 = vector.load %arg8[%c2_57, %c1_58, %c0_59] : memref<10x10x4xf32, #tpu.memory_space<vmem>>, vector<8x8x4xf32>
    %c7_60 = arith.constant 7 : index
    %c0_61 = arith.constant 0 : index
    %126 = vector.load %arg4[%c7_60, %c0_61] : memref<9x4xf32, #tpu.memory_space<vmem>>, vector<1x4xf32>
    %127 = vector.shape_cast %126 : vector<1x4xf32> to vector<4xf32>
    %128 = vector.shape_cast %127 : vector<4xf32> to vector<1x1x4xf32>
    %129 = vector.broadcast %128 : vector<1x1x4xf32> to vector<8x8x4xf32>
    %130 = arith.mulf %125, %129 : vector<8x8x4xf32>
    %131 = arith.addf %124, %130 : vector<8x8x4xf32>
    %c2_62 = arith.constant 2 : index
    %c2_63 = arith.constant 2 : index
    %c0_64 = arith.constant 0 : index
    %132 = vector.load %arg8[%c2_62, %c2_63, %c0_64] : memref<10x10x4xf32, #tpu.memory_space<vmem>>, vector<8x8x4xf32>
    %c8 = arith.constant 8 : index
    %c0_65 = arith.constant 0 : index
    %133 = vector.load %arg4[%c8, %c0_65] : memref<9x4xf32, #tpu.memory_space<vmem>>, vector<1x4xf32>
    %134 = vector.shape_cast %133 : vector<1x4xf32> to vector<4xf32>
    %135 = vector.shape_cast %134 : vector<4xf32> to vector<1x1x4xf32>
    %136 = vector.broadcast %135 : vector<1x1x4xf32> to vector<8x8x4xf32>
    %137 = arith.mulf %132, %136 : vector<8x8x4xf32>
    %138 = arith.addf %131, %137 : vector<8x8x4xf32>
    %c0_66 = arith.constant 0 : index
    %c0_67 = arith.constant 0 : index
    %c0_68 = arith.constant 0 : index
    %c0_69 = arith.constant 0 : index
    %139 = vector.load %arg5[%c0_66, %c0_67, %c0_68, %c0_69] : memref<1x8x8x4xf32, #tpu.memory_space<vmem>>, vector<1x8x8x4xf32>
    %140 = vector.shape_cast %139 : vector<1x8x8x4xf32> to vector<8x8x4xf32>
    %141 = vector.shape_cast %138 : vector<8x8x4xf32> to vector<1x8x8x4xf32>
    tpu.vector_store %arg5[%c0_66, %c0_67, %c0_68, %c0_69], %141 {strides = array<i32>} : memref<1x8x8x4xf32, #tpu.memory_space<vmem>>, vector<1x8x8x4xf32>,
    %cst_70 = arith.constant dense<0.000000e+00> : vector<8x4xf32>
    %142 = vector.multi_reduction <add>, %138, %cst_70 [0] : vector<8x8x4xf32> to vector<8x4xf32>
    %cst_71 = arith.constant dense<0.000000e+00> : vector<4xf32>
    %143 = vector.multi_reduction <add>, %142, %cst_71 [0] : vector<8x4xf32> to vector<4xf32>
    %c0_72 = arith.constant 0 : index
    %c0_73 = arith.constant 0 : index
    %c0_74 = arith.constant 0 : index
    %144 = vector.load %arg6[%c0_72, %c0_73, %c0_74] : memref<1x1x4xf32, #tpu.memory_space<vmem>>, vector<1x1x4xf32>
    %145 = vector.shape_cast %144 : vector<1x1x4xf32> to vector<4xf32>
    %146 = vector.shape_cast %143 : vector<4xf32> to vector<1x1x4xf32>
    tpu.vector_store %arg6[%c0_72, %c0_73, %c0_74], %146 {strides = array<i32>} : memref<1x1x4xf32, #tpu.memory_space<vmem>>, vector<1x1x4xf32>,
    %147 = arith.mulf %138, %138 : vector<8x8x4xf32>
    %cst_75 = arith.constant dense<0.000000e+00> : vector<8x4xf32>
    %148 = vector.multi_reduction <add>, %147, %cst_75 [0] : vector<8x8x4xf32> to vector<8x4xf32>
    %cst_76 = arith.constant dense<0.000000e+00> : vector<4xf32>
    %149 = vector.multi_reduction <add>, %148, %cst_76 [0] : vector<8x4xf32> to vector<4xf32>
    %c0_77 = arith.constant 0 : index
    %c0_78 = arith.constant 0 : index
    %c0_79 = arith.constant 0 : index
    %150 = vector.load %arg7[%c0_77, %c0_78, %c0_79] : memref<1x1x4xf32, #tpu.memory_space<vmem>>, vector<1x1x4xf32>
    %151 = vector.shape_cast %150 : vector<1x1x4xf32> to vector<4xf32>
    %152 = vector.shape_cast %149 : vector<4xf32> to vector<1x1x4xf32>
    tpu.vector_store %arg7[%c0_77, %c0_78, %c0_79], %152 {strides = array<i32>} : memref<1x1x4xf32, #tpu.memory_space<vmem>>, vector<1x1x4xf32>,
    return
  }
  func.func @transform_0(%arg0: i32) -> (i32, i32, i32, i32) {
    %c0_i32 = arith.constant 0 : i32
    %c0_i32_0 = arith.constant 0 : i32
    %c0_i32_1 = arith.constant 0 : i32
    %c0_i32_2 = arith.constant 0 : i32
    return %arg0, %c0_i32, %c0_i32_0, %c0_i32_1 : i32, i32, i32, i32
  }
  func.func @transform_1(%arg0: i32) -> (i32, i32) {
    %c0_i32 = arith.constant 0 : i32
    %c0_i32_0 = arith.constant 0 : i32
    %c0_i32_1 = arith.constant 0 : i32
    return %c0_i32, %c0_i32_0 : i32, i32
  }
  func.func @transform_2(%arg0: i32) -> (i32, i32) {
    %c0_i32 = arith.constant 0 : i32
    %c0_i32_0 = arith.constant 0 : i32
    %c0_i32_1 = arith.constant 0 : i32
    return %c0_i32, %c0_i32_0 : i32, i32
  }
  func.func @transform_3(%arg0: i32) -> (i32, i32) {
    %c0_i32 = arith.constant 0 : i32
    %c0_i32_0 = arith.constant 0 : i32
    %c0_i32_1 = arith.constant 0 : i32
    return %c0_i32, %c0_i32_0 : i32, i32
  }
  func.func @transform_4(%arg0: i32) -> (i32, i32, i32, i32) {
    %c0_i32 = arith.constant 0 : i32
    %c0_i32_0 = arith.constant 0 : i32
    %c0_i32_1 = arith.constant 0 : i32
    %c0_i32_2 = arith.constant 0 : i32
    return %arg0, %c0_i32, %c0_i32_0, %c0_i32_1 : i32, i32, i32, i32
  }
  func.func @transform_5(%arg0: i32) -> (i32, i32, i32) {
    %c0_i32 = arith.constant 0 : i32
    %c0_i32_0 = arith.constant 0 : i32
    %c0_i32_1 = arith.constant 0 : i32
    return %arg0, %c0_i32, %c0_i32_0 : i32, i32, i32
  }
  func.func @transform_6(%arg0: i32) -> (i32, i32, i32) {
    %c0_i32 = arith.constant 0 : i32
    %c0_i32_0 = arith.constant 0 : i32
    %c0_i32_1 = arith.constant 0 : i32
    return %arg0, %c0_i32, %c0_i32_0 : i32, i32, i32
  }
}

module attributes {stable_mosaic.version = 11 : i64} {
  func.func @_nf_bn_add_act_kernel(%arg0: i32, %arg1: i32, %arg2: memref<1x8x8x4xf32, #tpu.memory_space<vmem>>, %arg3: memref<1x1x8xf32, #tpu.memory_space<vmem>>, %arg4: memref<1x1x8xf32, #tpu.memory_space<vmem>>, %arg5: memref<1x8x8x8xf32, #tpu.memory_space<vmem>>, %arg6: memref<1x8x8x8xf32, #tpu.memory_space<vmem>>) attributes {dimension_semantics = [#tpu.dimension_semantics<parallel>, #tpu.dimension_semantics<parallel>], iteration_bounds = array<i64: 2, 1>, scalar_prefetch = 0 : i64, scratch_operands = 0 : i64, tpu.core_type = #tpu.core_type<tc>, window_params = [{transform_indices = @transform_0, window_bounds = array<i64: 1, 8, 8, 4>}, {transform_indices = @transform_1, window_bounds = array<i64: 1, 1, 8>}, {pipeline_mode = #tpu.pipeline_mode<synchronous>, transform_indices = @transform_2, window_bounds = array<i64: 1, 1, 8>}, {transform_indices = @transform_3, window_bounds = array<i64: 1, 8, 8, 8>}, {transform_indices = @transform_4, window_bounds = array<i64: 1, 8, 8, 8>}]} {
    %c0 = arith.constant 0 : index
    %c0_0 = arith.constant 0 : index
    %c0_1 = arith.constant 0 : index
    %c0_2 = arith.constant 0 : index
    %0 = vector.load %arg2[%c0, %c0_0, %c0_1, %c0_2] : memref<1x8x8x4xf32, #tpu.memory_space<vmem>>, vector<1x8x8x4xf32>
    %1 = vector.shape_cast %0 : vector<1x8x8x4xf32> to vector<8x8x4xf32>
    %2 = tpu.concatenate %1, %1 in 2 : vector<8x8x4xf32>, vector<8x8x4xf32> -> vector<8x8x8xf32>
    %c0_3 = arith.constant 0 : index
    %c0_4 = arith.constant 0 : index
    %c0_5 = arith.constant 0 : index
    %3 = vector.load %arg3[%c0_3, %c0_4, %c0_5] : memref<1x1x8xf32, #tpu.memory_space<vmem>>, vector<1x1x8xf32>
    %4 = vector.shape_cast %3 : vector<1x1x8xf32> to vector<8xf32>
    %5 = vector.shape_cast %4 : vector<8xf32> to vector<1x1x8xf32>
    %6 = vector.broadcast %5 : vector<1x1x8xf32> to vector<8x8x8xf32>
    %7 = arith.mulf %2, %6 : vector<8x8x8xf32>
    %c0_6 = arith.constant 0 : index
    %c0_7 = arith.constant 0 : index
    %c0_8 = arith.constant 0 : index
    %8 = vector.load %arg4[%c0_6, %c0_7, %c0_8] : memref<1x1x8xf32, #tpu.memory_space<vmem>>, vector<1x1x8xf32>
    %9 = vector.shape_cast %8 : vector<1x1x8xf32> to vector<8xf32>
    %10 = vector.shape_cast %9 : vector<8xf32> to vector<1x1x8xf32>
    %11 = vector.broadcast %10 : vector<1x1x8xf32> to vector<8x8x8xf32>
    %12 = arith.addf %7, %11 : vector<8x8x8xf32>
    %c0_9 = arith.constant 0 : index
    %c0_10 = arith.constant 0 : index
    %c0_11 = arith.constant 0 : index
    %c0_12 = arith.constant 0 : index
    %13 = vector.load %arg5[%c0_9, %c0_10, %c0_11, %c0_12] : memref<1x8x8x8xf32, #tpu.memory_space<vmem>>, vector<1x8x8x8xf32>
    %14 = vector.shape_cast %13 : vector<1x8x8x8xf32> to vector<8x8x8xf32>
    %15 = arith.addf %12, %14 : vector<8x8x8xf32>
    %cst = arith.constant 0.000000e+00 : f32
    %16 = vector.broadcast %cst : f32 to vector<8x8x8xf32>
    %17 = arith.maximumf %15, %16 : vector<8x8x8xf32>
    %c0_13 = arith.constant 0 : index
    %c0_14 = arith.constant 0 : index
    %c0_15 = arith.constant 0 : index
    %c0_16 = arith.constant 0 : index
    %18 = vector.load %arg6[%c0_13, %c0_14, %c0_15, %c0_16] : memref<1x8x8x8xf32, #tpu.memory_space<vmem>>, vector<1x8x8x8xf32>
    %19 = vector.shape_cast %18 : vector<1x8x8x8xf32> to vector<8x8x8xf32>
    %20 = vector.shape_cast %17 : vector<8x8x8xf32> to vector<1x8x8x8xf32>
    tpu.vector_store %arg6[%c0_13, %c0_14, %c0_15, %c0_16], %20 {strides = array<i32>} : memref<1x8x8x8xf32, #tpu.memory_space<vmem>>, vector<1x8x8x8xf32>,
    return
  }
  func.func @transform_0(%arg0: i32, %arg1: i32) -> (i32, i32, i32, i32) {
    %c0_i32 = arith.constant 0 : i32
    %c0_i32_0 = arith.constant 0 : i32
    %c0_i32_1 = arith.constant 0 : i32
    return %arg0, %arg1, %c0_i32, %c0_i32_0 : i32, i32, i32, i32
  }
  func.func @transform_1(%arg0: i32, %arg1: i32) -> (i32, i32, i32) {
    %c0_i32 = arith.constant 0 : i32
    %c0_i32_0 = arith.constant 0 : i32
    %c0_i32_1 = arith.constant 0 : i32
    return %arg0, %c0_i32, %c0_i32_0 : i32, i32, i32
  }
  func.func @transform_2(%arg0: i32, %arg1: i32) -> (i32, i32, i32) {
    %c0_i32 = arith.constant 0 : i32
    %c0_i32_0 = arith.constant 0 : i32
    %c0_i32_1 = arith.constant 0 : i32
    %c0_i32_2 = arith.constant 0 : i32
    return %c0_i32, %c0_i32_0, %c0_i32_1 : i32, i32, i32
  }
  func.func @transform_3(%arg0: i32, %arg1: i32) -> (i32, i32, i32, i32) {
    %c0_i32 = arith.constant 0 : i32
    %c0_i32_0 = arith.constant 0 : i32
    %c0_i32_1 = arith.constant 0 : i32
    return %arg0, %arg1, %c0_i32, %c0_i32_0 : i32, i32, i32, i32
  }
  func.func @transform_4(%arg0: i32, %arg1: i32) -> (i32, i32, i32, i32) {
    %c0_i32 = arith.constant 0 : i32
    %c0_i32_0 = arith.constant 0 : i32
    %c0_i32_1 = arith.constant 0 : i32
    return %arg0, %arg1, %c0_i32, %c0_i32_0 : i32, i32, i32, i32
  }
}

</mosaic_0001>

<llo_original>
// kernel: basic_block_forward.5
$region0: #{basic_block_forward.5}
  #allocation0 [shape = 'u32[]', space=smem, size = 0x4, offset = 0x4, fixed_abs, tag = 'smem constant byte address 0x4 - core index']
  #allocation1 [shape = 'u32[144,128]{1,0:T(1,128)}', space=vmem, size = 0x12000, scoped, tag = 'internal scratch']
  %s0 = inlined_call_operand.vmem [shape: f32[2,8,8,4], index: 0, kind: input, shape index: {}]
  %s1 = inlined_call_operand.vmem [shape: f32[2,1,8], index: 1, kind: input, shape index: {}]
  %s2 = inlined_call_operand.vmem [shape: f32[1,1,8], index: 2, kind: input, shape index: {}]
  %s3 = inlined_call_operand.vmem [shape: f32[2,8,8,8], index: 3, kind: output, shape index: {}]
  %s4 = sld [smem:[#allocation0]]
  $region45: #{basic_block_forward.5} parent=0
    _
  %s6 = ssub.s32 1, %s4
  %s7 = scalar_select 0, %s6, %s4
  loop: start=0, step=1, limit=4
  $region2: #{basic_block_forward.5} parent=0 // loop_pre_header
    _
  $region3: #{basic_block_forward.5} parent=0 // loop_header
    %s9 = sphi 0, %s13
    %p10 = scmp.ge.s32.totalorder %s9, 4
    %s16 = sphi 0, %s28
    %s17 = sphi 0, %s24
    %s18 = sphi 0, %s16
    %s19 = sphi 0, %s17
    %s20 = sphi 0, %s18
    %s21 = sphi 0, %s19
    %s33 = sphi 0, %s35
    %s36 = sphi 0, %s33
    %s37 = sphi 0, %s36
    %s53 = sphi 0, %s37
    %s59 = sphi 0, %s61
    %s62 = sphi 0, %s59
    %s63 = sphi 0, %s62
    %s79 = sphi 0, %s63
    %s83 = sphi 0, %s83
    %s85 = sphi 0, %s83
    %s86 = sphi 0, %s85
    %s100 = sphi 0, %s86
    %s108 = sphi 0, %s110
    %s111 = sphi 0, %s108
    %s112 = sphi 0, %s111
    %s128 = sphi 0, %s112
  $region4: #{basic_block_forward.5} parent=0 // loop_header_branch
    %12 = sbr.rel (%p10) target = $region8
  $region5: #{basic_block_forward.5} parent=0 // loop_body
    %s14 = ssub.s32 %s9, 1
    %s15 = ssub.s32 %s9, 2
    %s22 = sadd.s32 1, %s17
    %p23 = scmp.ge.s32.totalorder %s22, 1
    %s24 = scalar_select %p23, 0, %s22
    %s25 = sadd.s32 1, %s16
    %s26 = scalar_select %p23, %s25, %s16
    %p27 = scmp.ge.s32.totalorder %s26, 2
    %s28 = scalar_select %p27, 0, %s26
    %s29 = ssub.s32 %s16, %s28
    %s30 = ssub.s32 %s17, %s24
    %s31 = sor.u32 %s29, %s30
    %p32 = scmp.eq.s32.totalorder %s31, 0
    %s34 = sadd.s32 %s33, 1
    %s35 = scalar_select %p32, %s33, %s34
    %p38 = pneg %p32
    %p39 = scmp.eq.s32.totalorder %s9, 1
    %p40 = por %p38, %p39
    %p41 = scmp.ne.s32.totalorder %s33, %s36
    %p42 = scmp.eq.s32.totalorder %s9, 0
    %p43 = por %p41, %p42
    %p44 = scmp.ne.s32.totalorder %s33, %s36
    %p45 = scmp.eq.s32.totalorder %s14, 1
    %p46 = por %p44, %p45
    %p47 = scmp.ne.s32.totalorder %s36, %s37
    %p48 = scmp.eq.s32.totalorder %s14, 0
    %p49 = por %p47, %p48
    %p50 = scmp.ne.s32.totalorder %s36, %s37
    %p51 = scmp.eq.s32.totalorder %s15, 1
    %p52 = por %p50, %p51
    %p54 = scmp.ne.s32.totalorder %s37, %s53
    %p55 = scmp.eq.s32.totalorder %s15, 0
    %p56 = por %p54, %p55
    %s57 = ssub.s32 %s16, %s28
    %p58 = scmp.eq.s32.totalorder %s57, 0
    %s60 = sadd.s32 %s59, 1
    %s61 = scalar_select %p58, %s59, %s60
    %p64 = pneg %p58
    %p65 = scmp.eq.s32.totalorder %s9, 1
    %p66 = por %p64, %p65
    %p67 = scmp.ne.s32.totalorder %s59, %s62
    %p68 = scmp.eq.s32.totalorder %s9, 0
    %p69 = por %p67, %p68
    %p70 = scmp.ne.s32.totalorder %s59, %s62
    %p71 = scmp.eq.s32.totalorder %s14, 1
    %p72 = por %p70, %p71
    %p73 = scmp.ne.s32.totalorder %s62, %s63
    %p74 = scmp.eq.s32.totalorder %s14, 0
    %p75 = por %p73, %p74
    %p76 = scmp.ne.s32.totalorder %s62, %s63
    %p77 = scmp.eq.s32.totalorder %s15, 1
    %p78 = por %p76, %p77
    %p80 = scmp.ne.s32.totalorder %s63, %s79
    %p81 = scmp.eq.s32.totalorder %s15, 0
    %p82 = por %p80, %p81
    %s84 = sadd.s32 %s83, 1
    %p87 = scmp.eq.s32.totalorder %s9, 1
    %p88 = scmp.ne.s32.totalorder %s83, %s85
    %p89 = scmp.eq.s32.totalorder %s9, 0
    %p90 = por %p88, %p89
    %p91 = scmp.ne.s32.totalorder %s83, %s85
    %p92 = scmp.eq.s32.totalorder %s14, 1
    %p93 = por %p91, %p92
    %p94 = scmp.ne.s32.totalorder %s85, %s86
    %p95 = scmp.eq.s32.totalorder %s14, 0
    %p96 = por %p94, %p95
    %p97 = scmp.ne.s32.totalorder %s85, %s86
    %p98 = scmp.eq.s32.totalorder %s15, 1
    %p99 = por %p97, %p98
    %p101 = scmp.ne.s32.totalorder %s86, %s100
    %p102 = scmp.eq.s32.totalorder %s15, 0
    %p103 = por %p101, %p102
    %s104 = ssub.s32 %s16, %s28
    %s105 = ssub.s32 %s17, %s24
    %s106 = sor.u32 %s104, %s105
    %p107 = scmp.eq.s32.totalorder %s106, 0
    %s109 = sadd.s32 %s108, 1
    %s110 = scalar_select %p107, %s108, %s109
    %p113 = pneg %p107
    %p114 = scmp.eq.s32.totalorder %s9, 1
    %p115 = por %p113, %p114
    %p116 = scmp.ne.s32.totalorder %s108, %s111
    %p117 = scmp.eq.s32.totalorder %s9, 0
    %p118 = por %p116, %p117
    %p119 = scmp.ne.s32.totalorder %s108, %s111
    %p120 = scmp.eq.s32.totalorder %s14, 1
    %p121 = por %p119, %p120
    %p122 = scmp.ne.s32.totalorder %s111, %s112
    %p123 = scmp.eq.s32.totalorder %s14, 0
    %p124 = por %p122, %p123
    %p125 = scmp.ne.s32.totalorder %s111, %s112
    %p126 = scmp.eq.s32.totalorder %s15, 1
    %p127 = por %p125, %p126
    %p129 = scmp.ne.s32.totalorder %s112, %s128
    %p130 = scmp.eq.s32.totalorder %s15, 0
    %p131 = por %p129, %p130
    %p132 = scmp.le.s32.totalorder 1, %s9
    %p133 = scmp.lt.s32.totalorder %s9, 3
    %p134 = pnand %p132, %p133
    %p135 = pneg %p134
    // Predicated region
    $region9: #{basic_block_forward.5} parent=5 // pred_check
      _
    $region10: #{basic_block_forward.5} parent=5 // pred_check_branch
      %137 = sbr.rel (%p134) target = $region12
    $region11: #{basic_block_forward.5} parent=5 // pred_region
      %s138 = ssub.s32 %s9, 1
      // Predicated region
      $region13: #{basic_block_forward.5} parent=11 // pred_check
        %p139 = pneg %p96
      $region14: #{basic_block_forward.5} parent=11 // pred_check_branch
        %141 = sbr.rel (%p139) target = $region16
      $region15: #{basic_block_forward.5} parent=11 // pred_region
        _
      $region16: #{basic_block_forward.5} parent=11 // pred_fallthru
        _
    $region12: #{basic_block_forward.5} parent=5 // pred_fallthru
      _
    %p142 = scmp.lt.s32.totalorder %s9, 2
    // Predicated region
    $region17: #{basic_block_forward.5} parent=5 // pred_check
      %p143 = pneg %p142
    $region18: #{basic_block_forward.5} parent=5 // pred_check_branch
      %145 = sbr.rel (%p143) target = $region20
    $region19: #{basic_block_forward.5} parent=5 // pred_region
      // Predicated region
      $region21: #{basic_block_forward.5} parent=19 // pred_check
        %p146 = pneg %p43
      $region22: #{basic_block_forward.5} parent=19 // pred_check_branch
        %148 = sbr.rel (%p146) target = $region24
      $region23: #{basic_block_forward.5} parent=19 // pred_region
        %s149 = smul.u32 8, %s17
        %p150 = scmp.lt.s32.totalorder %s16, 1
        %s151 = scalar_select %p150, %s16, 1
        %p152 = scmp.lt.s32.totalorder %s149, 7
        %s153 = scalar_select %p152, %s149, 7
        %s154 = smul.addr %s151, 8
        %s155 = sadd.s32 %s153, %s154
        %s156 = smul.addr %s155, 8
        %s157 = scalar_lea.vmem %s0, %s156
        %s158 = smul.u32 8, %s17
      $region24: #{basic_block_forward.5} parent=19 // pred_fallthru
        _
      // Predicated region
      $region25: #{basic_block_forward.5} parent=19 // pred_check
        %p159 = pneg %p69
      $region26: #{basic_block_forward.5} parent=19 // pred_check_branch
        %161 = sbr.rel (%p159) target = $region28
      $region27: #{basic_block_forward.5} parent=19 // pred_region
        %p162 = scmp.lt.s32.totalorder %s16, 1
        %s163 = scalar_select %p162, %s16, 1
        %s164 = scalar_lea.vmem %s1, %s163
      $region28: #{basic_block_forward.5} parent=19 // pred_fallthru
        _
    $region20: #{basic_block_forward.5} parent=5 // pred_fallthru
      _
    %p165 = scmp.le.s32.totalorder 1, %s9
    %p166 = scmp.lt.s32.totalorder %s9, 3
    %p167 = pnand %p165, %p166
    %p168 = pneg %p167
    // Predicated region
    $region29: #{basic_block_forward.5} parent=5 // pred_check
      _
    $region30: #{basic_block_forward.5} parent=5 // pred_check_branch
      %170 = sbr.rel (%p167) target = $region32
    $region31: #{basic_block_forward.5} parent=5 // pred_region
      %s171 = ssub.s32 %s9, 1
      %s172 = smul.u32 8, %s19
      %p173 = scmp.lt.s32.totalorder %s18, 1
      %s174 = scalar_select %p173, %s18, 1
      %p175 = scmp.lt.s32.totalorder %s172, 7
      %s176 = scalar_select %p175, %s172, 7
      %s177 = smul.addr %s174, 8
      %s178 = sadd.s32 %s176, %s177
      %s179 = smul.addr %s178, 8
      %s180 = scalar_lea.vmem %s0, %s179
      %p181 = pneg %p49
      %p182 = pneg %p46
      %p183 = scmp.lt.s32.totalorder %s18, 1
      %s184 = scalar_select %p183, %s18, 1
      %s185 = scalar_lea.vmem %s1, %s184
      %p186 = pneg %p75
      %p187 = pneg %p72
      %p188 = pneg %p96
      %p189 = pneg %p93
      %p190 = pneg %p124
      %p191 = pneg %p121
      %s192 = smul.u32 8, %s19
      %p193 = scmp.lt.s32.totalorder %s18, 1
      %s194 = scalar_select %p193, %s18, 1
      %p195 = scmp.lt.s32.totalorder %s192, 7
      %s196 = scalar_select %p195, %s192, 7
      %s197 = smul.addr %s194, 8
      %s198 = sadd.s32 %s196, %s197
      %s199 = smul.addr %s198, 8
      %s200 = scalar_lea.vmem %s3, %s199
      %s201 = smul.u32 8, %s19
      %p202 = scmp.lt.s32.totalorder %s18, 1
      %s203 = scalar_select %p202, %s18, 1
      %p204 = scmp.lt.s32.totalorder %s201, 7
      %s205 = scalar_select %p204, %s201, 7
      %s206 = smul.addr %s203, 8
      %s207 = sadd.s32 %s205, %s206
      %s208 = smul.addr %s207, 8
      %s209 = scalar_lea.vmem %s0, %s208
      %s210 = smul.u32 8, %s19
      %p211 = scmp.lt.s32.totalorder %s18, 1
      %s212 = scalar_select %p211, %s18, 1
      %s213 = scalar_lea.vmem %s1, %s212
      %s214 = smul.u32 8, %s19
      %p215 = scmp.lt.s32.totalorder %s18, 1
      %s216 = scalar_select %p215, %s18, 1
      %p217 = scmp.lt.s32.totalorder %s214, 7
      %s218 = scalar_select %p217, %s214, 7
      %s219 = smul.addr %s216, 8
      %s220 = sadd.s32 %s218, %s219
      %s221 = smul.addr %s220, 8
      %s222 = scalar_lea.vmem %s3, %s221
      %s223 = smul.u32 8, %s19
      %v224 = vld [vmem:[%s209] sm:$0xff]
      %v225 = vld [vmem:[%s209 + $0x8] sm:$0xff]
      %v226 = vld [vmem:[%s209 + $0x10] sm:$0xff]
      %v227 = vld [vmem:[%s209 + $0x18] sm:$0xff]
      %v228 = vld [vmem:[%s209 + $0x20] sm:$0xff]
      %v229 = vld [vmem:[%s209 + $0x28] sm:$0xff]
      %v230 = vld [vmem:[%s209 + $0x30] sm:$0xff]
      %v231 = vld [vmem:[%s209 + $0x38] sm:$0xff]
      %240 = vrot.lane.b32.xlu0 %v224, 4
      %v241 = vpop.permute.xlu0 %240
      %242 = vrot.lane.b32.xlu0 %v225, 4
      %v243 = vpop.permute.xlu0 %242
      %244 = vrot.lane.b32.xlu0 %v226, 4
      %v245 = vpop.permute.xlu0 %244
      %246 = vrot.lane.b32.xlu0 %v227, 4
      %v247 = vpop.permute.xlu0 %246
      %248 = vrot.lane.b32.xlu0 %v228, 4
      %v249 = vpop.permute.xlu0 %248
      %250 = vrot.lane.b32.xlu0 %v229, 4
      %v251 = vpop.permute.xlu0 %250
      %252 = vrot.lane.b32.xlu0 %v230, 4
      %v253 = vpop.permute.xlu0 %252
      %254 = vrot.lane.b32.xlu0 %v231, 4
      %v255 = vpop.permute.xlu0 %254
      %vm264 = vcmask 31744
      %v265 = vsel %vm264, %v224, %v241
      %v266 = vsel %vm264, %v225, %v243
      %v267 = vsel %vm264, %v226, %v245
      %v268 = vsel %vm264, %v227, %v247
      %v269 = vsel %vm264, %v228, %v249
      %v270 = vsel %vm264, %v229, %v251
      %v271 = vsel %vm264, %v230, %v253
      %v272 = vsel %vm264, %v231, %v255
      %v273 = vld [vmem:[%s213] sm:$0x1]
      %v275 = vlaneseq
      %v276 = vshrl.u32 %v275, 7
      %v277 = vsub.s32 0, %v276
      %v278 = vrot.slane %v273, %v277
      %v280 = vmul.f32 %v265, %v278
      %v281 = vmul.f32 %v266, %v278
      %v282 = vmul.f32 %v267, %v278
      %v283 = vmul.f32 %v268, %v278
      %v284 = vmul.f32 %v269, %v278
      %v285 = vmul.f32 %v270, %v278
      %v286 = vmul.f32 %v271, %v278
      %v287 = vmul.f32 %v272, %v278
      %v288 = vld [vmem:[%s2] sm:$0x1]
      %v290 = vlaneseq
      %v291 = vshrl.u32 %v290, 7
      %v292 = vsub.s32 0, %v291
      %v293 = vrot.slane %v288, %v292
      %v295 = vadd.f32 %v280, %v293
      %v296 = vadd.f32 %v281, %v293
      %v297 = vadd.f32 %v282, %v293
      %v298 = vadd.f32 %v283, %v293
      %v299 = vadd.f32 %v284, %v293
      %v300 = vadd.f32 %v285, %v293
      %v301 = vadd.f32 %v286, %v293
      %v302 = vadd.f32 %v287, %v293
      %v303 = vmax.f32 %v295, 0.0
      %v304 = vmax.f32 %v296, 0.0
      %v305 = vmax.f32 %v297, 0.0
      %v306 = vmax.f32 %v298, 0.0
      %v307 = vmax.f32 %v299, 0.0
      %v308 = vmax.f32 %v300, 0.0
      %v309 = vmax.f32 %v301, 0.0
      %v310 = vmax.f32 %v302, 0.0
      %vm311 = vcmask 64512
      %312 = vst.msk [vmem:[%s222] sm:$0xff] %vm311, %v303
      %313 = vst.msk [vmem:[%s222 + $0x8] sm:$0xff] %vm311, %v304
      %314 = vst.msk [vmem:[%s222 + $0x10] sm:$0xff] %vm311, %v305
      %315 = vst.msk [vmem:[%s222 + $0x18] sm:$0xff] %vm311, %v306
      %316 = vst.msk [vmem:[%s222 + $0x20] sm:$0xff] %vm311, %v307
      %317 = vst.msk [vmem:[%s222 + $0x28] sm:$0xff] %vm311, %v308
      %318 = vst.msk [vmem:[%s222 + $0x30] sm:$0xff] %vm311, %v309
      %319 = vst.msk [vmem:[%s222 + $0x38] sm:$0xff] %vm311, %v310
      %s320 = smul.u32 8, %s19
      %p321 = scmp.lt.s32.totalorder %s18, 1
      %s322 = scalar_select %p321, %s18, 1
      %p323 = scmp.lt.s32.totalorder %s320, 7
      %s324 = scalar_select %p323, %s320, 7
      %s325 = smul.addr %s322, 8
      %s326 = sadd.s32 %s324, %s325
      %s327 = smul.addr %s326, 8
      %s328 = scalar_lea.vmem %s3, %s327
      // Predicated region
      $region33: #{basic_block_forward.5} parent=31 // pred_check
        %p329 = pneg %p121
      $region34: #{basic_block_forward.5} parent=31 // pred_check_branch
        %331 = sbr.rel (%p329) target = $region36
      $region35: #{basic_block_forward.5} parent=31 // pred_region
        %s332 = smul.u32 8, %s19
      $region36: #{basic_block_forward.5} parent=31 // pred_fallthru
        _
    $region32: #{basic_block_forward.5} parent=5 // pred_fallthru
      _
    %p333 = scmp.le.s32.totalorder 2, %s9
    // Predicated region
    $region37: #{basic_block_forward.5} parent=5 // pred_check
      %p334 = pneg %p333
    $region38: #{basic_block_forward.5} parent=5 // pred_check_branch
      %336 = sbr.rel (%p334) target = $region40
    $region39: #{basic_block_forward.5} parent=5 // pred_region
      %s337 = ssub.s32 %s9, 2
      // Predicated region
      $region41: #{basic_block_forward.5} parent=39 // pred_check
        %p338 = pneg %p127
      $region42: #{basic_block_forward.5} parent=39 // pred_check_branch
        %340 = sbr.rel (%p338) target = $region44
      $region43: #{basic_block_forward.5} parent=39 // pred_region
        %s341 = smul.u32 8, %s21
        %p342 = scmp.lt.s32.totalorder %s20, 1
        %s343 = scalar_select %p342, %s20, 1
        %p344 = scmp.lt.s32.totalorder %s341, 7
        %s345 = scalar_select %p344, %s341, 7
        %s346 = smul.addr %s343, 8
        %s347 = sadd.s32 %s345, %s346
        %s348 = smul.addr %s347, 8
        %s349 = scalar_lea.vmem %s3, %s348
      $region44: #{basic_block_forward.5} parent=39 // pred_fallthru
        _
    $region40: #{basic_block_forward.5} parent=5 // pred_fallthru
      _
  $region6: #{basic_block_forward.5} parent=0 // loop_footer
    %s13 = sadd.s32 1, %s9
  $region7: #{basic_block_forward.5} parent=0 // loop_footer_branch
    %8 = sbr.rel target = $region3
  $region8: #{basic_block_forward.5} parent=0 // loop_exit
    _

// kernel: basic_block_forward.4
$region0: #{basic_block_forward.4}
  #allocation0 [shape = 'u32[]', space=smem, size = 0x4, offset = 0x4, fixed_abs, tag = 'smem constant byte address 0x4 - core index']
  #allocation1 [shape = 'u32[144,128]{1,0:T(1,128)}', space=vmem, size = 0x12000, scoped, tag = 'internal scratch']
  #allocation2 [shape = 'f32[18,18,4]{2,1,0:T(8,128)}', space=vmem, size = 0x36000, scoped, tag = 'scratch operand']
  %s0 = inlined_call_operand.vmem [shape: f32[2,16,16,4], index: 0, kind: input, shape index: {}]
  %s1 = inlined_call_operand.vmem [shape: f32[4,4], index: 1, kind: input, shape index: {}]
  %s2 = inlined_call_operand.vmem [shape: f32[1,4], index: 2, kind: input, shape index: {}]
  %s3 = inlined_call_operand.vmem [shape: f32[9,4], index: 3, kind: input, shape index: {}]
  %s4 = inlined_call_operand.vmem [shape: f32[2,8,8,4], index: 4, kind: output, shape index: {0}]
  %s5 = inlined_call_operand.vmem [shape: f32[2,1,4], index: 5, kind: output, shape index: {1}]
  %s6 = inlined_call_operand.vmem [shape: f32[2,1,4], index: 6, kind: output, shape index: {2}]
  %7 = xla_tuple %s4, %s5, %s6
  %s8 = sld [smem:[#allocation0]]
  $region65: #{basic_block_forward.4} parent=0
    _
  %s10 = ssub.s32 1, %s8
  %s11 = scalar_select 0, %s10, %s8
  loop: start=0, step=1, limit=4
  $region2: #{basic_block_forward.4} parent=0 // loop_pre_header
    _
  $region3: #{basic_block_forward.4} parent=0 // loop_header
    %s13 = sphi 0, %s17
    %p14 = scmp.ge.s32.totalorder %s13, 4
    %s23 = sphi 0, %s25
    %s26 = sphi 0, %s23
    %s27 = sphi 0, %s26
    %s43 = sphi 0, %s27
    %s47 = sphi 0, %s47
    %s49 = sphi 0, %s47
    %s50 = sphi 0, %s49
    %s64 = sphi 0, %s50
    %s68 = sphi 0, %s68
    %s70 = sphi 0, %s68
    %s71 = sphi 0, %s70
    %s85 = sphi 0, %s71
    %s89 = sphi 0, %s89
    %s91 = sphi 0, %s89
    %s92 = sphi 0, %s91
    %s106 = sphi 0, %s92
    %s112 = sphi 0, %s114
    %s115 = sphi 0, %s112
    %s116 = sphi 0, %s115
    %s132 = sphi 0, %s116
    %s138 = sphi 0, %s140
    %s141 = sphi 0, %s138
    %s142 = sphi 0, %s141
    %s158 = sphi 0, %s142
    %s164 = sphi 0, %s166
    %s167 = sphi 0, %s164
    %s168 = sphi 0, %s167
    %s184 = sphi 0, %s168
  $region4: #{basic_block_forward.4} parent=0 // loop_header_branch
    %16 = sbr.rel (%p14) target = $region8
  $region5: #{basic_block_forward.4} parent=0 // loop_body
    %s18 = ssub.s32 %s13, 1
    %s19 = ssub.s32 %s13, 2
    %s20 = sadd.s32 %s13, 1
    %s21 = ssub.s32 %s13, %s20
    %p22 = scmp.eq.s32.totalorder %s21, 0
    %s24 = sadd.s32 %s23, 1
    %s25 = scalar_select %p22, %s23, %s24
    %p28 = pneg %p22
    %p29 = scmp.eq.s32.totalorder %s13, 1
    %p30 = por %p28, %p29
    %p31 = scmp.ne.s32.totalorder %s23, %s26
    %p32 = scmp.eq.s32.totalorder %s13, 0
    %p33 = por %p31, %p32
    %p34 = scmp.ne.s32.totalorder %s23, %s26
    %p35 = scmp.eq.s32.totalorder %s18, 1
    %p36 = por %p34, %p35
    %p37 = scmp.ne.s32.totalorder %s26, %s27
    %p38 = scmp.eq.s32.totalorder %s18, 0
    %p39 = por %p37, %p38
    %p40 = scmp.ne.s32.totalorder %s26, %s27
    %p41 = scmp.eq.s32.totalorder %s19, 1
    %p42 = por %p40, %p41
    %p44 = scmp.ne.s32.totalorder %s27, %s43
    %p45 = scmp.eq.s32.totalorder %s19, 0
    %p46 = por %p44, %p45
    %s48 = sadd.s32 %s47, 1
    %p51 = scmp.eq.s32.totalorder %s13, 1
    %p52 = scmp.ne.s32.totalorder %s47, %s49
    %p53 = scmp.eq.s32.totalorder %s13, 0
    %p54 = por %p52, %p53
    %p55 = scmp.ne.s32.totalorder %s47, %s49
    %p56 = scmp.eq.s32.totalorder %s18, 1
    %p57 = por %p55, %p56
    %p58 = scmp.ne.s32.totalorder %s49, %s50
    %p59 = scmp.eq.s32.totalorder %s18, 0
    %p60 = por %p58, %p59
    %p61 = scmp.ne.s32.totalorder %s49, %s50
    %p62 = scmp.eq.s32.totalorder %s19, 1
    %p63 = por %p61, %p62
    %p65 = scmp.ne.s32.totalorder %s50, %s64
    %p66 = scmp.eq.s32.totalorder %s19, 0
    %p67 = por %p65, %p66
    %s69 = sadd.s32 %s68, 1
    %p72 = scmp.eq.s32.totalorder %s13, 1
    %p73 = scmp.ne.s32.totalorder %s68, %s70
    %p74 = scmp.eq.s32.totalorder %s13, 0
    %p75 = por %p73, %p74
    %p76 = scmp.ne.s32.totalorder %s68, %s70
    %p77 = scmp.eq.s32.totalorder %s18, 1
    %p78 = por %p76, %p77
    %p79 = scmp.ne.s32.totalorder %s70, %s71
    %p80 = scmp.eq.s32.totalorder %s18, 0
    %p81 = por %p79, %p80
    %p82 = scmp.ne.s32.totalorder %s70, %s71
    %p83 = scmp.eq.s32.totalorder %s19, 1
    %p84 = por %p82, %p83
    %p86 = scmp.ne.s32.totalorder %s71, %s85
    %p87 = scmp.eq.s32.totalorder %s19, 0
    %p88 = por %p86, %p87
    %s90 = sadd.s32 %s89, 1
    %p93 = scmp.eq.s32.totalorder %s13, 1
    %p94 = scmp.ne.s32.totalorder %s89, %s91
    %p95 = scmp.eq.s32.totalorder %s13, 0
    %p96 = por %p94, %p95
    %p97 = scmp.ne.s32.totalorder %s89, %s91
    %p98 = scmp.eq.s32.totalorder %s18, 1
    %p99 = por %p97, %p98
    %p100 = scmp.ne.s32.totalorder %s91, %s92
    %p101 = scmp.eq.s32.totalorder %s18, 0
    %p102 = por %p100, %p101
    %p103 = scmp.ne.s32.totalorder %s91, %s92
    %p104 = scmp.eq.s32.totalorder %s19, 1
    %p105 = por %p103, %p104
    %p107 = scmp.ne.s32.totalorder %s92, %s106
    %p108 = scmp.eq.s32.totalorder %s19, 0
    %p109 = por %p107, %p108
    %s110 = ssub.s32 %s13, %s20
    %p111 = scmp.eq.s32.totalorder %s110, 0
    %s113 = sadd.s32 %s112, 1
    %s114 = scalar_select %p111, %s112, %s113
    %p117 = pneg %p111
    %p118 = scmp.eq.s32.totalorder %s13, 1
    %p119 = por %p117, %p118
    %p120 = scmp.ne.s32.totalorder %s112, %s115
    %p121 = scmp.eq.s32.totalorder %s13, 0
    %p122 = por %p120, %p121
    %p123 = scmp.ne.s32.totalorder %s112, %s115
    %p124 = scmp.eq.s32.totalorder %s18, 1
    %p125 = por %p123, %p124
    %p126 = scmp.ne.s32.totalorder %s115, %s116
    %p127 = scmp.eq.s32.totalorder %s18, 0
    %p128 = por %p126, %p127
    %p129 = scmp.ne.s32.totalorder %s115, %s116
    %p130 = scmp.eq.s32.totalorder %s19, 1
    %p131 = por %p129, %p130
    %p133 = scmp.ne.s32.totalorder %s116, %s132
    %p134 = scmp.eq.s32.totalorder %s19, 0
    %p135 = por %p133, %p134
    %s136 = ssub.s32 %s13, %s20
    %p137 = scmp.eq.s32.totalorder %s136, 0
    %s139 = sadd.s32 %s138, 1
    %s140 = scalar_select %p137, %s138, %s139
    %p143 = pneg %p137
    %p144 = scmp.eq.s32.totalorder %s13, 1
    %p145 = por %p143, %p144
    %p146 = scmp.ne.s32.totalorder %s138, %s141
    %p147 = scmp.eq.s32.totalorder %s13, 0
    %p148 = por %p146, %p147
    %p149 = scmp.ne.s32.totalorder %s138, %s141
    %p150 = scmp.eq.s32.totalorder %s18, 1
    %p151 = por %p149, %p150
    %p152 = scmp.ne.s32.totalorder %s141, %s142
    %p153 = scmp.eq.s32.totalorder %s18, 0
    %p154 = por %p152, %p153
    %p155 = scmp.ne.s32.totalorder %s141, %s142
    %p156 = scmp.eq.s32.totalorder %s19, 1
    %p157 = por %p155, %p156
    %p159 = scmp.ne.s32.totalorder %s142, %s158
    %p160 = scmp.eq.s32.totalorder %s19, 0
    %p161 = por %p159, %p160
    %s162 = ssub.s32 %s13, %s20
    %p163 = scmp.eq.s32.totalorder %s162, 0
    %s165 = sadd.s32 %s164, 1
    %s166 = scalar_select %p163, %s164, %s165
    %p169 = pneg %p163
    %p170 = scmp.eq.s32.totalorder %s13, 1
    %p171 = por %p169, %p170
    %p172 = scmp.ne.s32.totalorder %s164, %s167
    %p173 = scmp.eq.s32.totalorder %s13, 0
    %p174 = por %p172, %p173
    %p175 = scmp.ne.s32.totalorder %s164, %s167
    %p176 = scmp.eq.s32.totalorder %s18, 1
    %p177 = por %p175, %p176
    %p178 = scmp.ne.s32.totalorder %s167, %s168
    %p179 = scmp.eq.s32.totalorder %s18, 0
    %p180 = por %p178, %p179
    %p181 = scmp.ne.s32.totalorder %s167, %s168
    %p182 = scmp.eq.s32.totalorder %s19, 1
    %p183 = por %p181, %p182
    %p185 = scmp.ne.s32.totalorder %s168, %s184
    %p186 = scmp.eq.s32.totalorder %s19, 0
    %p187 = por %p185, %p186
    %p188 = scmp.le.s32.totalorder 1, %s13
    %p189 = scmp.lt.s32.totalorder %s13, 3
    %p190 = pnand %p188, %p189
    %p191 = pneg %p190
    // Predicated region
    $region9: #{basic_block_forward.4} parent=5 // pred_check
      _
    $region10: #{basic_block_forward.4} parent=5 // pred_check_branch
      %193 = sbr.rel (%p190) target = $region12
    $region11: #{basic_block_forward.4} parent=5 // pred_region
      %s194 = ssub.s32 %s13, 1
      // Predicated region
      $region13: #{basic_block_forward.4} parent=11 // pred_check
        %p195 = pneg %p60
      $region14: #{basic_block_forward.4} parent=11 // pred_check_branch
        %197 = sbr.rel (%p195) target = $region16
      $region15: #{basic_block_forward.4} parent=11 // pred_region
        _
      $region16: #{basic_block_forward.4} parent=11 // pred_fallthru
        _
      // Predicated region
      $region17: #{basic_block_forward.4} parent=11 // pred_check
        %p198 = pneg %p81
      $region18: #{basic_block_forward.4} parent=11 // pred_check_branch
        %200 = sbr.rel (%p198) target = $region20
      $region19: #{basic_block_forward.4} parent=11 // pred_region
        _
      $region20: #{basic_block_forward.4} parent=11 // pred_fallthru
        _
      // Predicated region
      $region21: #{basic_block_forward.4} parent=11 // pred_check
        %p201 = pneg %p102
      $region22: #{basic_block_forward.4} parent=11 // pred_check_branch
        %203 = sbr.rel (%p201) target = $region24
      $region23: #{basic_block_forward.4} parent=11 // pred_region
        _
      $region24: #{basic_block_forward.4} parent=11 // pred_fallthru
        _
    $region12: #{basic_block_forward.4} parent=5 // pred_fallthru
      _
    %p204 = scmp.lt.s32.totalorder %s13, 2
    // Predicated region
    $region25: #{basic_block_forward.4} parent=5 // pred_check
      %p205 = pneg %p204
    $region26: #{basic_block_forward.4} parent=5 // pred_check_branch
      %207 = sbr.rel (%p205) target = $region28
    $region27: #{basic_block_forward.4} parent=5 // pred_region
      // Predicated region
      $region29: #{basic_block_forward.4} parent=27 // pred_check
        %p208 = pneg %p33
      $region30: #{basic_block_forward.4} parent=27 // pred_check_branch
        %210 = sbr.rel (%p208) target = $region32
      $region31: #{basic_block_forward.4} parent=27 // pred_region
        %p211 = scmp.lt.s32.totalorder %s13, 1
        %s212 = scalar_select %p211, %s13, 1
        %s213 = smul.addr %s212, 32
        %s214 = smul.addr %s213, 8
        %s215 = scalar_lea.vmem %s0, %s214
      $region32: #{basic_block_forward.4} parent=27 // pred_fallthru
        _
    $region28: #{basic_block_forward.4} parent=5 // pred_fallthru
      _
    %p216 = scmp.le.s32.totalorder 1, %s13
    %p217 = scmp.lt.s32.totalorder %s13, 3
    %p218 = pnand %p216, %p217
    %p219 = pneg %p218
    // Predicated region
    $region33: #{basic_block_forward.4} parent=5 // pred_check
      _
    $region34: #{basic_block_forward.4} parent=5 // pred_check_branch
      %221 = sbr.rel (%p218) target = $region36
    $region35: #{basic_block_forward.4} parent=5 // pred_region
      %s222 = ssub.s32 %s13, 1
      %p223 = scmp.lt.s32.totalorder %s18, 1
      %s224 = scalar_select %p223, %s18, 1
      %s225 = smul.addr %s224, 32
      %s226 = smul.addr %s225, 8
      %s227 = scalar_lea.vmem %s0, %s226
      %p228 = pneg %p39
      %p229 = pneg %p36
      %p230 = pneg %p60
      %p231 = pneg %p57
      %p232 = pneg %p81
      %p233 = pneg %p78
      %p234 = pneg %p102
      %p235 = pneg %p99
      %p236 = pneg %p128
      %p237 = pneg %p125
      %p238 = scmp.lt.s32.totalorder %s18, 1
      %s239 = scalar_select %p238, %s18, 1
      %s240 = smul.addr %s239, 8
      %s241 = smul.addr %s240, 8
      %s242 = scalar_lea.vmem %s4, %s241
      %p243 = pneg %p154
      %p244 = pneg %p151
      %p245 = scmp.lt.s32.totalorder %s18, 1
      %s246 = scalar_select %p245, %s18, 1
      %s247 = scalar_lea.vmem %s5, %s246
      %p248 = pneg %p180
      %p249 = pneg %p177
      %p250 = scmp.lt.s32.totalorder %s18, 1
      %s251 = scalar_select %p250, %s18, 1
      %s252 = scalar_lea.vmem %s6, %s251
      %p253 = scmp.lt.s32.totalorder %s18, 1
      %s254 = scalar_select %p253, %s18, 1
      %s255 = smul.addr %s254, 32
      %s256 = smul.addr %s255, 8
      %s257 = scalar_lea.vmem %s0, %s256
      %p258 = scmp.lt.s32.totalorder %s18, 1
      %s259 = scalar_select %p258, %s18, 1
      %s260 = smul.addr %s259, 8
      %s261 = smul.addr %s260, 8
      %s262 = scalar_lea.vmem %s4, %s261
      %p263 = scmp.lt.s32.totalorder %s18, 1
      %s264 = scalar_select %p263, %s18, 1
      %s265 = scalar_lea.vmem %s5, %s264
      %p266 = scmp.lt.s32.totalorder %s18, 1
      %s267 = scalar_select %p266, %s18, 1
      %s268 = scalar_lea.vmem %s6, %s267
      %v269 = vld [vmem:[%s257] sm:$0xff]
      %v270 = vld [vmem:[%s257 + $0x8] sm:$0xff]
      %v271 = vld [vmem:[%s257 + $0x10] sm:$0xff]
      %v272 = vld [vmem:[%s257 + $0x18] sm:$0xff]
      %v273 = vld [vmem:[%s257 + $0x20] sm:$0xff]
      %v274 = vld [vmem:[%s257 + $0x28] sm:$0xff]
      %v275 = vld [vmem:[%s257 + $0x30] sm:$0xff]
      %v276 = vld [vmem:[%s257 + $0x38] sm:$0xff]
      %v277 = vld [vmem:[%s257 + $0x40] sm:$0xff]
      %v278 = vld [vmem:[%s257 + $0x48] sm:$0xff]
      %v279 = vld [vmem:[%s257 + $0x50] sm:$0xff]
      %v280 = vld [vmem:[%s257 + $0x58] sm:$0xff]
      %v281 = vld [vmem:[%s257 + $0x60] sm:$0xff]
      %v282 = vld [vmem:[%s257 + $0x68] sm:$0xff]
      %v283 = vld [vmem:[%s257 + $0x70] sm:$0xff]
      %v284 = vld [vmem:[%s257 + $0x78] sm:$0xff]
      %v285 = vld [vmem:[%s257 + $0x80] sm:$0xff]
      %v286 = vld [vmem:[%s257 + $0x88] sm:$0xff]
      %v287 = vld [vmem:[%s257 + $0x90] sm:$0xff]
      %v288 = vld [vmem:[%s257 + $0x98] sm:$0xff]
      %v289 = vld [vmem:[%s257 + $0xa0] sm:$0xff]
      %v290 = vld [vmem:[%s257 + $0xa8] sm:$0xff]
      %v291 = vld [vmem:[%s257 + $0xb0] sm:$0xff]
      %v292 = vld [vmem:[%s257 + $0xb8] sm:$0xff]
      %v293 = vld [vmem:[%s257 + $0xc0] sm:$0xff]
      %v294 = vld [vmem:[%s257 + $0xc8] sm:$0xff]
      %v295 = vld [vmem:[%s257 + $0xd0] sm:$0xff]
      %v296 = vld [vmem:[%s257 + $0xd8] sm:$0xff]
      %v297 = vld [vmem:[%s257 + $0xe0] sm:$0xff]
      %v298 = vld [vmem:[%s257 + $0xe8] sm:$0xff]
      %v299 = vld [vmem:[%s257 + $0xf0] sm:$0xff]
      %v300 = vld [vmem:[%s257 + $0xf8] sm:$0xff]
      %v301 = vld [vmem:[%s2] sm:$0x1]
      %v303 = vlaneseq
      %v304 = vshrl.u32 %v303, 7
      %v305 = vsub.s32 0, %v304
      %v306 = vrot.slane %v301, %v305
      %v308 = vadd.f32 %v306, 0.0
      %v309 = vld [vmem:[%s1] sm:$0x1]
      %311 = vset.pattern.permute.xlu0 0
      %312 = vperm.xlu0 %311, %v269
      %v313 = vpop.permute.xlu0 %312
      %316 = vset.pattern.permute.xlu0 0
      %317 = vperm.xlu0 %316, %v270
      %v318 = vpop.permute.xlu0 %317
      %321 = vset.pattern.permute.xlu0 0
      %322 = vperm.xlu0 %321, %v271
      %v323 = vpop.permute.xlu0 %322
      %326 = vset.pattern.permute.xlu0 0
      %327 = vperm.xlu0 %326, %v272
      %v328 = vpop.permute.xlu0 %327
      %331 = vset.pattern.permute.xlu0 0
      %332 = vperm.xlu0 %331, %v273
      %v333 = vpop.permute.xlu0 %332
      %336 = vset.pattern.permute.xlu0 0
      %337 = vperm.xlu0 %336, %v274
      %v338 = vpop.permute.xlu0 %337
      %341 = vset.pattern.permute.xlu0 0
      %342 = vperm.xlu0 %341, %v275
      %v343 = vpop.permute.xlu0 %342
      %346 = vset.pattern.permute.xlu0 0
      %347 = vperm.xlu0 %346, %v276
      %v348 = vpop.permute.xlu0 %347
      %351 = vset.pattern.permute.xlu0 0
      %352 = vperm.xlu0 %351, %v277
      %v353 = vpop.permute.xlu0 %352
      %356 = vset.pattern.permute.xlu0 0
      %357 = vperm.xlu0 %356, %v278
      %v358 = vpop.permute.xlu0 %357
      %361 = vset.pattern.permute.xlu0 0
      %362 = vperm.xlu0 %361, %v279
      %v363 = vpop.permute.xlu0 %362
      %366 = vset.pattern.permute.xlu0 0
      %367 = vperm.xlu0 %366, %v280
      %v368 = vpop.permute.xlu0 %367
      %371 = vset.pattern.permute.xlu0 0
      %372 = vperm.xlu0 %371, %v281
      %v373 = vpop.permute.xlu0 %372
      %376 = vset.pattern.permute.xlu0 0
      %377 = vperm.xlu0 %376, %v282
      %v378 = vpop.permute.xlu0 %377
      %381 = vset.pattern.permute.xlu0 0
      %382 = vperm.xlu0 %381, %v283
      %v383 = vpop.permute.xlu0 %382
      %386 = vset.pattern.permute.xlu0 0
      %387 = vperm.xlu0 %386, %v284
      %v388 = vpop.permute.xlu0 %387
      %391 = vset.pattern.permute.xlu0 0
      %392 = vperm.xlu0 %391, %v285
      %v393 = vpop.permute.xlu0 %392
      %396 = vset.pattern.permute.xlu0 0
      %397 = vperm.xlu0 %396, %v286
      %v398 = vpop.permute.xlu0 %397
      %401 = vset.pattern.permute.xlu0 0
      %402 = vperm.xlu0 %401, %v287
      %v403 = vpop.permute.xlu0 %402
      %406 = vset.pattern.permute.xlu0 0
      %407 = vperm.xlu0 %406, %v288
      %v408 = vpop.permute.xlu0 %407
      %411 = vset.pattern.permute.xlu0 0
      %412 = vperm.xlu0 %411, %v289
      %v413 = vpop.permute.xlu0 %412
      %416 = vset.pattern.permute.xlu0 0
      %417 = vperm.xlu0 %416, %v290
      %v418 = vpop.permute.xlu0 %417
      %421 = vset.pattern.permute.xlu0 0
      %422 = vperm.xlu0 %421, %v291
      %v423 = vpop.permute.xlu0 %422
      %426 = vset.pattern.permute.xlu0 0
      %427 = vperm.xlu0 %426, %v292
      %v428 = vpop.permute.xlu0 %427
      %431 = vset.pattern.permute.xlu0 0
      %432 = vperm.xlu0 %431, %v293
      %v433 = vpop.permute.xlu0 %432
      %436 = vset.pattern.permute.xlu0 0
      %437 = vperm.xlu0 %436, %v294
      %v438 = vpop.permute.xlu0 %437
      %441 = vset.pattern.permute.xlu0 0
      %442 = vperm.xlu0 %441, %v295
      %v443 = vpop.permute.xlu0 %442
      %446 = vset.pattern.permute.xlu0 0
      %447 = vperm.xlu0 %446, %v296
      %v448 = vpop.permute.xlu0 %447
      %451 = vset.pattern.permute.xlu0 0
      %452 = vperm.xlu0 %451, %v297
      %v453 = vpop.permute.xlu0 %452
      %456 = vset.pattern.permute.xlu0 0
      %457 = vperm.xlu0 %456, %v298
      %v458 = vpop.permute.xlu0 %457
      %461 = vset.pattern.permute.xlu0 0
      %462 = vperm.xlu0 %461, %v299
      %v463 = vpop.permute.xlu0 %462
      %466 = vset.pattern.permute.xlu0 0
      %467 = vperm.xlu0 %466, %v300
      %v468 = vpop.permute.xlu0 %467
      %v470 = vlaneseq
      %v471 = vshrl.u32 %v470, 7
      %v472 = vsub.s32 0, %v471
      %v473 = vrot.slane %v309, %v472
      %v474 = vmul.f32 %v313, %v473
      %v475 = vmul.f32 %v318, %v473
      %v476 = vmul.f32 %v323, %v473
      %v477 = vmul.f32 %v328, %v473
      %v478 = vmul.f32 %v333, %v473
      %v479 = vmul.f32 %v338, %v473
      %v480 = vmul.f32 %v343, %v473
      %v481 = vmul.f32 %v348, %v473
      %v482 = vmul.f32 %v353, %v473
      %v483 = vmul.f32 %v358, %v473
      %v484 = vmul.f32 %v363, %v473
      %v485 = vmul.f32 %v368, %v473
      %v486 = vmul.f32 %v373, %v473
      %v487 = vmul.f32 %v378, %v473
      %v488 = vmul.f32 %v383, %v473
      %v489 = vmul.f32 %v388, %v473
      %v490 = vmul.f32 %v393, %v473
      %v491 = vmul.f32 %v398, %v473
      %v492 = vmul.f32 %v403, %v473
      %v493 = vmul.f32 %v408, %v473
      %v494 = vmul.f32 %v413, %v473
      %v495 = vmul.f32 %v418, %v473
      %v496 = vmul.f32 %v423, %v473
      %v497 = vmul.f32 %v428, %v473
      %v498 = vmul.f32 %v433, %v473
      %v499 = vmul.f32 %v438, %v473
      %v500 = vmul.f32 %v443, %v473
      %v501 = vmul.f32 %v448, %v473
      %v502 = vmul.f32 %v453, %v473
      %v503 = vmul.f32 %v458, %v473
      %v504 = vmul.f32 %v463, %v473
      %v505 = vmul.f32 %v468, %v473
      %v506 = vadd.f32 %v308, %v474
      %v507 = vadd.f32 %v308, %v475
      %v508 = vadd.f32 %v308, %v476
      %v509 = vadd.f32 %v308, %v477
      %v510 = vadd.f32 %v308, %v478
      %v511 = vadd.f32 %v308, %v479
      %v512 = vadd.f32 %v308, %v480
      %v513 = vadd.f32 %v308, %v481
      %v514 = vadd.f32 %v308, %v482
      %v515 = vadd.f32 %v308, %v483
      %v516 = vadd.f32 %v308, %v484
      %v517 = vadd.f32 %v308, %v485
      %v518 = vadd.f32 %v308, %v486
      %v519 = vadd.f32 %v308, %v487
      %v520 = vadd.f32 %v308, %v488
      %v521 = vadd.f32 %v308, %v489
      %v522 = vadd.f32 %v308, %v490
      %v523 = vadd.f32 %v308, %v491
      %v524 = vadd.f32 %v308, %v492
      %v525 = vadd.f32 %v308, %v493
      %v526 = vadd.f32 %v308, %v494
      %v527 = vadd.f32 %v308, %v495
      %v528 = vadd.f32 %v308, %v496
      %v529 = vadd.f32 %v308, %v497
      %v530 = vadd.f32 %v308, %v498
      %v531 = vadd.f32 %v308, %v499
      %v532 = vadd.f32 %v308, %v500
      %v533 = vadd.f32 %v308, %v501
      %v534 = vadd.f32 %v308, %v502
      %v535 = vadd.f32 %v308, %v503
      %v536 = vadd.f32 %v308, %v504
      %v537 = vadd.f32 %v308, %v505
      %v538 = vld [vmem:[%s1 + $0x1] sm:$0x1]
      %539 = vset.pattern.permute.xlu0 1
      %540 = vperm.xlu0 %539, %v269
      %v541 = vpop.permute.xlu0 %540
      %543 = vset.pattern.permute.xlu0 1
      %544 = vperm.xlu0 %543, %v270
      %v545 = vpop.permute.xlu0 %544
      %547 = vset.pattern.permute.xlu0 1
      %548 = vperm.xlu0 %547, %v271
      %v549 = vpop.permute.xlu0 %548
      %551 = vset.pattern.permute.xlu0 1
      %552 = vperm.xlu0 %551, %v272
      %v553 = vpop.permute.xlu0 %552
      %555 = vset.pattern.permute.xlu0 1
      %556 = vperm.xlu0 %555, %v273
      %v557 = vpop.permute.xlu0 %556
      %559 = vset.pattern.permute.xlu0 1
      %560 = vperm.xlu0 %559, %v274
      %v561 = vpop.permute.xlu0 %560
      %563 = vset.pattern.permute.xlu0 1
      %564 = vperm.xlu0 %563, %v275
      %v565 = vpop.permute.xlu0 %564
      %567 = vset.pattern.permute.xlu0 1
      %568 = vperm.xlu0 %567, %v276
      %v569 = vpop.permute.xlu0 %568
      %571 = vset.pattern.permute.xlu0 1
      %572 = vperm.xlu0 %571, %v277
      %v573 = vpop.permute.xlu0 %572
      %575 = vset.pattern.permute.xlu0 1
      %576 = vperm.xlu0 %575, %v278
      %v577 = vpop.permute.xlu0 %576
      %579 = vset.pattern.permute.xlu0 1
      %580 = vperm.xlu0 %579, %v279
      %v581 = vpop.permute.xlu0 %580
      %583 = vset.pattern.permute.xlu0 1
      %584 = vperm.xlu0 %583, %v280
      %v585 = vpop.permute.xlu0 %584
      %587 = vset.pattern.permute.xlu0 1
      %588 = vperm.xlu0 %587, %v281
      %v589 = vpop.permute.xlu0 %588
      %591 = vset.pattern.permute.xlu0 1
      %592 = vperm.xlu0 %591, %v282
      %v593 = vpop.permute.xlu0 %592
      %595 = vset.pattern.permute.xlu0 1
      %596 = vperm.xlu0 %595, %v283
      %v597 = vpop.permute.xlu0 %596
      %599 = vset.pattern.permute.xlu0 1
      %600 = vperm.xlu0 %599, %v284
      %v601 = vpop.permute.xlu0 %600
      %603 = vset.pattern.permute.xlu0 1
      %604 = vperm.xlu0 %603, %v285
      %v605 = vpop.permute.xlu0 %604
      %607 = vset.pattern.permute.xlu0 1
      %608 = vperm.xlu0 %607, %v286
      %v609 = vpop.permute.xlu0 %608
      %611 = vset.pattern.permute.xlu0 1
      %612 = vperm.xlu0 %611, %v287
      %v613 = vpop.permute.xlu0 %612
      %615 = vset.pattern.permute.xlu0 1
      %616 = vperm.xlu0 %615, %v288
      %v617 = vpop.permute.xlu0 %616
      %619 = vset.pattern.permute.xlu0 1
      %620 = vperm.xlu0 %619, %v289
      %v621 = vpop.permute.xlu0 %620
      %623 = vset.pattern.permute.xlu0 1
      %624 = vperm.xlu0 %623, %v290
      %v625 = vpop.permute.xlu0 %624
      %627 = vset.pattern.permute.xlu0 1
      %628 = vperm.xlu0 %627, %v291
      %v629 = vpop.permute.xlu0 %628
      %631 = vset.pattern.permute.xlu0 1
      %632 = vperm.xlu0 %631, %v292
      %v633 = vpop.permute.xlu0 %632
      %635 = vset.pattern.permute.xlu0 1
      %636 = vperm.xlu0 %635, %v293
      %v637 = vpop.permute.xlu0 %636
      %639 = vset.pattern.permute.xlu0 1
      %640 = vperm.xlu0 %639, %v294
      %v641 = vpop.permute.xlu0 %640
      %643 = vset.pattern.permute.xlu0 1
      %644 = vperm.xlu0 %643, %v295
      %v645 = vpop.permute.xlu0 %644
      %647 = vset.pattern.permute.xlu0 1
      %648 = vperm.xlu0 %647, %v296
      %v649 = vpop.permute.xlu0 %648
      %651 = vset.pattern.permute.xlu0 1
      %652 = vperm.xlu0 %651, %v297
      %v653 = vpop.permute.xlu0 %652
      %655 = vset.pattern.permute.xlu0 1
      %656 = vperm.xlu0 %655, %v298
      %v657 = vpop.permute.xlu0 %656
      %659 = vset.pattern.permute.xlu0 1
      %660 = vperm.xlu0 %659, %v299
      %v661 = vpop.permute.xlu0 %660
      %663 = vset.pattern.permute.xlu0 1
      %664 = vperm.xlu0 %663, %v300
      %v665 = vpop.permute.xlu0 %664
      %v667 = vlaneseq
      %v668 = vshrl.u32 %v667, 7
      %v669 = vsub.s32 0, %v668
      %v670 = vrot.slane %v538, %v669
      %v671 = vmul.f32 %v541, %v670
      %v672 = vmul.f32 %v545, %v670
      %v673 = vmul.f32 %v549, %v670
      %v674 = vmul.f32 %v553, %v670
      %v675 = vmul.f32 %v557, %v670
      %v676 = vmul.f32 %v561, %v670
      %v677 = vmul.f32 %v565, %v670
      %v678 = vmul.f32 %v569, %v670
      %v679 = vmul.f32 %v573, %v670
      %v680 = vmul.f32 %v577, %v670
      %v681 = vmul.f32 %v581, %v670
      %v682 = vmul.f32 %v585, %v670
      %v683 = vmul.f32 %v589, %v670
      %v684 = vmul.f32 %v593, %v670
      %v685 = vmul.f32 %v597, %v670
      %v686 = vmul.f32 %v601, %v670
      %v687 = vmul.f32 %v605, %v670
      %v688 = vmul.f32 %v609, %v670
      %v689 = vmul.f32 %v613, %v670
      %v690 = vmul.f32 %v617, %v670
      %v691 = vmul.f32 %v621, %v670
      %v692 = vmul.f32 %v625, %v670
      %v693 = vmul.f32 %v629, %v670
      %v694 = vmul.f32 %v633, %v670
      %v695 = vmul.f32 %v637, %v670
      %v696 = vmul.f32 %v641, %v670
      %v697 = vmul.f32 %v645, %v670
      %v698 = vmul.f32 %v649, %v670
      %v699 = vmul.f32 %v653, %v670
      %v700 = vmul.f32 %v657, %v670
      %v701 = vmul.f32 %v661, %v670
      %v702 = vmul.f32 %v665, %v670
      %v703 = vadd.f32 %v506, %v671
      %v704 = vadd.f32 %v507, %v672
      %v705 = vadd.f32 %v508, %v673
      %v706 = vadd.f32 %v509, %v674
      %v707 = vadd.f32 %v510, %v675
      %v708 = vadd.f32 %v511, %v676
      %v709 = vadd.f32 %v512, %v677
      %v710 = vadd.f32 %v513, %v678
      %v711 = vadd.f32 %v514, %v679
      %v712 = vadd.f32 %v515, %v680
      %v713 = vadd.f32 %v516, %v681
      %v714 = vadd.f32 %v517, %v682
      %v715 = vadd.f32 %v518, %v683
      %v716 = vadd.f32 %v519, %v684
      %v717 = vadd.f32 %v520, %v685
      %v718 = vadd.f32 %v521, %v686
      %v719 = vadd.f32 %v522, %v687
      %v720 = vadd.f32 %v523, %v688
      %v721 = vadd.f32 %v524, %v689
      %v722 = vadd.f32 %v525, %v690
      %v723 = vadd.f32 %v526, %v691
      %v724 = vadd.f32 %v527, %v692
      %v725 = vadd.f32 %v528, %v693
      %v726 = vadd.f32 %v529, %v694
      %v727 = vadd.f32 %v530, %v695
      %v728 = vadd.f32 %v531, %v696
      %v729 = vadd.f32 %v532, %v697
      %v730 = vadd.f32 %v533, %v698
      %v731 = vadd.f32 %v534, %v699
      %v732 = vadd.f32 %v535, %v700
      %v733 = vadd.f32 %v536, %v701
      %v734 = vadd.f32 %v537, %v702
      %v735 = vld [vmem:[%s1 + $0x2] sm:$0x1]
      %736 = vset.pattern.permute.xlu0 2
      %737 = vperm.xlu0 %736, %v269
      %v738 = vpop.permute.xlu0 %737
      %740 = vset.pattern.permute.xlu0 2
      %741 = vperm.xlu0 %740, %v270
      %v742 = vpop.permute.xlu0 %741
      %744 = vset.pattern.permute.xlu0 2
      %745 = vperm.xlu0 %744, %v271
      %v746 = vpop.permute.xlu0 %745
      %748 = vset.pattern.permute.xlu0 2
      %749 = vperm.xlu0 %748, %v272
      %v750 = vpop.permute.xlu0 %749
      %752 = vset.pattern.permute.xlu0 2
      %753 = vperm.xlu0 %752, %v273
      %v754 = vpop.permute.xlu0 %753
      %756 = vset.pattern.permute.xlu0 2
      %757 = vperm.xlu0 %756, %v274
      %v758 = vpop.permute.xlu0 %757
      %760 = vset.pattern.permute.xlu0 2
      %761 = vperm.xlu0 %760, %v275
      %v762 = vpop.permute.xlu0 %761
      %764 = vset.pattern.permute.xlu0 2
      %765 = vperm.xlu0 %764, %v276
      %v766 = vpop.permute.xlu0 %765
      %768 = vset.pattern.permute.xlu0 2
      %769 = vperm.xlu0 %768, %v277
      %v770 = vpop.permute.xlu0 %769
      %772 = vset.pattern.permute.xlu0 2
      %773 = vperm.xlu0 %772, %v278
      %v774 = vpop.permute.xlu0 %773
      %776 = vset.pattern.permute.xlu0 2
      %777 = vperm.xlu0 %776, %v279
      %v778 = vpop.permute.xlu0 %777
      %780 = vset.pattern.permute.xlu0 2
      %781 = vperm.xlu0 %780, %v280
      %v782 = vpop.permute.xlu0 %781
      %784 = vset.pattern.permute.xlu0 2
      %785 = vperm.xlu0 %784, %v281
      %v786 = vpop.permute.xlu0 %785
      %788 = vset.pattern.permute.xlu0 2
      %789 = vperm.xlu0 %788, %v282
      %v790 = vpop.permute.xlu0 %789
      %792 = vset.pattern.permute.xlu0 2
      %793 = vperm.xlu0 %792, %v283
      %v794 = vpop.permute.xlu0 %793
      %796 = vset.pattern.permute.xlu0 2
      %797 = vperm.xlu0 %796, %v284
      %v798 = vpop.permute.xlu0 %797
      %800 = vset.pattern.permute.xlu0 2
      %801 = vperm.xlu0 %800, %v285
      %v802 = vpop.permute.xlu0 %801
      %804 = vset.pattern.permute.xlu0 2
      %805 = vperm.xlu0 %804, %v286
      %v806 = vpop.permute.xlu0 %805
      %808 = vset.pattern.permute.xlu0 2
      %809 = vperm.xlu0 %808, %v287
      %v810 = vpop.permute.xlu0 %809
      %812 = vset.pattern.permute.xlu0 2
      %813 = vperm.xlu0 %812, %v288
      %v814 = vpop.permute.xlu0 %813
      %816 = vset.pattern.permute.xlu0 2
      %817 = vperm.xlu0 %816, %v289
      %v818 = vpop.permute.xlu0 %817
      %820 = vset.pattern.permute.xlu0 2
      %821 = vperm.xlu0 %820, %v290
      %v822 = vpop.permute.xlu0 %821
      %824 = vset.pattern.permute.xlu0 2
      %825 = vperm.xlu0 %824, %v291
      %v826 = vpop.permute.xlu0 %825
      %828 = vset.pattern.permute.xlu0 2
      %829 = vperm.xlu0 %828, %v292
      %v830 = vpop.permute.xlu0 %829
      %832 = vset.pattern.permute.xlu0 2
      %833 = vperm.xlu0 %832, %v293
      %v834 = vpop.permute.xlu0 %833
      %836 = vset.pattern.permute.xlu0 2
      %837 = vperm.xlu0 %836, %v294
      %v838 = vpop.permute.xlu0 %837
      %840 = vset.pattern.permute.xlu0 2
      %841 = vperm.xlu0 %840, %v295
      %v842 = vpop.permute.xlu0 %841
      %844 = vset.pattern.permute.xlu0 2
      %845 = vperm.xlu0 %844, %v296
      %v846 = vpop.permute.xlu0 %845
      %848 = vset.pattern.permute.xlu0 2
      %849 = vperm.xlu0 %848, %v297
      %v850 = vpop.permute.xlu0 %849
      %852 = vset.pattern.permute.xlu0 2
      %853 = vperm.xlu0 %852, %v298
      %v854 = vpop.permute.xlu0 %853
      %856 = vset.pattern.permute.xlu0 2
      %857 = vperm.xlu0 %856, %v299
      %v858 = vpop.permute.xlu0 %857
      %860 = vset.pattern.permute.xlu0 2
      %861 = vperm.xlu0 %860, %v300
      %v862 = vpop.permute.xlu0 %861
      %v864 = vlaneseq
      %v865 = vshrl.u32 %v864, 7
      %v866 = vsub.s32 0, %v865
      %v867 = vrot.slane %v735, %v866
      %v868 = vmul.f32 %v738, %v867
      %v869 = vmul.f32 %v742, %v867
      %v870 = vmul.f32 %v746, %v867
      %v871 = vmul.f32 %v750, %v867
      %v872 = vmul.f32 %v754, %v867
      %v873 = vmul.f32 %v758, %v867
      %v874 = vmul.f32 %v762, %v867
      %v875 = vmul.f32 %v766, %v867
      %v876 = vmul.f32 %v770, %v867
      %v877 = vmul.f32 %v774, %v867
      %v878 = vmul.f32 %v778, %v867
      %v879 = vmul.f32 %v782, %v867
      %v880 = vmul.f32 %v786, %v867
      %v881 = vmul.f32 %v790, %v867
      %v882 = vmul.f32 %v794, %v867
      %v883 = vmul.f32 %v798, %v867
      %v884 = vmul.f32 %v802, %v867
      %v885 = vmul.f32 %v806, %v867
      %v886 = vmul.f32 %v810, %v867
      %v887 = vmul.f32 %v814, %v867
      %v888 = vmul.f32 %v818, %v867
      %v889 = vmul.f32 %v822, %v867
      %v890 = vmul.f32 %v826, %v867
      %v891 = vmul.f32 %v830, %v867
      %v892 = vmul.f32 %v834, %v867
      %v893 = vmul.f32 %v838, %v867
      %v894 = vmul.f32 %v842, %v867
      %v895 = vmul.f32 %v846, %v867
      %v896 = vmul.f32 %v850, %v867
      %v897 = vmul.f32 %v854, %v867
      %v898 = vmul.f32 %v858, %v867
      %v899 = vmul.f32 %v862, %v867
      %v900 = vadd.f32 %v703, %v868
      %v901 = vadd.f32 %v704, %v869
      %v902 = vadd.f32 %v705, %v870
      %v903 = vadd.f32 %v706, %v871
      %v904 = vadd.f32 %v707, %v872
      %v905 = vadd.f32 %v708, %v873
      %v906 = vadd.f32 %v709, %v874
      %v907 = vadd.f32 %v710, %v875
      %v908 = vadd.f32 %v711, %v876
      %v909 = vadd.f32 %v712, %v877
      %v910 = vadd.f32 %v713, %v878
      %v911 = vadd.f32 %v714, %v879
      %v912 = vadd.f32 %v715, %v880
      %v913 = vadd.f32 %v716, %v881
      %v914 = vadd.f32 %v717, %v882
      %v915 = vadd.f32 %v718, %v883
      %v916 = vadd.f32 %v719, %v884
      %v917 = vadd.f32 %v720, %v885
      %v918 = vadd.f32 %v721, %v886
      %v919 = vadd.f32 %v722, %v887
      %v920 = vadd.f32 %v723, %v888
      %v921 = vadd.f32 %v724, %v889
      %v922 = vadd.f32 %v725, %v890
      %v923 = vadd.f32 %v726, %v891
      %v924 = vadd.f32 %v727, %v892
      %v925 = vadd.f32 %v728, %v893
      %v926 = vadd.f32 %v729, %v894
      %v927 = vadd.f32 %v730, %v895
      %v928 = vadd.f32 %v731, %v896
      %v929 = vadd.f32 %v732, %v897
      %v930 = vadd.f32 %v733, %v898
      %v931 = vadd.f32 %v734, %v899
      %v932 = vld [vmem:[%s1 + $0x3] sm:$0x1]
      %933 = vset.pattern.permute.xlu0 3
      %934 = vperm.xlu0 %933, %v269
      %v935 = vpop.permute.xlu0 %934
      %937 = vset.pattern.permute.xlu0 3
      %938 = vperm.xlu0 %937, %v270
      %v939 = vpop.permute.xlu0 %938
      %941 = vset.pattern.permute.xlu0 3
      %942 = vperm.xlu0 %941, %v271
      %v943 = vpop.permute.xlu0 %942
      %945 = vset.pattern.permute.xlu0 3
      %946 = vperm.xlu0 %945, %v272
      %v947 = vpop.permute.xlu0 %946
      %949 = vset.pattern.permute.xlu0 3
      %950 = vperm.xlu0 %949, %v273
      %v951 = vpop.permute.xlu0 %950
      %953 = vset.pattern.permute.xlu0 3
      %954 = vperm.xlu0 %953, %v274
      %v955 = vpop.permute.xlu0 %954
      %957 = vset.pattern.permute.xlu0 3
      %958 = vperm.xlu0 %957, %v275
      %v959 = vpop.permute.xlu0 %958
      %961 = vset.pattern.permute.xlu0 3
      %962 = vperm.xlu0 %961, %v276
      %v963 = vpop.permute.xlu0 %962
      %965 = vset.pattern.permute.xlu0 3
      %966 = vperm.xlu0 %965, %v277
      %v967 = vpop.permute.xlu0 %966
      %969 = vset.pattern.permute.xlu0 3
      %970 = vperm.xlu0 %969, %v278
      %v971 = vpop.permute.xlu0 %970
      %973 = vset.pattern.permute.xlu0 3
      %974 = vperm.xlu0 %973, %v279
      %v975 = vpop.permute.xlu0 %974
      %977 = vset.pattern.permute.xlu0 3
      %978 = vperm.xlu0 %977, %v280
      %v979 = vpop.permute.xlu0 %978
      %981 = vset.pattern.permute.xlu0 3
      %982 = vperm.xlu0 %981, %v281
      %v983 = vpop.permute.xlu0 %982
      %985 = vset.pattern.permute.xlu0 3
      %986 = vperm.xlu0 %985, %v282
      %v987 = vpop.permute.xlu0 %986
      %989 = vset.pattern.permute.xlu0 3
      %990 = vperm.xlu0 %989, %v283
      %v991 = vpop.permute.xlu0 %990
      %993 = vset.pattern.permute.xlu0 3
      %994 = vperm.xlu0 %993, %v284
      %v995 = vpop.permute.xlu0 %994
      %997 = vset.pattern.permute.xlu0 3
      %998 = vperm.xlu0 %997, %v285
      %v999 = vpop.permute.xlu0 %998
      %1001 = vset.pattern.permute.xlu0 3
      %1002 = vperm.xlu0 %1001, %v286
      %v1003 = vpop.permute.xlu0 %1002
      %1005 = vset.pattern.permute.xlu0 3
      %1006 = vperm.xlu0 %1005, %v287
      %v1007 = vpop.permute.xlu0 %1006
      %1009 = vset.pattern.permute.xlu0 3
      %1010 = vperm.xlu0 %1009, %v288
      %v1011 = vpop.permute.xlu0 %1010
      %1013 = vset.pattern.permute.xlu0 3
      %1014 = vperm.xlu0 %1013, %v289
      %v1015 = vpop.permute.xlu0 %1014
      %1017 = vset.pattern.permute.xlu0 3
      %1018 = vperm.xlu0 %1017, %v290
      %v1019 = vpop.permute.xlu0 %1018
      %1021 = vset.pattern.permute.xlu0 3
      %1022 = vperm.xlu0 %1021, %v291
      %v1023 = vpop.permute.xlu0 %1022
      %1025 = vset.pattern.permute.xlu0 3
      %1026 = vperm.xlu0 %1025, %v292
      %v1027 = vpop.permute.xlu0 %1026
      %1029 = vset.pattern.permute.xlu0 3
      %1030 = vperm.xlu0 %1029, %v293
      %v1031 = vpop.permute.xlu0 %1030
      %1033 = vset.pattern.permute.xlu0 3
      %1034 = vperm.xlu0 %1033, %v294
      %v1035 = vpop.permute.xlu0 %1034
      %1037 = vset.pattern.permute.xlu0 3
      %1038 = vperm.xlu0 %1037, %v295
      %v1039 = vpop.permute.xlu0 %1038
      %1041 = vset.pattern.permute.xlu0 3
      %1042 = vperm.xlu0 %1041, %v296
      %v1043 = vpop.permute.xlu0 %1042
      %1045 = vset.pattern.permute.xlu0 3
      %1046 = vperm.xlu0 %1045, %v297
      %v1047 = vpop.permute.xlu0 %1046
      %1049 = vset.pattern.permute.xlu0 3
      %1050 = vperm.xlu0 %1049, %v298
      %v1051 = vpop.permute.xlu0 %1050
      %1053 = vset.pattern.permute.xlu0 3
      %1054 = vperm.xlu0 %1053, %v299
      %v1055 = vpop.permute.xlu0 %1054
      %1057 = vset.pattern.permute.xlu0 3
      %1058 = vperm.xlu0 %1057, %v300
      %v1059 = vpop.permute.xlu0 %1058
      %v1061 = vlaneseq
      %v1062 = vshrl.u32 %v1061, 7
      %v1063 = vsub.s32 0, %v1062
      %v1064 = vrot.slane %v932, %v1063
      %v1065 = vmul.f32 %v935, %v1064
      %v1066 = vmul.f32 %v939, %v1064
      %v1067 = vmul.f32 %v943, %v1064
      %v1068 = vmul.f32 %v947, %v1064
      %v1069 = vmul.f32 %v951, %v1064
      %v1070 = vmul.f32 %v955, %v1064
      %v1071 = vmul.f32 %v959, %v1064
      %v1072 = vmul.f32 %v963, %v1064
      %v1073 = vmul.f32 %v967, %v1064
      %v1074 = vmul.f32 %v971, %v1064
      %v1075 = vmul.f32 %v975, %v1064
      %v1076 = vmul.f32 %v979, %v1064
      %v1077 = vmul.f32 %v983, %v1064
      %v1078 = vmul.f32 %v987, %v1064
      %v1079 = vmul.f32 %v991, %v1064
      %v1080 = vmul.f32 %v995, %v1064
      %v1081 = vmul.f32 %v999, %v1064
      %v1082 = vmul.f32 %v1003, %v1064
      %v1083 = vmul.f32 %v1007, %v1064
      %v1084 = vmul.f32 %v1011, %v1064
      %v1085 = vmul.f32 %v1015, %v1064
      %v1086 = vmul.f32 %v1019, %v1064
      %v1087 = vmul.f32 %v1023, %v1064
      %v1088 = vmul.f32 %v1027, %v1064
      %v1089 = vmul.f32 %v1031, %v1064
      %v1090 = vmul.f32 %v1035, %v1064
      %v1091 = vmul.f32 %v1039, %v1064
      %v1092 = vmul.f32 %v1043, %v1064
      %v1093 = vmul.f32 %v1047, %v1064
      %v1094 = vmul.f32 %v1051, %v1064
      %v1095 = vmul.f32 %v1055, %v1064
      %v1096 = vmul.f32 %v1059, %v1064
      %v1097 = vadd.f32 %v900, %v1065
      %v1098 = vadd.f32 %v901, %v1066
      %v1099 = vadd.f32 %v902, %v1067
      %v1100 = vadd.f32 %v903, %v1068
      %v1101 = vadd.f32 %v904, %v1069
      %v1102 = vadd.f32 %v905, %v1070
      %v1103 = vadd.f32 %v906, %v1071
      %v1104 = vadd.f32 %v907, %v1072
      %v1105 = vadd.f32 %v908, %v1073
      %v1106 = vadd.f32 %v909, %v1074
      %v1107 = vadd.f32 %v910, %v1075
      %v1108 = vadd.f32 %v911, %v1076
      %v1109 = vadd.f32 %v912, %v1077
      %v1110 = vadd.f32 %v913, %v1078
      %v1111 = vadd.f32 %v914, %v1079
      %v1112 = vadd.f32 %v915, %v1080
      %v1113 = vadd.f32 %v916, %v1081
      %v1114 = vadd.f32 %v917, %v1082
      %v1115 = vadd.f32 %v918, %v1083
      %v1116 = vadd.f32 %v919, %v1084
      %v1117 = vadd.f32 %v920, %v1085
      %v1118 = vadd.f32 %v921, %v1086
      %v1119 = vadd.f32 %v922, %v1087
      %v1120 = vadd.f32 %v923, %v1088
      %v1121 = vadd.f32 %v924, %v1089
      %v1122 = vadd.f32 %v925, %v1090
      %v1123 = vadd.f32 %v926, %v1091
      %v1124 = vadd.f32 %v927, %v1092
      %v1125 = vadd.f32 %v928, %v1093
      %v1126 = vadd.f32 %v929, %v1094
      %v1127 = vadd.f32 %v930, %v1095
      %v1128 = vadd.f32 %v931, %v1096
      %vm1129 = vcmask 31744
      %1130 = vst.msk [vmem:[#allocation2] sm:$0xff] %vm1129, 0.0
      %1131 = vst.msk [vmem:[#allocation2 + $0x8] sm:$0xff] %vm1129, 0.0
      %vm1132 = vcmask 25600
      %1133 = vst.msk [vmem:[#allocation2 + $0x10] sm:$0x3] %vm1132, 0.0
      %1134 = vst.msk [vmem:[#allocation2 + $0x18] sm:$0xff] %vm1129, 0.0
      %1135 = vst.msk [vmem:[#allocation2 + $0x20] sm:$0xff] %vm1129, 0.0
      %1136 = vst.msk [vmem:[#allocation2 + $0x28] sm:$0x3] %vm1132, 0.0
      %1137 = vst.msk [vmem:[#allocation2 + $0x30] sm:$0xff] %vm1129, 0.0
      %1138 = vst.msk [vmem:[#allocation2 + $0x38] sm:$0xff] %vm1129, 0.0
      %1139 = vst.msk [vmem:[#allocation2 + $0x40] sm:$0x3] %vm1132, 0.0
      %1140 = vst.msk [vmem:[#allocation2 + $0x48] sm:$0xff] %vm1129, 0.0
      %1141 = vst.msk [vmem:[#allocation2 + $0x50] sm:$0xff] %vm1129, 0.0
      %1142 = vst.msk [vmem:[#allocation2 + $0x58] sm:$0x3] %vm1132, 0.0
      %1143 = vst.msk [vmem:[#allocation2 + $0x60] sm:$0xff] %vm1129, 0.0
      %1144 = vst.msk [vmem:[#allocation2 + $0x68] sm:$0xff] %vm1129, 0.0
      %1145 = vst.msk [vmem:[#allocation2 + $0x70] sm:$0x3] %vm1132, 0.0
      %1146 = vst.msk [vmem:[#allocation2 + $0x78] sm:$0xff] %vm1129, 0.0
      %1147 = vst.msk [vmem:[#allocation2 + $0x80] sm:$0xff] %vm1129, 0.0
      %1148 = vst.msk [vmem:[#allocation2 + $0x88] sm:$0x3] %vm1132, 0.0
      %1149 = vst.msk [vmem:[#allocation2 + $0x90] sm:$0xff] %vm1129, 0.0
      %1150 = vst.msk [vmem:[#allocation2 + $0x98] sm:$0xff] %vm1129, 0.0
      %1151 = vst.msk [vmem:[#allocation2 + $0xa0] sm:$0x3] %vm1132, 0.0
      %1152 = vst.msk [vmem:[#allocation2 + $0xa8] sm:$0xff] %vm1129, 0.0
      %1153 = vst.msk [vmem:[#allocation2 + $0xb0] sm:$0xff] %vm1129, 0.0
      %1154 = vst.msk [vmem:[#allocation2 + $0xb8] sm:$0x3] %vm1132, 0.0
      %1155 = vst.msk [vmem:[#allocation2 + $0xc0] sm:$0xff] %vm1129, 0.0
      %1156 = vst.msk [vmem:[#allocation2 + $0xc8] sm:$0xff] %vm1129, 0.0
      %1157 = vst.msk [vmem:[#allocation2 + $0xd0] sm:$0x3] %vm1132, 0.0
      %1158 = vst.msk [vmem:[#allocation2 + $0xd8] sm:$0xff] %vm1129, 0.0
      %1159 = vst.msk [vmem:[#allocation2 + $0xe0] sm:$0xff] %vm1129, 0.0
      %1160 = vst.msk [vmem:[#allocation2 + $0xe8] sm:$0x3] %vm1132, 0.0
      %1161 = vst.msk [vmem:[#allocation2 + $0xf0] sm:$0xff] %vm1129, 0.0
      %1162 = vst.msk [vmem:[#allocation2 + $0xf8] sm:$0xff] %vm1129, 0.0
      %1163 = vst.msk [vmem:[#allocation2 + $0x100] sm:$0x3] %vm1132, 0.0
      %1164 = vst.msk [vmem:[#allocation2 + $0x108] sm:$0xff] %vm1129, 0.0
      %1165 = vst.msk [vmem:[#allocation2 + $0x110] sm:$0xff] %vm1129, 0.0
      %1166 = vst.msk [vmem:[#allocation2 + $0x118] sm:$0x3] %vm1132, 0.0
      %1167 = vst.msk [vmem:[#allocation2 + $0x120] sm:$0xff] %vm1129, 0.0
      %1168 = vst.msk [vmem:[#allocation2 + $0x128] sm:$0xff] %vm1129, 0.0
      %1169 = vst.msk [vmem:[#allocation2 + $0x130] sm:$0x3] %vm1132, 0.0
      %1170 = vst.msk [vmem:[#allocation2 + $0x138] sm:$0xff] %vm1129, 0.0
      %1171 = vst.msk [vmem:[#allocation2 + $0x140] sm:$0xff] %vm1129, 0.0
      %1172 = vst.msk [vmem:[#allocation2 + $0x148] sm:$0x3] %vm1132, 0.0
      %1173 = vst.msk [vmem:[#allocation2 + $0x150] sm:$0xff] %vm1129, 0.0
      %1174 = vst.msk [vmem:[#allocation2 + $0x158] sm:$0xff] %vm1129, 0.0
      %1175 = vst.msk [vmem:[#allocation2 + $0x160] sm:$0x3] %vm1132, 0.0
      %1176 = vst.msk [vmem:[#allocation2 + $0x168] sm:$0xff] %vm1129, 0.0
      %1177 = vst.msk [vmem:[#allocation2 + $0x170] sm:$0xff] %vm1129, 0.0
      %1178 = vst.msk [vmem:[#allocation2 + $0x178] sm:$0x3] %vm1132, 0.0
      %1179 = vst.msk [vmem:[#allocation2 + $0x180] sm:$0xff] %vm1129, 0.0
      %1180 = vst.msk [vmem:[#allocation2 + $0x188] sm:$0xff] %vm1129, 0.0
      %1181 = vst.msk [vmem:[#allocation2 + $0x190] sm:$0x3] %vm1132, 0.0
      %1182 = vst.msk [vmem:[#allocation2 + $0x198] sm:$0xff] %vm1129, 0.0
      %1183 = vst.msk [vmem:[#allocation2 + $0x1a0] sm:$0xff] %vm1129, 0.0
      %1184 = vst.msk [vmem:[#allocation2 + $0x1a8] sm:$0x3] %vm1132, 0.0
      %s1185 = scalar_lea.vmem [#allocation2], 24
      %1186 = vst.msk [vmem:[%s1185 + $0x1] sm:$0xff] %vm1129, %v1097
      %1187 = vst.msk [vmem:[%s1185 + $0x9] sm:$0xff] %vm1129, %v1098
      %1188 = vst.msk [vmem:[%s1185 + $0x19] sm:$0xff] %vm1129, %v1099
      %1189 = vst.msk [vmem:[%s1185 + $0x21] sm:$0xff] %vm1129, %v1100
      %1190 = vst.msk [vmem:[%s1185 + $0x31] sm:$0xff] %vm1129, %v1101
      %1191 = vst.msk [vmem:[%s1185 + $0x39] sm:$0xff] %vm1129, %v1102
      %1192 = vst.msk [vmem:[%s1185 + $0x49] sm:$0xff] %vm1129, %v1103
      %1193 = vst.msk [vmem:[%s1185 + $0x51] sm:$0xff] %vm1129, %v1104
      %1194 = vst.msk [vmem:[%s1185 + $0x61] sm:$0xff] %vm1129, %v1105
      %1195 = vst.msk [vmem:[%s1185 + $0x69] sm:$0xff] %vm1129, %v1106
      %1196 = vst.msk [vmem:[%s1185 + $0x79] sm:$0xff] %vm1129, %v1107
      %1197 = vst.msk [vmem:[%s1185 + $0x81] sm:$0xff] %vm1129, %v1108
      %1198 = vst.msk [vmem:[%s1185 + $0x91] sm:$0xff] %vm1129, %v1109
      %1199 = vst.msk [vmem:[%s1185 + $0x99] sm:$0xff] %vm1129, %v1110
      %1200 = vst.msk [vmem:[%s1185 + $0xa9] sm:$0xff] %vm1129, %v1111
      %1201 = vst.msk [vmem:[%s1185 + $0xb1] sm:$0xff] %vm1129, %v1112
      %1202 = vst.msk [vmem:[%s1185 + $0xc1] sm:$0xff] %vm1129, %v1113
      %1203 = vst.msk [vmem:[%s1185 + $0xc9] sm:$0xff] %vm1129, %v1114
      %1204 = vst.msk [vmem:[%s1185 + $0xd9] sm:$0xff] %vm1129, %v1115
      %1205 = vst.msk [vmem:[%s1185 + $0xe1] sm:$0xff] %vm1129, %v1116
      %1206 = vst.msk [vmem:[%s1185 + $0xf1] sm:$0xff] %vm1129, %v1117
      %1207 = vst.msk [vmem:[%s1185 + $0xf9] sm:$0xff] %vm1129, %v1118
      %1208 = vst.msk [vmem:[%s1185 + $0x109] sm:$0xff] %vm1129, %v1119
      %1209 = vst.msk [vmem:[%s1185 + $0x111] sm:$0xff] %vm1129, %v1120
      %1210 = vst.msk [vmem:[%s1185 + $0x121] sm:$0xff] %vm1129, %v1121
      %1211 = vst.msk [vmem:[%s1185 + $0x129] sm:$0xff] %vm1129, %v1122
      %1212 = vst.msk [vmem:[%s1185 + $0x139] sm:$0xff] %vm1129, %v1123
      %1213 = vst.msk [vmem:[%s1185 + $0x141] sm:$0xff] %vm1129, %v1124
      %1214 = vst.msk [vmem:[%s1185 + $0x151] sm:$0xff] %vm1129, %v1125
      %1215 = vst.msk [vmem:[%s1185 + $0x159] sm:$0xff] %vm1129, %v1126
      %1216 = vst.msk [vmem:[%s1185 + $0x169] sm:$0xff] %vm1129, %v1127
      %1217 = vst.msk [vmem:[%s1185 + $0x171] sm:$0xff] %vm1129, %v1128
      %v1218 = vld [vmem:[#allocation2] ss:$2 sm:$0xff]
      %s1219 = scalar_lea.vmem [#allocation2], 48
      %v1220 = vld [vmem:[%s1219] ss:$2 sm:$0xff]
      %s1221 = scalar_lea.vmem [#allocation2], 96
      %v1222 = vld [vmem:[%s1221] ss:$2 sm:$0xff]
      %s1223 = scalar_lea.vmem [#allocation2], 144
      %v1224 = vld [vmem:[%s1223] ss:$2 sm:$0xff]
      %s1225 = scalar_lea.vmem [#allocation2], 192
      %v1226 = vld [vmem:[%s1225] ss:$2 sm:$0xff]
      %s1227 = scalar_lea.vmem [#allocation2], 240
      %v1228 = vld [vmem:[%s1227] ss:$2 sm:$0xff]
      %s1229 = scalar_lea.vmem [#allocation2], 288
      %v1230 = vld [vmem:[%s1229] ss:$2 sm:$0xff]
      %s1231 = scalar_lea.vmem [#allocation2], 336
      %v1232 = vld [vmem:[%s1231] ss:$2 sm:$0xff]
      %v1233 = vld [vmem:[%s3] sm:$0x1]
      %v1234 = vlaneseq
      %v1235 = vshrl.u32 %v1234, 7
      %v1236 = vsub.s32 0, %v1235
      %v1237 = vrot.slane %v1233, %v1236
      %v1238 = vmul.f32 %v1218, %v1237
      %v1239 = vmul.f32 %v1220, %v1237
      %v1240 = vmul.f32 %v1222, %v1237
      %v1241 = vmul.f32 %v1224, %v1237
      %v1242 = vmul.f32 %v1226, %v1237
      %v1243 = vmul.f32 %v1228, %v1237
      %v1244 = vmul.f32 %v1230, %v1237
      %v1245 = vmul.f32 %v1232, %v1237
      %v1246 = vadd.f32 %v1238, 0.0
      %v1247 = vadd.f32 %v1239, 0.0
      %v1248 = vadd.f32 %v1240, 0.0
      %v1249 = vadd.f32 %v1241, 0.0
      %v1250 = vadd.f32 %v1242, 0.0
      %v1251 = vadd.f32 %v1243, 0.0
      %v1252 = vadd.f32 %v1244, 0.0
      %v1253 = vadd.f32 %v1245, 0.0
      %s1254 = scalar_lea.vmem [#allocation2], 1
      %v1255 = vld [vmem:[%s1254] ss:$2 sm:$0xff]
      %s1256 = scalar_lea.vmem [#allocation2], 49
      %v1257 = vld [vmem:[%s1256] ss:$2 sm:$0xff]
      %s1258 = scalar_lea.vmem [#allocation2], 97
      %v1259 = vld [vmem:[%s1258] ss:$2 sm:$0xff]
      %s1260 = scalar_lea.vmem [#allocation2], 145
      %v1261 = vld [vmem:[%s1260] ss:$2 sm:$0xff]
      %s1262 = scalar_lea.vmem [#allocation2], 193
      %v1263 = vld [vmem:[%s1262] ss:$2 sm:$0xff]
      %s1264 = scalar_lea.vmem [#allocation2], 241
      %v1265 = vld [vmem:[%s1264] ss:$2 sm:$0xff]
      %s1266 = scalar_lea.vmem [#allocation2], 289
      %v1267 = vld [vmem:[%s1266] ss:$2 sm:$0xff]
      %s1268 = scalar_lea.vmem [#allocation2], 337
      %v1269 = vld [vmem:[%s1268] ss:$2 sm:$0xff]
      %v1270 = vld [vmem:[%s3 + $0x1] sm:$0x1]
      %v1271 = vlaneseq
      %v1272 = vshrl.u32 %v1271, 7
      %v1273 = vsub.s32 0, %v1272
      %v1274 = vrot.slane %v1270, %v1273
      %v1275 = vmul.f32 %v1255, %v1274
      %v1276 = vmul.f32 %v1257, %v1274
      %v1277 = vmul.f32 %v1259, %v1274
      %v1278 = vmul.f32 %v1261, %v1274
      %v1279 = vmul.f32 %v1263, %v1274
      %v1280 = vmul.f32 %v1265, %v1274
      %v1281 = vmul.f32 %v1267, %v1274
      %v1282 = vmul.f32 %v1269, %v1274
      %v1283 = vadd.f32 %v1246, %v1275
      %v1284 = vadd.f32 %v1247, %v1276
      %v1285 = vadd.f32 %v1248, %v1277
      %v1286 = vadd.f32 %v1249, %v1278
      %v1287 = vadd.f32 %v1250, %v1279
      %v1288 = vadd.f32 %v1251, %v1280
      %v1289 = vadd.f32 %v1252, %v1281
      %v1290 = vadd.f32 %v1253, %v1282
      %s1291 = scalar_lea.vmem [#allocation2], 2
      %v1292 = vld [vmem:[%s1291] ss:$2 sm:$0xff]
      %s1293 = scalar_lea.vmem [#allocation2], 50
      %v1294 = vld [vmem:[%s1293] ss:$2 sm:$0xff]
      %s1295 = scalar_lea.vmem [#allocation2], 98
      %v1296 = vld [vmem:[%s1295] ss:$2 sm:$0xff]
      %s1297 = scalar_lea.vmem [#allocation2], 146
      %v1298 = vld [vmem:[%s1297] ss:$2 sm:$0xff]
      %s1299 = scalar_lea.vmem [#allocation2], 194
      %v1300 = vld [vmem:[%s1299] ss:$2 sm:$0xff]
      %s1301 = scalar_lea.vmem [#allocation2], 242
      %v1302 = vld [vmem:[%s1301] ss:$2 sm:$0xff]
      %s1303 = scalar_lea.vmem [#allocation2], 290
      %v1304 = vld [vmem:[%s1303] ss:$2 sm:$0xff]
      %s1305 = scalar_lea.vmem [#allocation2], 338
      %v1306 = vld [vmem:[%s1305] ss:$2 sm:$0xff]
      %v1307 = vld [vmem:[%s3 + $0x2] sm:$0x1]
      %v1308 = vlaneseq
      %v1309 = vshrl.u32 %v1308, 7
      %v1310 = vsub.s32 0, %v1309
      %v1311 = vrot.slane %v1307, %v1310
      %v1312 = vmul.f32 %v1292, %v1311
      %v1313 = vmul.f32 %v1294, %v1311
      %v1314 = vmul.f32 %v1296, %v1311
      %v1315 = vmul.f32 %v1298, %v1311
      %v1316 = vmul.f32 %v1300, %v1311
      %v1317 = vmul.f32 %v1302, %v1311
      %v1318 = vmul.f32 %v1304, %v1311
      %v1319 = vmul.f32 %v1306, %v1311
      %v1320 = vadd.f32 %v1283, %v1312
      %v1321 = vadd.f32 %v1284, %v1313
      %v1322 = vadd.f32 %v1285, %v1314
      %v1323 = vadd.f32 %v1286, %v1315
      %v1324 = vadd.f32 %v1287, %v1316
      %v1325 = vadd.f32 %v1288, %v1317
      %v1326 = vadd.f32 %v1289, %v1318
      %v1327 = vadd.f32 %v1290, %v1319
      %v1328 = vld [vmem:[%s1185] ss:$2 sm:$0xff]
      %s1329 = scalar_lea.vmem %s1185, 48 [#allocation2]
      %v1330 = vld [vmem:[%s1329] ss:$2 sm:$0xff]
      %s1331 = scalar_lea.vmem %s1185, 96 [#allocation2]
      %v1332 = vld [vmem:[%s1331] ss:$2 sm:$0xff]
      %s1333 = scalar_lea.vmem %s1185, 144 [#allocation2]
      %v1334 = vld [vmem:[%s1333] ss:$2 sm:$0xff]
      %s1335 = scalar_lea.vmem %s1185, 192 [#allocation2]
      %v1336 = vld [vmem:[%s1335] ss:$2 sm:$0xff]
      %s1337 = scalar_lea.vmem %s1185, 240 [#allocation2]
      %v1338 = vld [vmem:[%s1337] ss:$2 sm:$0xff]
      %s1339 = scalar_lea.vmem %s1185, 288 [#allocation2]
      %v1340 = vld [vmem:[%s1339] ss:$2 sm:$0xff]
      %s1341 = scalar_lea.vmem %s1185, 336 [#allocation2]
      %v1342 = vld [vmem:[%s1341] ss:$2 sm:$0xff]
      %v1343 = vld [vmem:[%s3 + $0x3] sm:$0x1]
      %v1344 = vlaneseq
      %v1345 = vshrl.u32 %v1344, 7
      %v1346 = vsub.s32 0, %v1345
      %v1347 = vrot.slane %v1343, %v1346
      %v1348 = vmul.f32 %v1328, %v1347
      %v1349 = vmul.f32 %v1330, %v1347
      %v1350 = vmul.f32 %v1332, %v1347
      %v1351 = vmul.f32 %v1334, %v1347
      %v1352 = vmul.f32 %v1336, %v1347
      %v1353 = vmul.f32 %v1338, %v1347
      %v1354 = vmul.f32 %v1340, %v1347
      %v1355 = vmul.f32 %v1342, %v1347
      %v1356 = vadd.f32 %v1320, %v1348
      %v1357 = vadd.f32 %v1321, %v1349
      %v1358 = vadd.f32 %v1322, %v1350
      %v1359 = vadd.f32 %v1323, %v1351
      %v1360 = vadd.f32 %v1324, %v1352
      %v1361 = vadd.f32 %v1325, %v1353
      %v1362 = vadd.f32 %v1326, %v1354
      %v1363 = vadd.f32 %v1327, %v1355
      %s1364 = scalar_lea.vmem %s1185, 1 [#allocation2]
      %v1365 = vld [vmem:[%s1364] ss:$2 sm:$0xff]
      %s1366 = scalar_lea.vmem %s1185, 49 [#allocation2]
      %v1367 = vld [vmem:[%s1366] ss:$2 sm:$0xff]
      %s1368 = scalar_lea.vmem %s1185, 97 [#allocation2]
      %v1369 = vld [vmem:[%s1368] ss:$2 sm:$0xff]
      %s1370 = scalar_lea.vmem %s1185, 145 [#allocation2]
      %v1371 = vld [vmem:[%s1370] ss:$2 sm:$0xff]
      %s1372 = scalar_lea.vmem %s1185, 193 [#allocation2]
      %v1373 = vld [vmem:[%s1372] ss:$2 sm:$0xff]
      %s1374 = scalar_lea.vmem %s1185, 241 [#allocation2]
      %v1375 = vld [vmem:[%s1374] ss:$2 sm:$0xff]
      %s1376 = scalar_lea.vmem %s1185, 289 [#allocation2]
      %v1377 = vld [vmem:[%s1376] ss:$2 sm:$0xff]
      %s1378 = scalar_lea.vmem %s1185, 337 [#allocation2]
      %v1379 = vld [vmem:[%s1378] ss:$2 sm:$0xff]
      %v1380 = vld [vmem:[%s3 + $0x4] sm:$0x1]
      %v1381 = vlaneseq
      %v1382 = vshrl.u32 %v1381, 7
      %v1383 = vsub.s32 0, %v1382
      %v1384 = vrot.slane %v1380, %v1383
      %v1385 = vmul.f32 %v1365, %v1384
      %v1386 = vmul.f32 %v1367, %v1384
      %v1387 = vmul.f32 %v1369, %v1384
      %v1388 = vmul.f32 %v1371, %v1384
      %v1389 = vmul.f32 %v1373, %v1384
      %v1390 = vmul.f32 %v1375, %v1384
      %v1391 = vmul.f32 %v1377, %v1384
      %v1392 = vmul.f32 %v1379, %v1384
      %v1393 = vadd.f32 %v1356, %v1385
      %v1394 = vadd.f32 %v1357, %v1386
      %v1395 = vadd.f32 %v1358, %v1387
      %v1396 = vadd.f32 %v1359, %v1388
      %v1397 = vadd.f32 %v1360, %v1389
      %v1398 = vadd.f32 %v1361, %v1390
      %v1399 = vadd.f32 %v1362, %v1391
      %v1400 = vadd.f32 %v1363, %v1392
      %s1401 = scalar_lea.vmem %s1185, 2 [#allocation2]
      %v1402 = vld [vmem:[%s1401] ss:$2 sm:$0xff]
      %s1403 = scalar_lea.vmem %s1185, 50 [#allocation2]
      %v1404 = vld [vmem:[%s1403] ss:$2 sm:$0xff]
      %s1405 = scalar_lea.vmem %s1185, 98 [#allocation2]
      %v1406 = vld [vmem:[%s1405] ss:$2 sm:$0xff]
      %s1407 = scalar_lea.vmem %s1185, 146 [#allocation2]
      %v1408 = vld [vmem:[%s1407] ss:$2 sm:$0xff]
      %s1409 = scalar_lea.vmem %s1185, 194 [#allocation2]
      %v1410 = vld [vmem:[%s1409] ss:$2 sm:$0xff]
      %s1411 = scalar_lea.vmem %s1185, 242 [#allocation2]
      %v1412 = vld [vmem:[%s1411] ss:$2 sm:$0xff]
      %s1413 = scalar_lea.vmem %s1185, 290 [#allocation2]
      %v1414 = vld [vmem:[%s1413] ss:$2 sm:$0xff]
      %s1415 = scalar_lea.vmem %s1185, 338 [#allocation2]
      %v1416 = vld [vmem:[%s1415] ss:$2 sm:$0xff]
      %v1417 = vld [vmem:[%s3 + $0x5] sm:$0x1]
      %v1418 = vlaneseq
      %v1419 = vshrl.u32 %v1418, 7
      %v1420 = vsub.s32 0, %v1419
      %v1421 = vrot.slane %v1417, %v1420
      %v1422 = vmul.f32 %v1402, %v1421
      %v1423 = vmul.f32 %v1404, %v1421
      %v1424 = vmul.f32 %v1406, %v1421
      %v1425 = vmul.f32 %v1408, %v1421
      %v1426 = vmul.f32 %v1410, %v1421
      %v1427 = vmul.f32 %v1412, %v1421
      %v1428 = vmul.f32 %v1414, %v1421
      %v1429 = vmul.f32 %v1416, %v1421
      %v1430 = vadd.f32 %v1393, %v1422
      %v1431 = vadd.f32 %v1394, %v1423
      %v1432 = vadd.f32 %v1395, %v1424
      %v1433 = vadd.f32 %v1396, %v1425
      %v1434 = vadd.f32 %v1397, %v1426
      %v1435 = vadd.f32 %v1398, %v1427
      %v1436 = vadd.f32 %v1399, %v1428
      %v1437 = vadd.f32 %v1400, %v1429
      %s1438 = scalar_lea.vmem [#allocation2], 48
      %v1439 = vld [vmem:[%s1438] ss:$2 sm:$0xff]
      %s1440 = scalar_lea.vmem %s1438, 48 [#allocation2]
      %v1441 = vld [vmem:[%s1440] ss:$2 sm:$0xff]
      %s1442 = scalar_lea.vmem %s1438, 96 [#allocation2]
      %v1443 = vld [vmem:[%s1442] ss:$2 sm:$0xff]
      %s1444 = scalar_lea.vmem %s1438, 144 [#allocation2]
      %v1445 = vld [vmem:[%s1444] ss:$2 sm:$0xff]
      %s1446 = scalar_lea.vmem %s1438, 192 [#allocation2]
      %v1447 = vld [vmem:[%s1446] ss:$2 sm:$0xff]
      %s1448 = scalar_lea.vmem %s1438, 240 [#allocation2]
      %v1449 = vld [vmem:[%s1448] ss:$2 sm:$0xff]
      %s1450 = scalar_lea.vmem %s1438, 288 [#allocation2]
      %v1451 = vld [vmem:[%s1450] ss:$2 sm:$0xff]
      %s1452 = scalar_lea.vmem %s1438, 336 [#allocation2]
      %v1453 = vld [vmem:[%s1452] ss:$2 sm:$0xff]
      %v1454 = vld [vmem:[%s3 + $0x6] sm:$0x1]
      %v1455 = vlaneseq
      %v1456 = vshrl.u32 %v1455, 7
      %v1457 = vsub.s32 0, %v1456
      %v1458 = vrot.slane %v1454, %v1457
      %v1459 = vmul.f32 %v1439, %v1458
      %v1460 = vmul.f32 %v1441, %v1458
      %v1461 = vmul.f32 %v1443, %v1458
      %v1462 = vmul.f32 %v1445, %v1458
      %v1463 = vmul.f32 %v1447, %v1458
      %v1464 = vmul.f32 %v1449, %v1458
      %v1465 = vmul.f32 %v1451, %v1458
      %v1466 = vmul.f32 %v1453, %v1458
      %v1467 = vadd.f32 %v1430, %v1459
      %v1468 = vadd.f32 %v1431, %v1460
      %v1469 = vadd.f32 %v1432, %v1461
      %v1470 = vadd.f32 %v1433, %v1462
      %v1471 = vadd.f32 %v1434, %v1463
      %v1472 = vadd.f32 %v1435, %v1464
      %v1473 = vadd.f32 %v1436, %v1465
      %v1474 = vadd.f32 %v1437, %v1466
      %s1475 = scalar_lea.vmem %s1438, 1 [#allocation2]
      %v1476 = vld [vmem:[%s1475] ss:$2 sm:$0xff]
      %s1477 = scalar_lea.vmem %s1438, 49 [#allocation2]
      %v1478 = vld [vmem:[%s1477] ss:$2 sm:$0xff]
      %s1479 = scalar_lea.vmem %s1438, 97 [#allocation2]
      %v1480 = vld [vmem:[%s1479] ss:$2 sm:$0xff]
      %s1481 = scalar_lea.vmem %s1438, 145 [#allocation2]
      %v1482 = vld [vmem:[%s1481] ss:$2 sm:$0xff]
      %s1483 = scalar_lea.vmem %s1438, 193 [#allocation2]
      %v1484 = vld [vmem:[%s1483] ss:$2 sm:$0xff]
      %s1485 = scalar_lea.vmem %s1438, 241 [#allocation2]
      %v1486 = vld [vmem:[%s1485] ss:$2 sm:$0xff]
      %s1487 = scalar_lea.vmem %s1438, 289 [#allocation2]
      %v1488 = vld [vmem:[%s1487] ss:$2 sm:$0xff]
      %s1489 = scalar_lea.vmem %s1438, 337 [#allocation2]
      %v1490 = vld [vmem:[%s1489] ss:$2 sm:$0xff]
      %v1491 = vld [vmem:[%s3 + $0x7] sm:$0x1]
      %v1492 = vlaneseq
      %v1493 = vshrl.u32 %v1492, 7
      %v1494 = vsub.s32 0, %v1493
      %v1495 = vrot.slane %v1491, %v1494
      %v1496 = vmul.f32 %v1476, %v1495
      %v1497 = vmul.f32 %v1478, %v1495
      %v1498 = vmul.f32 %v1480, %v1495
      %v1499 = vmul.f32 %v1482, %v1495
      %v1500 = vmul.f32 %v1484, %v1495
      %v1501 = vmul.f32 %v1486, %v1495
      %v1502 = vmul.f32 %v1488, %v1495
      %v1503 = vmul.f32 %v1490, %v1495
      %v1504 = vadd.f32 %v1467, %v1496
      %v1505 = vadd.f32 %v1468, %v1497
      %v1506 = vadd.f32 %v1469, %v1498
      %v1507 = vadd.f32 %v1470, %v1499
      %v1508 = vadd.f32 %v1471, %v1500
      %v1509 = vadd.f32 %v1472, %v1501
      %v1510 = vadd.f32 %v1473, %v1502
      %v1511 = vadd.f32 %v1474, %v1503
      %s1512 = scalar_lea.vmem %s1438, 2 [#allocation2]
      %v1513 = vld [vmem:[%s1512] ss:$2 sm:$0xff]
      %s1514 = scalar_lea.vmem %s1438, 50 [#allocation2]
      %v1515 = vld [vmem:[%s1514] ss:$2 sm:$0xff]
      %s1516 = scalar_lea.vmem %s1438, 98 [#allocation2]
      %v1517 = vld [vmem:[%s1516] ss:$2 sm:$0xff]
      %s1518 = scalar_lea.vmem %s1438, 146 [#allocation2]
      %v1519 = vld [vmem:[%s1518] ss:$2 sm:$0xff]
      %s1520 = scalar_lea.vmem %s1438, 194 [#allocation2]
      %v1521 = vld [vmem:[%s1520] ss:$2 sm:$0xff]
      %s1522 = scalar_lea.vmem %s1438, 242 [#allocation2]
      %v1523 = vld [vmem:[%s1522] ss:$2 sm:$0xff]
      %s1524 = scalar_lea.vmem %s1438, 290 [#allocation2]
      %v1525 = vld [vmem:[%s1524] ss:$2 sm:$0xff]
      %s1526 = scalar_lea.vmem %s1438, 338 [#allocation2]
      %v1527 = vld [vmem:[%s1526] ss:$2 sm:$0xff]
      %v1528 = vld [vmem:[%s3 + $0x8] sm:$0x1]
      %v1529 = vlaneseq
      %v1530 = vshrl.u32 %v1529, 7
      %v1531 = vsub.s32 0, %v1530
      %v1532 = vrot.slane %v1528, %v1531
      %v1533 = vmul.f32 %v1513, %v1532
      %v1534 = vmul.f32 %v1515, %v1532
      %v1535 = vmul.f32 %v1517, %v1532
      %v1536 = vmul.f32 %v1519, %v1532
      %v1537 = vmul.f32 %v1521, %v1532
      %v1538 = vmul.f32 %v1523, %v1532
      %v1539 = vmul.f32 %v1525, %v1532
      %v1540 = vmul.f32 %v1527, %v1532
      %v1541 = vadd.f32 %v1504, %v1533
      %v1542 = vadd.f32 %v1505, %v1534
      %v1543 = vadd.f32 %v1506, %v1535
      %v1544 = vadd.f32 %v1507, %v1536
      %v1545 = vadd.f32 %v1508, %v1537
      %v1546 = vadd.f32 %v1509, %v1538
      %v1547 = vadd.f32 %v1510, %v1539
      %v1548 = vadd.f32 %v1511, %v1540
      %1549 = vst.msk [vmem:[%s262] sm:$0xff] %vm1129, %v1541
      %1550 = vst.msk [vmem:[%s262 + $0x8] sm:$0xff] %vm1129, %v1542
      %1551 = vst.msk [vmem:[%s262 + $0x10] sm:$0xff] %vm1129, %v1543
      %1552 = vst.msk [vmem:[%s262 + $0x18] sm:$0xff] %vm1129, %v1544
      %1553 = vst.msk [vmem:[%s262 + $0x20] sm:$0xff] %vm1129, %v1545
      %1554 = vst.msk [vmem:[%s262 + $0x28] sm:$0xff] %vm1129, %v1546
      %1555 = vst.msk [vmem:[%s262 + $0x30] sm:$0xff] %vm1129, %v1547
      %1556 = vst.msk [vmem:[%s262 + $0x38] sm:$0xff] %vm1129, %v1548
      %v1557 = vsel %vm1129, %v1541, 0.0
      %v1558 = vsel %vm1129, %v1542, 0.0
      %v1559 = vadd.f32 %v1557, %v1558
      %v1560 = vsel %vm1129, %v1543, 0.0
      %v1561 = vadd.f32 %v1559, %v1560
      %v1562 = vsel %vm1129, %v1544, 0.0
      %v1563 = vadd.f32 %v1561, %v1562
      %v1564 = vsel %vm1129, %v1545, 0.0
      %v1565 = vadd.f32 %v1563, %v1564
      %v1566 = vsel %vm1129, %v1546, 0.0
      %v1567 = vadd.f32 %v1565, %v1566
      %v1568 = vsel %vm1129, %v1547, 0.0
      %v1569 = vadd.f32 %v1567, %v1568
      %v1570 = vsel %vm1129, %v1548, 0.0
      %v1571 = vadd.f32 %v1569, %v1570
      %v1572 = vsel %vm1129, %v1571, 0.0
      %v1573 = vrot.slane %v1572, 4
      %v1574 = vadd.f32 %v1572, %v1573
      %v1575 = vrot.slane %v1574, 2
      %v1576 = vadd.f32 %v1574, %v1575
      %v1577 = vrot.slane %v1576, 1
      %v1578 = vadd.f32 %v1576, %v1577
      %vm1579 = vcmask 24576
      %1580 = vst.msk [vmem:[%s265] sm:$0x1] %vm1579, %v1578
      %v1581 = vmul.f32 %v1541, %v1541
      %v1582 = vmul.f32 %v1542, %v1542
      %v1583 = vmul.f32 %v1543, %v1543
      %v1584 = vmul.f32 %v1544, %v1544
      %v1585 = vmul.f32 %v1545, %v1545
      %v1586 = vmul.f32 %v1546, %v1546
      %v1587 = vmul.f32 %v1547, %v1547
      %v1588 = vmul.f32 %v1548, %v1548
      %v1589 = vsel %vm1129, %v1581, 0.0
      %v1590 = vsel %vm1129, %v1582, 0.0
      %v1591 = vadd.f32 %v1589, %v1590
      %v1592 = vsel %vm1129, %v1583, 0.0
      %v1593 = vadd.f32 %v1591, %v1592
      %v1594 = vsel %vm1129, %v1584, 0.0
      %v1595 = vadd.f32 %v1593, %v1594
      %v1596 = vsel %vm1129, %v1585, 0.0
      %v1597 = vadd.f32 %v1595, %v1596
      %v1598 = vsel %vm1129, %v1586, 0.0
      %v1599 = vadd.f32 %v1597, %v1598
      %v1600 = vsel %vm1129, %v1587, 0.0
      %v1601 = vadd.f32 %v1599, %v1600
      %v1602 = vsel %vm1129, %v1588, 0.0
      %v1603 = vadd.f32 %v1601, %v1602
      %v1604 = vsel %vm1129, %v1603, 0.0
      %v1605 = vrot.slane %v1604, 4
      %v1606 = vadd.f32 %v1604, %v1605
      %v1607 = vrot.slane %v1606, 2
      %v1608 = vadd.f32 %v1606, %v1607
      %v1609 = vrot.slane %v1608, 1
      %v1610 = vadd.f32 %v1608, %v1609
      %1611 = vst.msk [vmem:[%s268] sm:$0x1] %vm1579, %v1610
      %p1612 = scmp.lt.s32.totalorder %s18, 1
      %s1613 = scalar_select %p1612, %s18, 1
      %s1614 = smul.addr %s1613, 8
      %s1615 = smul.addr %s1614, 8
      %s1616 = scalar_lea.vmem %s4, %s1615
      %p1617 = scmp.lt.s32.totalorder %s18, 1
      %s1618 = scalar_select %p1617, %s18, 1
      %s1619 = scalar_lea.vmem %s5, %s1618
      %p1620 = scmp.lt.s32.totalorder %s18, 1
      %s1621 = scalar_select %p1620, %s18, 1
      %s1622 = scalar_lea.vmem %s6, %s1621
      // Predicated region
      $region37: #{basic_block_forward.4} parent=35 // pred_check
        %p1623 = pneg %p125
      $region38: #{basic_block_forward.4} parent=35 // pred_check_branch
        %1625 = sbr.rel (%p1623) target = $region40
      $region39: #{basic_block_forward.4} parent=35 // pred_region
        _
      $region40: #{basic_block_forward.4} parent=35 // pred_fallthru
        _
      // Predicated region
      $region41: #{basic_block_forward.4} parent=35 // pred_check
        %p1626 = pneg %p151
      $region42: #{basic_block_forward.4} parent=35 // pred_check_branch
        %1628 = sbr.rel (%p1626) target = $region44
      $region43: #{basic_block_forward.4} parent=35 // pred_region
        _
      $region44: #{basic_block_forward.4} parent=35 // pred_fallthru
        _
      // Predicated region
      $region45: #{basic_block_forward.4} parent=35 // pred_check
        %p1629 = pneg %p177
      $region46: #{basic_block_forward.4} parent=35 // pred_check_branch
        %1631 = sbr.rel (%p1629) target = $region48
      $region47: #{basic_block_forward.4} parent=35 // pred_region
        _
      $region48: #{basic_block_forward.4} parent=35 // pred_fallthru
        _
    $region36: #{basic_block_forward.4} parent=5 // pred_fallthru
      _
    %p1632 = scmp.le.s32.totalorder 2, %s13
    // Predicated region
    $region49: #{basic_block_forward.4} parent=5 // pred_check
      %p1633 = pneg %p1632
    $region50: #{basic_block_forward.4} parent=5 // pred_check_branch
      %1635 = sbr.rel (%p1633) target = $region52
    $region51: #{basic_block_forward.4} parent=5 // pred_region
      %s1636 = ssub.s32 %s13, 2
      // Predicated region
      $region53: #{basic_block_forward.4} parent=51 // pred_check
        %p1637 = pneg %p131
      $region54: #{basic_block_forward.4} parent=51 // pred_check_branch
        %1639 = sbr.rel (%p1637) target = $region56
      $region55: #{basic_block_forward.4} parent=51 // pred_region
        %p1640 = scmp.lt.s32.totalorder %s19, 1
        %s1641 = scalar_select %p1640, %s19, 1
        %s1642 = smul.addr %s1641, 8
        %s1643 = smul.addr %s1642, 8
        %s1644 = scalar_lea.vmem %s4, %s1643
      $region56: #{basic_block_forward.4} parent=51 // pred_fallthru
        _
      // Predicated region
      $region57: #{basic_block_forward.4} parent=51 // pred_check
        %p1645 = pneg %p157
      $region58: #{basic_block_forward.4} parent=51 // pred_check_branch
        %1647 = sbr.rel (%p1645) target = $region60
      $region59: #{basic_block_forward.4} parent=51 // pred_region
        %p1648 = scmp.lt.s32.totalorder %s19, 1
        %s1649 = scalar_select %p1648, %s19, 1
        %s1650 = scalar_lea.vmem %s5, %s1649
      $region60: #{basic_block_forward.4} parent=51 // pred_fallthru
        _
      // Predicated region
      $region61: #{basic_block_forward.4} parent=51 // pred_check
        %p1651 = pneg %p183
      $region62: #{basic_block_forward.4} parent=51 // pred_check_branch
        %1653 = sbr.rel (%p1651) target = $region64
      $region63: #{basic_block_forward.4} parent=51 // pred_region
        %p1654 = scmp.lt.s32.totalorder %s19, 1
        %s1655 = scalar_select %p1654, %s19, 1
        %s1656 = scalar_lea.vmem %s6, %s1655
      $region64: #{basic_block_forward.4} parent=51 // pred_fallthru
        _
    $region52: #{basic_block_forward.4} parent=5 // pred_fallthru
      _
  $region6: #{basic_block_forward.4} parent=0 // loop_footer
    %s17 = sadd.s32 1, %s13
  $region7: #{basic_block_forward.4} parent=0 // loop_footer_branch
    %12 = sbr.rel target = $region3
  $region8: #{basic_block_forward.4} parent=0 // loop_exit
    _

// kernel: basic_block_forward.6
$region0: #{basic_block_forward.6}
  #allocation0 [shape = 'u32[]', space=smem, size = 0x4, offset = 0x4, fixed_abs, tag = 'smem constant byte address 0x4 - core index']
  #allocation1 [shape = 'u32[144,128]{1,0:T(1,128)}', space=vmem, size = 0x12000, scoped, tag = 'internal scratch']
  #allocation2 [shape = 'f32[10,10,4]{2,1,0:T(8,128)}', space=vmem, size = 0x14000, scoped, tag = 'scratch operand']
  %s0 = inlined_call_operand.vmem [shape: f32[2,8,8,8], index: 0, kind: input, shape index: {}]
  %s1 = inlined_call_operand.vmem [shape: f32[8,4], index: 1, kind: input, shape index: {}]
  %s2 = inlined_call_operand.vmem [shape: f32[1,4], index: 2, kind: input, shape index: {}]
  %s3 = inlined_call_operand.vmem [shape: f32[9,4], index: 3, kind: input, shape index: {}]
  %s4 = inlined_call_operand.vmem [shape: f32[2,8,8,4], index: 4, kind: output, shape index: {0}]
  %s5 = inlined_call_operand.vmem [shape: f32[2,1,4], index: 5, kind: output, shape index: {1}]
  %s6 = inlined_call_operand.vmem [shape: f32[2,1,4], index: 6, kind: output, shape index: {2}]
  %7 = xla_tuple %s4, %s5, %s6
  %s8 = sld [smem:[#allocation0]]
  $region65: #{basic_block_forward.6} parent=0
    _
  %s10 = ssub.s32 1, %s8
  %s11 = scalar_select 0, %s10, %s8
  loop: start=0, step=1, limit=4
  $region2: #{basic_block_forward.6} parent=0 // loop_pre_header
    _
  $region3: #{basic_block_forward.6} parent=0 // loop_header
    %s13 = sphi 0, %s17
    %p14 = scmp.ge.s32.totalorder %s13, 4
    %s23 = sphi 0, %s25
    %s26 = sphi 0, %s23
    %s27 = sphi 0, %s26
    %s43 = sphi 0, %s27
    %s47 = sphi 0, %s47
    %s49 = sphi 0, %s47
    %s50 = sphi 0, %s49
    %s64 = sphi 0, %s50
    %s68 = sphi 0, %s68
    %s70 = sphi 0, %s68
    %s71 = sphi 0, %s70
    %s85 = sphi 0, %s71
    %s89 = sphi 0, %s89
    %s91 = sphi 0, %s89
    %s92 = sphi 0, %s91
    %s106 = sphi 0, %s92
    %s112 = sphi 0, %s114
    %s115 = sphi 0, %s112
    %s116 = sphi 0, %s115
    %s132 = sphi 0, %s116
    %s138 = sphi 0, %s140
    %s141 = sphi 0, %s138
    %s142 = sphi 0, %s141
    %s158 = sphi 0, %s142
    %s164 = sphi 0, %s166
    %s167 = sphi 0, %s164
    %s168 = sphi 0, %s167
    %s184 = sphi 0, %s168
  $region4: #{basic_block_forward.6} parent=0 // loop_header_branch
    %16 = sbr.rel (%p14) target = $region8
  $region5: #{basic_block_forward.6} parent=0 // loop_body
    %s18 = ssub.s32 %s13, 1
    %s19 = ssub.s32 %s13, 2
    %s20 = sadd.s32 %s13, 1
    %s21 = ssub.s32 %s13, %s20
    %p22 = scmp.eq.s32.totalorder %s21, 0
    %s24 = sadd.s32 %s23, 1
    %s25 = scalar_select %p22, %s23, %s24
    %p28 = pneg %p22
    %p29 = scmp.eq.s32.totalorder %s13, 1
    %p30 = por %p28, %p29
    %p31 = scmp.ne.s32.totalorder %s23, %s26
    %p32 = scmp.eq.s32.totalorder %s13, 0
    %p33 = por %p31, %p32
    %p34 = scmp.ne.s32.totalorder %s23, %s26
    %p35 = scmp.eq.s32.totalorder %s18, 1
    %p36 = por %p34, %p35
    %p37 = scmp.ne.s32.totalorder %s26, %s27
    %p38 = scmp.eq.s32.totalorder %s18, 0
    %p39 = por %p37, %p38
    %p40 = scmp.ne.s32.totalorder %s26, %s27
    %p41 = scmp.eq.s32.totalorder %s19, 1
    %p42 = por %p40, %p41
    %p44 = scmp.ne.s32.totalorder %s27, %s43
    %p45 = scmp.eq.s32.totalorder %s19, 0
    %p46 = por %p44, %p45
    %s48 = sadd.s32 %s47, 1
    %p51 = scmp.eq.s32.totalorder %s13, 1
    %p52 = scmp.ne.s32.totalorder %s47, %s49
    %p53 = scmp.eq.s32.totalorder %s13, 0
    %p54 = por %p52, %p53
    %p55 = scmp.ne.s32.totalorder %s47, %s49
    %p56 = scmp.eq.s32.totalorder %s18, 1
    %p57 = por %p55, %p56
    %p58 = scmp.ne.s32.totalorder %s49, %s50
    %p59 = scmp.eq.s32.totalorder %s18, 0
    %p60 = por %p58, %p59
    %p61 = scmp.ne.s32.totalorder %s49, %s50
    %p62 = scmp.eq.s32.totalorder %s19, 1
    %p63 = por %p61, %p62
    %p65 = scmp.ne.s32.totalorder %s50, %s64
    %p66 = scmp.eq.s32.totalorder %s19, 0
    %p67 = por %p65, %p66
    %s69 = sadd.s32 %s68, 1
    %p72 = scmp.eq.s32.totalorder %s13, 1
    %p73 = scmp.ne.s32.totalorder %s68, %s70
    %p74 = scmp.eq.s32.totalorder %s13, 0
    %p75 = por %p73, %p74
    %p76 = scmp.ne.s32.totalorder %s68, %s70
    %p77 = scmp.eq.s32.totalorder %s18, 1
    %p78 = por %p76, %p77
    %p79 = scmp.ne.s32.totalorder %s70, %s71
    %p80 = scmp.eq.s32.totalorder %s18, 0
    %p81 = por %p79, %p80
    %p82 = scmp.ne.s32.totalorder %s70, %s71
    %p83 = scmp.eq.s32.totalorder %s19, 1
    %p84 = por %p82, %p83
    %p86 = scmp.ne.s32.totalorder %s71, %s85
    %p87 = scmp.eq.s32.totalorder %s19, 0
    %p88 = por %p86, %p87
    %s90 = sadd.s32 %s89, 1
    %p93 = scmp.eq.s32.totalorder %s13, 1
    %p94 = scmp.ne.s32.totalorder %s89, %s91
    %p95 = scmp.eq.s32.totalorder %s13, 0
    %p96 = por %p94, %p95
    %p97 = scmp.ne.s32.totalorder %s89, %s91
    %p98 = scmp.eq.s32.totalorder %s18, 1
    %p99 = por %p97, %p98
    %p100 = scmp.ne.s32.totalorder %s91, %s92
    %p101 = scmp.eq.s32.totalorder %s18, 0
    %p102 = por %p100, %p101
    %p103 = scmp.ne.s32.totalorder %s91, %s92
    %p104 = scmp.eq.s32.totalorder %s19, 1
    %p105 = por %p103, %p104
    %p107 = scmp.ne.s32.totalorder %s92, %s106
    %p108 = scmp.eq.s32.totalorder %s19, 0
    %p109 = por %p107, %p108
    %s110 = ssub.s32 %s13, %s20
    %p111 = scmp.eq.s32.totalorder %s110, 0
    %s113 = sadd.s32 %s112, 1
    %s114 = scalar_select %p111, %s112, %s113
    %p117 = pneg %p111
    %p118 = scmp.eq.s32.totalorder %s13, 1
    %p119 = por %p117, %p118
    %p120 = scmp.ne.s32.totalorder %s112, %s115
    %p121 = scmp.eq.s32.totalorder %s13, 0
    %p122 = por %p120, %p121
    %p123 = scmp.ne.s32.totalorder %s112, %s115
    %p124 = scmp.eq.s32.totalorder %s18, 1
    %p125 = por %p123, %p124
    %p126 = scmp.ne.s32.totalorder %s115, %s116
    %p127 = scmp.eq.s32.totalorder %s18, 0
    %p128 = por %p126, %p127
    %p129 = scmp.ne.s32.totalorder %s115, %s116
    %p130 = scmp.eq.s32.totalorder %s19, 1
    %p131 = por %p129, %p130
    %p133 = scmp.ne.s32.totalorder %s116, %s132
    %p134 = scmp.eq.s32.totalorder %s19, 0
    %p135 = por %p133, %p134
    %s136 = ssub.s32 %s13, %s20
    %p137 = scmp.eq.s32.totalorder %s136, 0
    %s139 = sadd.s32 %s138, 1
    %s140 = scalar_select %p137, %s138, %s139
    %p143 = pneg %p137
    %p144 = scmp.eq.s32.totalorder %s13, 1
    %p145 = por %p143, %p144
    %p146 = scmp.ne.s32.totalorder %s138, %s141
    %p147 = scmp.eq.s32.totalorder %s13, 0
    %p148 = por %p146, %p147
    %p149 = scmp.ne.s32.totalorder %s138, %s141
    %p150 = scmp.eq.s32.totalorder %s18, 1
    %p151 = por %p149, %p150
    %p152 = scmp.ne.s32.totalorder %s141, %s142
    %p153 = scmp.eq.s32.totalorder %s18, 0
    %p154 = por %p152, %p153
    %p155 = scmp.ne.s32.totalorder %s141, %s142
    %p156 = scmp.eq.s32.totalorder %s19, 1
    %p157 = por %p155, %p156
    %p159 = scmp.ne.s32.totalorder %s142, %s158
    %p160 = scmp.eq.s32.totalorder %s19, 0
    %p161 = por %p159, %p160
    %s162 = ssub.s32 %s13, %s20
    %p163 = scmp.eq.s32.totalorder %s162, 0
    %s165 = sadd.s32 %s164, 1
    %s166 = scalar_select %p163, %s164, %s165
    %p169 = pneg %p163
    %p170 = scmp.eq.s32.totalorder %s13, 1
    %p171 = por %p169, %p170
    %p172 = scmp.ne.s32.totalorder %s164, %s167
    %p173 = scmp.eq.s32.totalorder %s13, 0
    %p174 = por %p172, %p173
    %p175 = scmp.ne.s32.totalorder %s164, %s167
    %p176 = scmp.eq.s32.totalorder %s18, 1
    %p177 = por %p175, %p176
    %p178 = scmp.ne.s32.totalorder %s167, %s168
    %p179 = scmp.eq.s32.totalorder %s18, 0
    %p180 = por %p178, %p179
    %p181 = scmp.ne.s32.totalorder %s167, %s168
    %p182 = scmp.eq.s32.totalorder %s19, 1
    %p183 = por %p181, %p182
    %p185 = scmp.ne.s32.totalorder %s168, %s184
    %p186 = scmp.eq.s32.totalorder %s19, 0
    %p187 = por %p185, %p186
    %p188 = scmp.le.s32.totalorder 1, %s13
    %p189 = scmp.lt.s32.totalorder %s13, 3
    %p190 = pnand %p188, %p189
    %p191 = pneg %p190
    // Predicated region
    $region9: #{basic_block_forward.6} parent=5 // pred_check
      _
    $region10: #{basic_block_forward.6} parent=5 // pred_check_branch
      %193 = sbr.rel (%p190) target = $region12
    $region11: #{basic_block_forward.6} parent=5 // pred_region
      %s194 = ssub.s32 %s13, 1
      // Predicated region
      $region13: #{basic_block_forward.6} parent=11 // pred_check
        %p195 = pneg %p60
      $region14: #{basic_block_forward.6} parent=11 // pred_check_branch
        %197 = sbr.rel (%p195) target = $region16
      $region15: #{basic_block_forward.6} parent=11 // pred_region
        _
      $region16: #{basic_block_forward.6} parent=11 // pred_fallthru
        _
      // Predicated region
      $region17: #{basic_block_forward.6} parent=11 // pred_check
        %p198 = pneg %p81
      $region18: #{basic_block_forward.6} parent=11 // pred_check_branch
        %200 = sbr.rel (%p198) target = $region20
      $region19: #{basic_block_forward.6} parent=11 // pred_region
        _
      $region20: #{basic_block_forward.6} parent=11 // pred_fallthru
        _
      // Predicated region
      $region21: #{basic_block_forward.6} parent=11 // pred_check
        %p201 = pneg %p102
      $region22: #{basic_block_forward.6} parent=11 // pred_check_branch
        %203 = sbr.rel (%p201) target = $region24
      $region23: #{basic_block_forward.6} parent=11 // pred_region
        _
      $region24: #{basic_block_forward.6} parent=11 // pred_fallthru
        _
    $region12: #{basic_block_forward.6} parent=5 // pred_fallthru
      _
    %p204 = scmp.lt.s32.totalorder %s13, 2
    // Predicated region
    $region25: #{basic_block_forward.6} parent=5 // pred_check
      %p205 = pneg %p204
    $region26: #{basic_block_forward.6} parent=5 // pred_check_branch
      %207 = sbr.rel (%p205) target = $region28
    $region27: #{basic_block_forward.6} parent=5 // pred_region
      // Predicated region
      $region29: #{basic_block_forward.6} parent=27 // pred_check
        %p208 = pneg %p33
      $region30: #{basic_block_forward.6} parent=27 // pred_check_branch
        %210 = sbr.rel (%p208) target = $region32
      $region31: #{basic_block_forward.6} parent=27 // pred_region
        %p211 = scmp.lt.s32.totalorder %s13, 1
        %s212 = scalar_select %p211, %s13, 1
        %s213 = smul.addr %s212, 8
        %s214 = smul.addr %s213, 8
        %s215 = scalar_lea.vmem %s0, %s214
      $region32: #{basic_block_forward.6} parent=27 // pred_fallthru
        _
    $region28: #{basic_block_forward.6} parent=5 // pred_fallthru
      _
    %p216 = scmp.le.s32.totalorder 1, %s13
    %p217 = scmp.lt.s32.totalorder %s13, 3
    %p218 = pnand %p216, %p217
    %p219 = pneg %p218
    // Predicated region
    $region33: #{basic_block_forward.6} parent=5 // pred_check
      _
    $region34: #{basic_block_forward.6} parent=5 // pred_check_branch
      %221 = sbr.rel (%p218) target = $region36
    $region35: #{basic_block_forward.6} parent=5 // pred_region
      %s222 = ssub.s32 %s13, 1
      %p223 = scmp.lt.s32.totalorder %s18, 1
      %s224 = scalar_select %p223, %s18, 1
      %s225 = smul.addr %s224, 8
      %s226 = smul.addr %s225, 8
      %s227 = scalar_lea.vmem %s0, %s226
      %p228 = pneg %p39
      %p229 = pneg %p36
      %p230 = pneg %p60
      %p231 = pneg %p57
      %p232 = pneg %p81
      %p233 = pneg %p78
      %p234 = pneg %p102
      %p235 = pneg %p99
      %p236 = pneg %p128
      %p237 = pneg %p125
      %p238 = scmp.lt.s32.totalorder %s18, 1
      %s239 = scalar_select %p238, %s18, 1
      %s240 = smul.addr %s239, 8
      %s241 = smul.addr %s240, 8
      %s242 = scalar_lea.vmem %s4, %s241
      %p243 = pneg %p154
      %p244 = pneg %p151
      %p245 = scmp.lt.s32.totalorder %s18, 1
      %s246 = scalar_select %p245, %s18, 1
      %s247 = scalar_lea.vmem %s5, %s246
      %p248 = pneg %p180
      %p249 = pneg %p177
      %p250 = scmp.lt.s32.totalorder %s18, 1
      %s251 = scalar_select %p250, %s18, 1
      %s252 = scalar_lea.vmem %s6, %s251
      %p253 = scmp.lt.s32.totalorder %s18, 1
      %s254 = scalar_select %p253, %s18, 1
      %s255 = smul.addr %s254, 8
      %s256 = smul.addr %s255, 8
      %s257 = scalar_lea.vmem %s0, %s256
      %p258 = scmp.lt.s32.totalorder %s18, 1
      %s259 = scalar_select %p258, %s18, 1
      %s260 = smul.addr %s259, 8
      %s261 = smul.addr %s260, 8
      %s262 = scalar_lea.vmem %s4, %s261
      %p263 = scmp.lt.s32.totalorder %s18, 1
      %s264 = scalar_select %p263, %s18, 1
      %s265 = scalar_lea.vmem %s5, %s264
      %p266 = scmp.lt.s32.totalorder %s18, 1
      %s267 = scalar_select %p266, %s18, 1
      %s268 = scalar_lea.vmem %s6, %s267
      %v269 = vld [vmem:[%s257] sm:$0xff]
      %v270 = vld [vmem:[%s257 + $0x8] sm:$0xff]
      %v271 = vld [vmem:[%s257 + $0x10] sm:$0xff]
      %v272 = vld [vmem:[%s257 + $0x18] sm:$0xff]
      %v273 = vld [vmem:[%s257 + $0x20] sm:$0xff]
      %v274 = vld [vmem:[%s257 + $0x28] sm:$0xff]
      %v275 = vld [vmem:[%s257 + $0x30] sm:$0xff]
      %v276 = vld [vmem:[%s257 + $0x38] sm:$0xff]
      %v277 = vld [vmem:[%s2] sm:$0x1]
      %v279 = vlaneseq
      %v280 = vshrl.u32 %v279, 7
      %v281 = vsub.s32 0, %v280
      %v282 = vrot.slane %v277, %v281
      %v284 = vadd.f32 %v282, 0.0
      %v285 = vld [vmem:[%s1] sm:$0x1]
      %287 = vset.pattern.permute.xlu0 0
      %288 = vperm.xlu0 %287, %v269
      %v289 = vpop.permute.xlu0 %288
      %292 = vset.pattern.permute.xlu0 0
      %293 = vperm.xlu0 %292, %v270
      %v294 = vpop.permute.xlu0 %293
      %297 = vset.pattern.permute.xlu0 0
      %298 = vperm.xlu0 %297, %v271
      %v299 = vpop.permute.xlu0 %298
      %302 = vset.pattern.permute.xlu0 0
      %303 = vperm.xlu0 %302, %v272
      %v304 = vpop.permute.xlu0 %303
      %307 = vset.pattern.permute.xlu0 0
      %308 = vperm.xlu0 %307, %v273
      %v309 = vpop.permute.xlu0 %308
      %312 = vset.pattern.permute.xlu0 0
      %313 = vperm.xlu0 %312, %v274
      %v314 = vpop.permute.xlu0 %313
      %317 = vset.pattern.permute.xlu0 0
      %318 = vperm.xlu0 %317, %v275
      %v319 = vpop.permute.xlu0 %318
      %322 = vset.pattern.permute.xlu0 0
      %323 = vperm.xlu0 %322, %v276
      %v324 = vpop.permute.xlu0 %323
      %v326 = vlaneseq
      %v327 = vshrl.u32 %v326, 7
      %v328 = vsub.s32 0, %v327
      %v329 = vrot.slane %v285, %v328
      %v330 = vmul.f32 %v289, %v329
      %v331 = vmul.f32 %v294, %v329
      %v332 = vmul.f32 %v299, %v329
      %v333 = vmul.f32 %v304, %v329
      %v334 = vmul.f32 %v309, %v329
      %v335 = vmul.f32 %v314, %v329
      %v336 = vmul.f32 %v319, %v329
      %v337 = vmul.f32 %v324, %v329
      %v338 = vadd.f32 %v284, %v330
      %v339 = vadd.f32 %v284, %v331
      %v340 = vadd.f32 %v284, %v332
      %v341 = vadd.f32 %v284, %v333
      %v342 = vadd.f32 %v284, %v334
      %v343 = vadd.f32 %v284, %v335
      %v344 = vadd.f32 %v284, %v336
      %v345 = vadd.f32 %v284, %v337
      %v346 = vld [vmem:[%s1 + $0x1] sm:$0x1]
      %347 = vset.pattern.permute.xlu0 1
      %348 = vperm.xlu0 %347, %v269
      %v349 = vpop.permute.xlu0 %348
      %351 = vset.pattern.permute.xlu0 1
      %352 = vperm.xlu0 %351, %v270
      %v353 = vpop.permute.xlu0 %352
      %355 = vset.pattern.permute.xlu0 1
      %356 = vperm.xlu0 %355, %v271
      %v357 = vpop.permute.xlu0 %356
      %359 = vset.pattern.permute.xlu0 1
      %360 = vperm.xlu0 %359, %v272
      %v361 = vpop.permute.xlu0 %360
      %363 = vset.pattern.permute.xlu0 1
      %364 = vperm.xlu0 %363, %v273
      %v365 = vpop.permute.xlu0 %364
      %367 = vset.pattern.permute.xlu0 1
      %368 = vperm.xlu0 %367, %v274
      %v369 = vpop.permute.xlu0 %368
      %371 = vset.pattern.permute.xlu0 1
      %372 = vperm.xlu0 %371, %v275
      %v373 = vpop.permute.xlu0 %372
      %375 = vset.pattern.permute.xlu0 1
      %376 = vperm.xlu0 %375, %v276
      %v377 = vpop.permute.xlu0 %376
      %v379 = vlaneseq
      %v380 = vshrl.u32 %v379, 7
      %v381 = vsub.s32 0, %v380
      %v382 = vrot.slane %v346, %v381
      %v383 = vmul.f32 %v349, %v382
      %v384 = vmul.f32 %v353, %v382
      %v385 = vmul.f32 %v357, %v382
      %v386 = vmul.f32 %v361, %v382
      %v387 = vmul.f32 %v365, %v382
      %v388 = vmul.f32 %v369, %v382
      %v389 = vmul.f32 %v373, %v382
      %v390 = vmul.f32 %v377, %v382
      %v391 = vadd.f32 %v338, %v383
      %v392 = vadd.f32 %v339, %v384
      %v393 = vadd.f32 %v340, %v385
      %v394 = vadd.f32 %v341, %v386
      %v395 = vadd.f32 %v342, %v387
      %v396 = vadd.f32 %v343, %v388
      %v397 = vadd.f32 %v344, %v389
      %v398 = vadd.f32 %v345, %v390
      %v399 = vld [vmem:[%s1 + $0x2] sm:$0x1]
      %400 = vset.pattern.permute.xlu0 2
      %401 = vperm.xlu0 %400, %v269
      %v402 = vpop.permute.xlu0 %401
      %404 = vset.pattern.permute.xlu0 2
      %405 = vperm.xlu0 %404, %v270
      %v406 = vpop.permute.xlu0 %405
      %408 = vset.pattern.permute.xlu0 2
      %409 = vperm.xlu0 %408, %v271
      %v410 = vpop.permute.xlu0 %409
      %412 = vset.pattern.permute.xlu0 2
      %413 = vperm.xlu0 %412, %v272
      %v414 = vpop.permute.xlu0 %413
      %416 = vset.pattern.permute.xlu0 2
      %417 = vperm.xlu0 %416, %v273
      %v418 = vpop.permute.xlu0 %417
      %420 = vset.pattern.permute.xlu0 2
      %421 = vperm.xlu0 %420, %v274
      %v422 = vpop.permute.xlu0 %421
      %424 = vset.pattern.permute.xlu0 2
      %425 = vperm.xlu0 %424, %v275
      %v426 = vpop.permute.xlu0 %425
      %428 = vset.pattern.permute.xlu0 2
      %429 = vperm.xlu0 %428, %v276
      %v430 = vpop.permute.xlu0 %429
      %v432 = vlaneseq
      %v433 = vshrl.u32 %v432, 7
      %v434 = vsub.s32 0, %v433
      %v435 = vrot.slane %v399, %v434
      %v436 = vmul.f32 %v402, %v435
      %v437 = vmul.f32 %v406, %v435
      %v438 = vmul.f32 %v410, %v435
      %v439 = vmul.f32 %v414, %v435
      %v440 = vmul.f32 %v418, %v435
      %v441 = vmul.f32 %v422, %v435
      %v442 = vmul.f32 %v426, %v435
      %v443 = vmul.f32 %v430, %v435
      %v444 = vadd.f32 %v391, %v436
      %v445 = vadd.f32 %v392, %v437
      %v446 = vadd.f32 %v393, %v438
      %v447 = vadd.f32 %v394, %v439
      %v448 = vadd.f32 %v395, %v440
      %v449 = vadd.f32 %v396, %v441
      %v450 = vadd.f32 %v397, %v442
      %v451 = vadd.f32 %v398, %v443
      %v452 = vld [vmem:[%s1 + $0x3] sm:$0x1]
      %453 = vset.pattern.permute.xlu0 3
      %454 = vperm.xlu0 %453, %v269
      %v455 = vpop.permute.xlu0 %454
      %457 = vset.pattern.permute.xlu0 3
      %458 = vperm.xlu0 %457, %v270
      %v459 = vpop.permute.xlu0 %458
      %461 = vset.pattern.permute.xlu0 3
      %462 = vperm.xlu0 %461, %v271
      %v463 = vpop.permute.xlu0 %462
      %465 = vset.pattern.permute.xlu0 3
      %466 = vperm.xlu0 %465, %v272
      %v467 = vpop.permute.xlu0 %466
      %469 = vset.pattern.permute.xlu0 3
      %470 = vperm.xlu0 %469, %v273
      %v471 = vpop.permute.xlu0 %470
      %473 = vset.pattern.permute.xlu0 3
      %474 = vperm.xlu0 %473, %v274
      %v475 = vpop.permute.xlu0 %474
      %477 = vset.pattern.permute.xlu0 3
      %478 = vperm.xlu0 %477, %v275
      %v479 = vpop.permute.xlu0 %478
      %481 = vset.pattern.permute.xlu0 3
      %482 = vperm.xlu0 %481, %v276
      %v483 = vpop.permute.xlu0 %482
      %v485 = vlaneseq
      %v486 = vshrl.u32 %v485, 7
      %v487 = vsub.s32 0, %v486
      %v488 = vrot.slane %v452, %v487
      %v489 = vmul.f32 %v455, %v488
      %v490 = vmul.f32 %v459, %v488
      %v491 = vmul.f32 %v463, %v488
      %v492 = vmul.f32 %v467, %v488
      %v493 = vmul.f32 %v471, %v488
      %v494 = vmul.f32 %v475, %v488
      %v495 = vmul.f32 %v479, %v488
      %v496 = vmul.f32 %v483, %v488
      %v497 = vadd.f32 %v444, %v489
      %v498 = vadd.f32 %v445, %v490
      %v499 = vadd.f32 %v446, %v491
      %v500 = vadd.f32 %v447, %v492
      %v501 = vadd.f32 %v448, %v493
      %v502 = vadd.f32 %v449, %v494
      %v503 = vadd.f32 %v450, %v495
      %v504 = vadd.f32 %v451, %v496
      %v505 = vld [vmem:[%s1 + $0x4] sm:$0x1]
      %506 = vset.pattern.permute.xlu0 4
      %507 = vperm.xlu0 %506, %v269
      %v508 = vpop.permute.xlu0 %507
      %510 = vset.pattern.permute.xlu0 4
      %511 = vperm.xlu0 %510, %v270
      %v512 = vpop.permute.xlu0 %511
      %514 = vset.pattern.permute.xlu0 4
      %515 = vperm.xlu0 %514, %v271
      %v516 = vpop.permute.xlu0 %515
      %518 = vset.pattern.permute.xlu0 4
      %519 = vperm.xlu0 %518, %v272
      %v520 = vpop.permute.xlu0 %519
      %522 = vset.pattern.permute.xlu0 4
      %523 = vperm.xlu0 %522, %v273
      %v524 = vpop.permute.xlu0 %523
      %526 = vset.pattern.permute.xlu0 4
      %527 = vperm.xlu0 %526, %v274
      %v528 = vpop.permute.xlu0 %527
      %530 = vset.pattern.permute.xlu0 4
      %531 = vperm.xlu0 %530, %v275
      %v532 = vpop.permute.xlu0 %531
      %534 = vset.pattern.permute.xlu0 4
      %535 = vperm.xlu0 %534, %v276
      %v536 = vpop.permute.xlu0 %535
      %v538 = vlaneseq
      %v539 = vshrl.u32 %v538, 7
      %v540 = vsub.s32 0, %v539
      %v541 = vrot.slane %v505, %v540
      %v542 = vmul.f32 %v508, %v541
      %v543 = vmul.f32 %v512, %v541
      %v544 = vmul.f32 %v516, %v541
      %v545 = vmul.f32 %v520, %v541
      %v546 = vmul.f32 %v524, %v541
      %v547 = vmul.f32 %v528, %v541
      %v548 = vmul.f32 %v532, %v541
      %v549 = vmul.f32 %v536, %v541
      %v550 = vadd.f32 %v497, %v542
      %v551 = vadd.f32 %v498, %v543
      %v552 = vadd.f32 %v499, %v544
      %v553 = vadd.f32 %v500, %v545
      %v554 = vadd.f32 %v501, %v546
      %v555 = vadd.f32 %v502, %v547
      %v556 = vadd.f32 %v503, %v548
      %v557 = vadd.f32 %v504, %v549
      %v558 = vld [vmem:[%s1 + $0x5] sm:$0x1]
      %559 = vset.pattern.permute.xlu0 5
      %560 = vperm.xlu0 %559, %v269
      %v561 = vpop.permute.xlu0 %560
      %563 = vset.pattern.permute.xlu0 5
      %564 = vperm.xlu0 %563, %v270
      %v565 = vpop.permute.xlu0 %564
      %567 = vset.pattern.permute.xlu0 5
      %568 = vperm.xlu0 %567, %v271
      %v569 = vpop.permute.xlu0 %568
      %571 = vset.pattern.permute.xlu0 5
      %572 = vperm.xlu0 %571, %v272
      %v573 = vpop.permute.xlu0 %572
      %575 = vset.pattern.permute.xlu0 5
      %576 = vperm.xlu0 %575, %v273
      %v577 = vpop.permute.xlu0 %576
      %579 = vset.pattern.permute.xlu0 5
      %580 = vperm.xlu0 %579, %v274
      %v581 = vpop.permute.xlu0 %580
      %583 = vset.pattern.permute.xlu0 5
      %584 = vperm.xlu0 %583, %v275
      %v585 = vpop.permute.xlu0 %584
      %587 = vset.pattern.permute.xlu0 5
      %588 = vperm.xlu0 %587, %v276
      %v589 = vpop.permute.xlu0 %588
      %v591 = vlaneseq
      %v592 = vshrl.u32 %v591, 7
      %v593 = vsub.s32 0, %v592
      %v594 = vrot.slane %v558, %v593
      %v595 = vmul.f32 %v561, %v594
      %v596 = vmul.f32 %v565, %v594
      %v597 = vmul.f32 %v569, %v594
      %v598 = vmul.f32 %v573, %v594
      %v599 = vmul.f32 %v577, %v594
      %v600 = vmul.f32 %v581, %v594
      %v601 = vmul.f32 %v585, %v594
      %v602 = vmul.f32 %v589, %v594
      %v603 = vadd.f32 %v550, %v595
      %v604 = vadd.f32 %v551, %v596
      %v605 = vadd.f32 %v552, %v597
      %v606 = vadd.f32 %v553, %v598
      %v607 = vadd.f32 %v554, %v599
      %v608 = vadd.f32 %v555, %v600
      %v609 = vadd.f32 %v556, %v601
      %v610 = vadd.f32 %v557, %v602
      %v611 = vld [vmem:[%s1 + $0x6] sm:$0x1]
      %612 = vset.pattern.permute.xlu0 6
      %613 = vperm.xlu0 %612, %v269
      %v614 = vpop.permute.xlu0 %613
      %616 = vset.pattern.permute.xlu0 6
      %617 = vperm.xlu0 %616, %v270
      %v618 = vpop.permute.xlu0 %617
      %620 = vset.pattern.permute.xlu0 6
      %621 = vperm.xlu0 %620, %v271
      %v622 = vpop.permute.xlu0 %621
      %624 = vset.pattern.permute.xlu0 6
      %625 = vperm.xlu0 %624, %v272
      %v626 = vpop.permute.xlu0 %625
      %628 = vset.pattern.permute.xlu0 6
      %629 = vperm.xlu0 %628, %v273
      %v630 = vpop.permute.xlu0 %629
      %632 = vset.pattern.permute.xlu0 6
      %633 = vperm.xlu0 %632, %v274
      %v634 = vpop.permute.xlu0 %633
      %636 = vset.pattern.permute.xlu0 6
      %637 = vperm.xlu0 %636, %v275
      %v638 = vpop.permute.xlu0 %637
      %640 = vset.pattern.permute.xlu0 6
      %641 = vperm.xlu0 %640, %v276
      %v642 = vpop.permute.xlu0 %641
      %v644 = vlaneseq
      %v645 = vshrl.u32 %v644, 7
      %v646 = vsub.s32 0, %v645
      %v647 = vrot.slane %v611, %v646
      %v648 = vmul.f32 %v614, %v647
      %v649 = vmul.f32 %v618, %v647
      %v650 = vmul.f32 %v622, %v647
      %v651 = vmul.f32 %v626, %v647
      %v652 = vmul.f32 %v630, %v647
      %v653 = vmul.f32 %v634, %v647
      %v654 = vmul.f32 %v638, %v647
      %v655 = vmul.f32 %v642, %v647
      %v656 = vadd.f32 %v603, %v648
      %v657 = vadd.f32 %v604, %v649
      %v658 = vadd.f32 %v605, %v650
      %v659 = vadd.f32 %v606, %v651
      %v660 = vadd.f32 %v607, %v652
      %v661 = vadd.f32 %v608, %v653
      %v662 = vadd.f32 %v609, %v654
      %v663 = vadd.f32 %v610, %v655
      %v664 = vld [vmem:[%s1 + $0x7] sm:$0x1]
      %665 = vset.pattern.permute.xlu0 7
      %666 = vperm.xlu0 %665, %v269
      %v667 = vpop.permute.xlu0 %666
      %669 = vset.pattern.permute.xlu0 7
      %670 = vperm.xlu0 %669, %v270
      %v671 = vpop.permute.xlu0 %670
      %673 = vset.pattern.permute.xlu0 7
      %674 = vperm.xlu0 %673, %v271
      %v675 = vpop.permute.xlu0 %674
      %677 = vset.pattern.permute.xlu0 7
      %678 = vperm.xlu0 %677, %v272
      %v679 = vpop.permute.xlu0 %678
      %681 = vset.pattern.permute.xlu0 7
      %682 = vperm.xlu0 %681, %v273
      %v683 = vpop.permute.xlu0 %682
      %685 = vset.pattern.permute.xlu0 7
      %686 = vperm.xlu0 %685, %v274
      %v687 = vpop.permute.xlu0 %686
      %689 = vset.pattern.permute.xlu0 7
      %690 = vperm.xlu0 %689, %v275
      %v691 = vpop.permute.xlu0 %690
      %693 = vset.pattern.permute.xlu0 7
      %694 = vperm.xlu0 %693, %v276
      %v695 = vpop.permute.xlu0 %694
      %v697 = vlaneseq
      %v698 = vshrl.u32 %v697, 7
      %v699 = vsub.s32 0, %v698
      %v700 = vrot.slane %v664, %v699
      %v701 = vmul.f32 %v667, %v700
      %v702 = vmul.f32 %v671, %v700
      %v703 = vmul.f32 %v675, %v700
      %v704 = vmul.f32 %v679, %v700
      %v705 = vmul.f32 %v683, %v700
      %v706 = vmul.f32 %v687, %v700
      %v707 = vmul.f32 %v691, %v700
      %v708 = vmul.f32 %v695, %v700
      %v709 = vadd.f32 %v656, %v701
      %v710 = vadd.f32 %v657, %v702
      %v711 = vadd.f32 %v658, %v703
      %v712 = vadd.f32 %v659, %v704
      %v713 = vadd.f32 %v660, %v705
      %v714 = vadd.f32 %v661, %v706
      %v715 = vadd.f32 %v662, %v707
      %v716 = vadd.f32 %v663, %v708
      %vm717 = vcmask 31744
      %718 = vst.msk [vmem:[#allocation2] sm:$0xff] %vm717, 0.0
      %vm719 = vcmask 25600
      %720 = vst.msk [vmem:[#allocation2 + $0x8] sm:$0x3] %vm719, 0.0
      %721 = vst.msk [vmem:[#allocation2 + $0x10] sm:$0xff] %vm717, 0.0
      %722 = vst.msk [vmem:[#allocation2 + $0x18] sm:$0x3] %vm719, 0.0
      %723 = vst.msk [vmem:[#allocation2 + $0x20] sm:$0xff] %vm717, 0.0
      %724 = vst.msk [vmem:[#allocation2 + $0x28] sm:$0x3] %vm719, 0.0
      %725 = vst.msk [vmem:[#allocation2 + $0x30] sm:$0xff] %vm717, 0.0
      %726 = vst.msk [vmem:[#allocation2 + $0x38] sm:$0x3] %vm719, 0.0
      %727 = vst.msk [vmem:[#allocation2 + $0x40] sm:$0xff] %vm717, 0.0
      %728 = vst.msk [vmem:[#allocation2 + $0x48] sm:$0x3] %vm719, 0.0
      %729 = vst.msk [vmem:[#allocation2 + $0x50] sm:$0xff] %vm717, 0.0
      %730 = vst.msk [vmem:[#allocation2 + $0x58] sm:$0x3] %vm719, 0.0
      %731 = vst.msk [vmem:[#allocation2 + $0x60] sm:$0xff] %vm717, 0.0
      %732 = vst.msk [vmem:[#allocation2 + $0x68] sm:$0x3] %vm719, 0.0
      %733 = vst.msk [vmem:[#allocation2 + $0x70] sm:$0xff] %vm717, 0.0
      %734 = vst.msk [vmem:[#allocation2 + $0x78] sm:$0x3] %vm719, 0.0
      %735 = vst.msk [vmem:[#allocation2 + $0x80] sm:$0xff] %vm717, 0.0
      %736 = vst.msk [vmem:[#allocation2 + $0x88] sm:$0x3] %vm719, 0.0
      %737 = vst.msk [vmem:[#allocation2 + $0x90] sm:$0xff] %vm717, 0.0
      %738 = vst.msk [vmem:[#allocation2 + $0x98] sm:$0x3] %vm719, 0.0
      %s739 = scalar_lea.vmem [#allocation2], 16
      %740 = vst.msk [vmem:[%s739 + $0x1] sm:$0xff] %vm717, %v709
      %741 = vst.msk [vmem:[%s739 + $0x11] sm:$0xff] %vm717, %v710
      %742 = vst.msk [vmem:[%s739 + $0x21] sm:$0xff] %vm717, %v711
      %743 = vst.msk [vmem:[%s739 + $0x31] sm:$0xff] %vm717, %v712
      %744 = vst.msk [vmem:[%s739 + $0x41] sm:$0xff] %vm717, %v713
      %745 = vst.msk [vmem:[%s739 + $0x51] sm:$0xff] %vm717, %v714
      %746 = vst.msk [vmem:[%s739 + $0x61] sm:$0xff] %vm717, %v715
      %747 = vst.msk [vmem:[%s739 + $0x71] sm:$0xff] %vm717, %v716
      %v748 = vld [vmem:[#allocation2] sm:$0xff]
      %v749 = vld [vmem:[#allocation2 + $0x10] sm:$0xff]
      %v750 = vld [vmem:[#allocation2 + $0x20] sm:$0xff]
      %v751 = vld [vmem:[#allocation2 + $0x30] sm:$0xff]
      %v752 = vld [vmem:[#allocation2 + $0x40] sm:$0xff]
      %v753 = vld [vmem:[#allocation2 + $0x50] sm:$0xff]
      %v754 = vld [vmem:[#allocation2 + $0x60] sm:$0xff]
      %v755 = vld [vmem:[#allocation2 + $0x70] sm:$0xff]
      %v756 = vld [vmem:[%s3] sm:$0x1]
      %v757 = vlaneseq
      %v758 = vshrl.u32 %v757, 7
      %v759 = vsub.s32 0, %v758
      %v760 = vrot.slane %v756, %v759
      %v761 = vmul.f32 %v748, %v760
      %v762 = vmul.f32 %v749, %v760
      %v763 = vmul.f32 %v750, %v760
      %v764 = vmul.f32 %v751, %v760
      %v765 = vmul.f32 %v752, %v760
      %v766 = vmul.f32 %v753, %v760
      %v767 = vmul.f32 %v754, %v760
      %v768 = vmul.f32 %v755, %v760
      %v769 = vadd.f32 %v761, 0.0
      %v770 = vadd.f32 %v762, 0.0
      %v771 = vadd.f32 %v763, 0.0
      %v772 = vadd.f32 %v764, 0.0
      %v773 = vadd.f32 %v765, 0.0
      %v774 = vadd.f32 %v766, 0.0
      %v775 = vadd.f32 %v767, 0.0
      %v776 = vadd.f32 %v768, 0.0
      %v777 = vld [vmem:[#allocation2 + $0x1] sm:$0xff]
      %v778 = vld [vmem:[#allocation2 + $0x11] sm:$0xff]
      %v779 = vld [vmem:[#allocation2 + $0x21] sm:$0xff]
      %v780 = vld [vmem:[#allocation2 + $0x31] sm:$0xff]
      %v781 = vld [vmem:[#allocation2 + $0x41] sm:$0xff]
      %v782 = vld [vmem:[#allocation2 + $0x51] sm:$0xff]
      %v783 = vld [vmem:[#allocation2 + $0x61] sm:$0xff]
      %v784 = vld [vmem:[#allocation2 + $0x71] sm:$0xff]
      %v785 = vld [vmem:[%s3 + $0x1] sm:$0x1]
      %v786 = vlaneseq
      %v787 = vshrl.u32 %v786, 7
      %v788 = vsub.s32 0, %v787
      %v789 = vrot.slane %v785, %v788
      %v790 = vmul.f32 %v777, %v789
      %v791 = vmul.f32 %v778, %v789
      %v792 = vmul.f32 %v779, %v789
      %v793 = vmul.f32 %v780, %v789
      %v794 = vmul.f32 %v781, %v789
      %v795 = vmul.f32 %v782, %v789
      %v796 = vmul.f32 %v783, %v789
      %v797 = vmul.f32 %v784, %v789
      %v798 = vadd.f32 %v769, %v790
      %v799 = vadd.f32 %v770, %v791
      %v800 = vadd.f32 %v771, %v792
      %v801 = vadd.f32 %v772, %v793
      %v802 = vadd.f32 %v773, %v794
      %v803 = vadd.f32 %v774, %v795
      %v804 = vadd.f32 %v775, %v796
      %v805 = vadd.f32 %v776, %v797
      %v806 = vld [vmem:[#allocation2 + $0x2] sm:$0xff]
      %v807 = vld [vmem:[#allocation2 + $0x12] sm:$0xff]
      %v808 = vld [vmem:[#allocation2 + $0x22] sm:$0xff]
      %v809 = vld [vmem:[#allocation2 + $0x32] sm:$0xff]
      %v810 = vld [vmem:[#allocation2 + $0x42] sm:$0xff]
      %v811 = vld [vmem:[#allocation2 + $0x52] sm:$0xff]
      %v812 = vld [vmem:[#allocation2 + $0x62] sm:$0xff]
      %v813 = vld [vmem:[#allocation2 + $0x72] sm:$0xff]
      %v814 = vld [vmem:[%s3 + $0x2] sm:$0x1]
      %v815 = vlaneseq
      %v816 = vshrl.u32 %v815, 7
      %v817 = vsub.s32 0, %v816
      %v818 = vrot.slane %v814, %v817
      %v819 = vmul.f32 %v806, %v818
      %v820 = vmul.f32 %v807, %v818
      %v821 = vmul.f32 %v808, %v818
      %v822 = vmul.f32 %v809, %v818
      %v823 = vmul.f32 %v810, %v818
      %v824 = vmul.f32 %v811, %v818
      %v825 = vmul.f32 %v812, %v818
      %v826 = vmul.f32 %v813, %v818
      %v827 = vadd.f32 %v798, %v819
      %v828 = vadd.f32 %v799, %v820
      %v829 = vadd.f32 %v800, %v821
      %v830 = vadd.f32 %v801, %v822
      %v831 = vadd.f32 %v802, %v823
      %v832 = vadd.f32 %v803, %v824
      %v833 = vadd.f32 %v804, %v825
      %v834 = vadd.f32 %v805, %v826
      %v835 = vld [vmem:[%s739] sm:$0xff]
      %v836 = vld [vmem:[%s739 + $0x10] sm:$0xff]
      %v837 = vld [vmem:[%s739 + $0x20] sm:$0xff]
      %v838 = vld [vmem:[%s739 + $0x30] sm:$0xff]
      %v839 = vld [vmem:[%s739 + $0x40] sm:$0xff]
      %v840 = vld [vmem:[%s739 + $0x50] sm:$0xff]
      %v841 = vld [vmem:[%s739 + $0x60] sm:$0xff]
      %v842 = vld [vmem:[%s739 + $0x70] sm:$0xff]
      %v843 = vld [vmem:[%s3 + $0x3] sm:$0x1]
      %v844 = vlaneseq
      %v845 = vshrl.u32 %v844, 7
      %v846 = vsub.s32 0, %v845
      %v847 = vrot.slane %v843, %v846
      %v848 = vmul.f32 %v835, %v847
      %v849 = vmul.f32 %v836, %v847
      %v850 = vmul.f32 %v837, %v847
      %v851 = vmul.f32 %v838, %v847
      %v852 = vmul.f32 %v839, %v847
      %v853 = vmul.f32 %v840, %v847
      %v854 = vmul.f32 %v841, %v847
      %v855 = vmul.f32 %v842, %v847
      %v856 = vadd.f32 %v827, %v848
      %v857 = vadd.f32 %v828, %v849
      %v858 = vadd.f32 %v829, %v850
      %v859 = vadd.f32 %v830, %v851
      %v860 = vadd.f32 %v831, %v852
      %v861 = vadd.f32 %v832, %v853
      %v862 = vadd.f32 %v833, %v854
      %v863 = vadd.f32 %v834, %v855
      %v864 = vld [vmem:[%s739 + $0x1] sm:$0xff]
      %v865 = vld [vmem:[%s739 + $0x11] sm:$0xff]
      %v866 = vld [vmem:[%s739 + $0x21] sm:$0xff]
      %v867 = vld [vmem:[%s739 + $0x31] sm:$0xff]
      %v868 = vld [vmem:[%s739 + $0x41] sm:$0xff]
      %v869 = vld [vmem:[%s739 + $0x51] sm:$0xff]
      %v870 = vld [vmem:[%s739 + $0x61] sm:$0xff]
      %v871 = vld [vmem:[%s739 + $0x71] sm:$0xff]
      %v872 = vld [vmem:[%s3 + $0x4] sm:$0x1]
      %v873 = vlaneseq
      %v874 = vshrl.u32 %v873, 7
      %v875 = vsub.s32 0, %v874
      %v876 = vrot.slane %v872, %v875
      %v877 = vmul.f32 %v864, %v876
      %v878 = vmul.f32 %v865, %v876
      %v879 = vmul.f32 %v866, %v876
      %v880 = vmul.f32 %v867, %v876
      %v881 = vmul.f32 %v868, %v876
      %v882 = vmul.f32 %v869, %v876
      %v883 = vmul.f32 %v870, %v876
      %v884 = vmul.f32 %v871, %v876
      %v885 = vadd.f32 %v856, %v877
      %v886 = vadd.f32 %v857, %v878
      %v887 = vadd.f32 %v858, %v879
      %v888 = vadd.f32 %v859, %v880
      %v889 = vadd.f32 %v860, %v881
      %v890 = vadd.f32 %v861, %v882
      %v891 = vadd.f32 %v862, %v883
      %v892 = vadd.f32 %v863, %v884
      %v893 = vld [vmem:[%s739 + $0x2] sm:$0xff]
      %v894 = vld [vmem:[%s739 + $0x12] sm:$0xff]
      %v895 = vld [vmem:[%s739 + $0x22] sm:$0xff]
      %v896 = vld [vmem:[%s739 + $0x32] sm:$0xff]
      %v897 = vld [vmem:[%s739 + $0x42] sm:$0xff]
      %v898 = vld [vmem:[%s739 + $0x52] sm:$0xff]
      %v899 = vld [vmem:[%s739 + $0x62] sm:$0xff]
      %v900 = vld [vmem:[%s739 + $0x72] sm:$0xff]
      %v901 = vld [vmem:[%s3 + $0x5] sm:$0x1]
      %v902 = vlaneseq
      %v903 = vshrl.u32 %v902, 7
      %v904 = vsub.s32 0, %v903
      %v905 = vrot.slane %v901, %v904
      %v906 = vmul.f32 %v893, %v905
      %v907 = vmul.f32 %v894, %v905
      %v908 = vmul.f32 %v895, %v905
      %v909 = vmul.f32 %v896, %v905
      %v910 = vmul.f32 %v897, %v905
      %v911 = vmul.f32 %v898, %v905
      %v912 = vmul.f32 %v899, %v905
      %v913 = vmul.f32 %v900, %v905
      %v914 = vadd.f32 %v885, %v906
      %v915 = vadd.f32 %v886, %v907
      %v916 = vadd.f32 %v887, %v908
      %v917 = vadd.f32 %v888, %v909
      %v918 = vadd.f32 %v889, %v910
      %v919 = vadd.f32 %v890, %v911
      %v920 = vadd.f32 %v891, %v912
      %v921 = vadd.f32 %v892, %v913
      %s922 = scalar_lea.vmem [#allocation2], 32
      %v923 = vld [vmem:[%s922] sm:$0xff]
      %v924 = vld [vmem:[%s922 + $0x10] sm:$0xff]
      %v925 = vld [vmem:[%s922 + $0x20] sm:$0xff]
      %v926 = vld [vmem:[%s922 + $0x30] sm:$0xff]
      %v927 = vld [vmem:[%s922 + $0x40] sm:$0xff]
      %v928 = vld [vmem:[%s922 + $0x50] sm:$0xff]
      %v929 = vld [vmem:[%s922 + $0x60] sm:$0xff]
      %v930 = vld [vmem:[%s922 + $0x70] sm:$0xff]
      %v931 = vld [vmem:[%s3 + $0x6] sm:$0x1]
      %v932 = vlaneseq
      %v933 = vshrl.u32 %v932, 7
      %v934 = vsub.s32 0, %v933
      %v935 = vrot.slane %v931, %v934
      %v936 = vmul.f32 %v923, %v935
      %v937 = vmul.f32 %v924, %v935
      %v938 = vmul.f32 %v925, %v935
      %v939 = vmul.f32 %v926, %v935
      %v940 = vmul.f32 %v927, %v935
      %v941 = vmul.f32 %v928, %v935
      %v942 = vmul.f32 %v929, %v935
      %v943 = vmul.f32 %v930, %v935
      %v944 = vadd.f32 %v914, %v936
      %v945 = vadd.f32 %v915, %v937
      %v946 = vadd.f32 %v916, %v938
      %v947 = vadd.f32 %v917, %v939
      %v948 = vadd.f32 %v918, %v940
      %v949 = vadd.f32 %v919, %v941
      %v950 = vadd.f32 %v920, %v942
      %v951 = vadd.f32 %v921, %v943
      %v952 = vld [vmem:[%s922 + $0x1] sm:$0xff]
      %v953 = vld [vmem:[%s922 + $0x11] sm:$0xff]
      %v954 = vld [vmem:[%s922 + $0x21] sm:$0xff]
      %v955 = vld [vmem:[%s922 + $0x31] sm:$0xff]
      %v956 = vld [vmem:[%s922 + $0x41] sm:$0xff]
      %v957 = vld [vmem:[%s922 + $0x51] sm:$0xff]
      %v958 = vld [vmem:[%s922 + $0x61] sm:$0xff]
      %v959 = vld [vmem:[%s922 + $0x71] sm:$0xff]
      %v960 = vld [vmem:[%s3 + $0x7] sm:$0x1]
      %v961 = vlaneseq
      %v962 = vshrl.u32 %v961, 7
      %v963 = vsub.s32 0, %v962
      %v964 = vrot.slane %v960, %v963
      %v965 = vmul.f32 %v952, %v964
      %v966 = vmul.f32 %v953, %v964
      %v967 = vmul.f32 %v954, %v964
      %v968 = vmul.f32 %v955, %v964
      %v969 = vmul.f32 %v956, %v964
      %v970 = vmul.f32 %v957, %v964
      %v971 = vmul.f32 %v958, %v964
      %v972 = vmul.f32 %v959, %v964
      %v973 = vadd.f32 %v944, %v965
      %v974 = vadd.f32 %v945, %v966
      %v975 = vadd.f32 %v946, %v967
      %v976 = vadd.f32 %v947, %v968
      %v977 = vadd.f32 %v948, %v969
      %v978 = vadd.f32 %v949, %v970
      %v979 = vadd.f32 %v950, %v971
      %v980 = vadd.f32 %v951, %v972
      %v981 = vld [vmem:[%s922 + $0x2] sm:$0xff]
      %v982 = vld [vmem:[%s922 + $0x12] sm:$0xff]
      %v983 = vld [vmem:[%s922 + $0x22] sm:$0xff]
      %v984 = vld [vmem:[%s922 + $0x32] sm:$0xff]
      %v985 = vld [vmem:[%s922 + $0x42] sm:$0xff]
      %v986 = vld [vmem:[%s922 + $0x52] sm:$0xff]
      %v987 = vld [vmem:[%s922 + $0x62] sm:$0xff]
      %v988 = vld [vmem:[%s922 + $0x72] sm:$0xff]
      %v989 = vld [vmem:[%s3 + $0x8] sm:$0x1]
      %v990 = vlaneseq
      %v991 = vshrl.u32 %v990, 7
      %v992 = vsub.s32 0, %v991
      %v993 = vrot.slane %v989, %v992
      %v994 = vmul.f32 %v981, %v993
      %v995 = vmul.f32 %v982, %v993
      %v996 = vmul.f32 %v983, %v993
      %v997 = vmul.f32 %v984, %v993
      %v998 = vmul.f32 %v985, %v993
      %v999 = vmul.f32 %v986, %v993
      %v1000 = vmul.f32 %v987, %v993
      %v1001 = vmul.f32 %v988, %v993
      %v1002 = vadd.f32 %v973, %v994
      %v1003 = vadd.f32 %v974, %v995
      %v1004 = vadd.f32 %v975, %v996
      %v1005 = vadd.f32 %v976, %v997
      %v1006 = vadd.f32 %v977, %v998
      %v1007 = vadd.f32 %v978, %v999
      %v1008 = vadd.f32 %v979, %v1000
      %v1009 = vadd.f32 %v980, %v1001
      %1010 = vst.msk [vmem:[%s262] sm:$0xff] %vm717, %v1002
      %1011 = vst.msk [vmem:[%s262 + $0x8] sm:$0xff] %vm717, %v1003
      %1012 = vst.msk [vmem:[%s262 + $0x10] sm:$0xff] %vm717, %v1004
      %1013 = vst.msk [vmem:[%s262 + $0x18] sm:$0xff] %vm717, %v1005
      %1014 = vst.msk [vmem:[%s262 + $0x20] sm:$0xff] %vm717, %v1006
      %1015 = vst.msk [vmem:[%s262 + $0x28] sm:$0xff] %vm717, %v1007
      %1016 = vst.msk [vmem:[%s262 + $0x30] sm:$0xff] %vm717, %v1008
      %1017 = vst.msk [vmem:[%s262 + $0x38] sm:$0xff] %vm717, %v1009
      %v1018 = vsel %vm717, %v1002, 0.0
      %v1019 = vsel %vm717, %v1003, 0.0
      %v1020 = vadd.f32 %v1018, %v1019
      %v1021 = vsel %vm717, %v1004, 0.0
      %v1022 = vadd.f32 %v1020, %v1021
      %v1023 = vsel %vm717, %v1005, 0.0
      %v1024 = vadd.f32 %v1022, %v1023
      %v1025 = vsel %vm717, %v1006, 0.0
      %v1026 = vadd.f32 %v1024, %v1025
      %v1027 = vsel %vm717, %v1007, 0.0
      %v1028 = vadd.f32 %v1026, %v1027
      %v1029 = vsel %vm717, %v1008, 0.0
      %v1030 = vadd.f32 %v1028, %v1029
      %v1031 = vsel %vm717, %v1009, 0.0
      %v1032 = vadd.f32 %v1030, %v1031
      %v1033 = vsel %vm717, %v1032, 0.0
      %v1034 = vrot.slane %v1033, 4
      %v1035 = vadd.f32 %v1033, %v1034
      %v1036 = vrot.slane %v1035, 2
      %v1037 = vadd.f32 %v1035, %v1036
      %v1038 = vrot.slane %v1037, 1
      %v1039 = vadd.f32 %v1037, %v1038
      %vm1040 = vcmask 24576
      %1041 = vst.msk [vmem:[%s265] sm:$0x1] %vm1040, %v1039
      %v1042 = vmul.f32 %v1002, %v1002
      %v1043 = vmul.f32 %v1003, %v1003
      %v1044 = vmul.f32 %v1004, %v1004
      %v1045 = vmul.f32 %v1005, %v1005
      %v1046 = vmul.f32 %v1006, %v1006
      %v1047 = vmul.f32 %v1007, %v1007
      %v1048 = vmul.f32 %v1008, %v1008
      %v1049 = vmul.f32 %v1009, %v1009
      %v1050 = vsel %vm717, %v1042, 0.0
      %v1051 = vsel %vm717, %v1043, 0.0
      %v1052 = vadd.f32 %v1050, %v1051
      %v1053 = vsel %vm717, %v1044, 0.0
      %v1054 = vadd.f32 %v1052, %v1053
      %v1055 = vsel %vm717, %v1045, 0.0
      %v1056 = vadd.f32 %v1054, %v1055
      %v1057 = vsel %vm717, %v1046, 0.0
      %v1058 = vadd.f32 %v1056, %v1057
      %v1059 = vsel %vm717, %v1047, 0.0
      %v1060 = vadd.f32 %v1058, %v1059
      %v1061 = vsel %vm717, %v1048, 0.0
      %v1062 = vadd.f32 %v1060, %v1061
      %v1063 = vsel %vm717, %v1049, 0.0
      %v1064 = vadd.f32 %v1062, %v1063
      %v1065 = vsel %vm717, %v1064, 0.0
      %v1066 = vrot.slane %v1065, 4
      %v1067 = vadd.f32 %v1065, %v1066
      %v1068 = vrot.slane %v1067, 2
      %v1069 = vadd.f32 %v1067, %v1068
      %v1070 = vrot.slane %v1069, 1
      %v1071 = vadd.f32 %v1069, %v1070
      %1072 = vst.msk [vmem:[%s268] sm:$0x1] %vm1040, %v1071
      %p1073 = scmp.lt.s32.totalorder %s18, 1
      %s1074 = scalar_select %p1073, %s18, 1
      %s1075 = smul.addr %s1074, 8
      %s1076 = smul.addr %s1075, 8
      %s1077 = scalar_lea.vmem %s4, %s1076
      %p1078 = scmp.lt.s32.totalorder %s18, 1
      %s1079 = scalar_select %p1078, %s18, 1
      %s1080 = scalar_lea.vmem %s5, %s1079
      %p1081 = scmp.lt.s32.totalorder %s18, 1
      %s1082 = scalar_select %p1081, %s18, 1
      %s1083 = scalar_lea.vmem %s6, %s1082
      // Predicated region
      $region37: #{basic_block_forward.6} parent=35 // pred_check
        %p1084 = pneg %p125
      $region38: #{basic_block_forward.6} parent=35 // pred_check_branch
        %1086 = sbr.rel (%p1084) target = $region40
      $region39: #{basic_block_forward.6} parent=35 // pred_region
        _
      $region40: #{basic_block_forward.6} parent=35 // pred_fallthru
        _
      // Predicated region
      $region41: #{basic_block_forward.6} parent=35 // pred_check
        %p1087 = pneg %p151
      $region42: #{basic_block_forward.6} parent=35 // pred_check_branch
        %1089 = sbr.rel (%p1087) target = $region44
      $region43: #{basic_block_forward.6} parent=35 // pred_region
        _
      $region44: #{basic_block_forward.6} parent=35 // pred_fallthru
        _
      // Predicated region
      $region45: #{basic_block_forward.6} parent=35 // pred_check
        %p1090 = pneg %p177
      $region46: #{basic_block_forward.6} parent=35 // pred_check_branch
        %1092 = sbr.rel (%p1090) target = $region48
      $region47: #{basic_block_forward.6} parent=35 // pred_region
        _
      $region48: #{basic_block_forward.6} parent=35 // pred_fallthru
        _
    $region36: #{basic_block_forward.6} parent=5 // pred_fallthru
      _
    %p1093 = scmp.le.s32.totalorder 2, %s13
    // Predicated region
    $region49: #{basic_block_forward.6} parent=5 // pred_check
      %p1094 = pneg %p1093
    $region50: #{basic_block_forward.6} parent=5 // pred_check_branch
      %1096 = sbr.rel (%p1094) target = $region52
    $region51: #{basic_block_forward.6} parent=5 // pred_region
      %s1097 = ssub.s32 %s13, 2
      // Predicated region
      $region53: #{basic_block_forward.6} parent=51 // pred_check
        %p1098 = pneg %p131
      $region54: #{basic_block_forward.6} parent=51 // pred_check_branch
        %1100 = sbr.rel (%p1098) target = $region56
      $region55: #{basic_block_forward.6} parent=51 // pred_region
        %p1101 = scmp.lt.s32.totalorder %s19, 1
        %s1102 = scalar_select %p1101, %s19, 1
        %s1103 = smul.addr %s1102, 8
        %s1104 = smul.addr %s1103, 8
        %s1105 = scalar_lea.vmem %s4, %s1104
      $region56: #{basic_block_forward.6} parent=51 // pred_fallthru
        _
      // Predicated region
      $region57: #{basic_block_forward.6} parent=51 // pred_check
        %p1106 = pneg %p157
      $region58: #{basic_block_forward.6} parent=51 // pred_check_branch
        %1108 = sbr.rel (%p1106) target = $region60
      $region59: #{basic_block_forward.6} parent=51 // pred_region
        %p1109 = scmp.lt.s32.totalorder %s19, 1
        %s1110 = scalar_select %p1109, %s19, 1
        %s1111 = scalar_lea.vmem %s5, %s1110
      $region60: #{basic_block_forward.6} parent=51 // pred_fallthru
        _
      // Predicated region
      $region61: #{basic_block_forward.6} parent=51 // pred_check
        %p1112 = pneg %p183
      $region62: #{basic_block_forward.6} parent=51 // pred_check_branch
        %1114 = sbr.rel (%p1112) target = $region64
      $region63: #{basic_block_forward.6} parent=51 // pred_region
        %p1115 = scmp.lt.s32.totalorder %s19, 1
        %s1116 = scalar_select %p1115, %s19, 1
        %s1117 = scalar_lea.vmem %s6, %s1116
      $region64: #{basic_block_forward.6} parent=51 // pred_fallthru
        _
    $region52: #{basic_block_forward.6} parent=5 // pred_fallthru
      _
  $region6: #{basic_block_forward.6} parent=0 // loop_footer
    %s17 = sadd.s32 1, %s13
  $region7: #{basic_block_forward.6} parent=0 // loop_footer_branch
    %12 = sbr.rel target = $region3
  $region8: #{basic_block_forward.6} parent=0 // loop_exit
    _

// kernel: basic_block_forward.7
$region0: #{basic_block_forward.7}
  #allocation0 [shape = 'u32[]', space=smem, size = 0x4, offset = 0x4, fixed_abs, tag = 'smem constant byte address 0x4 - core index']
  #allocation1 [shape = 'u32[144,128]{1,0:T(1,128)}', space=vmem, size = 0x12000, scoped, tag = 'internal scratch']
  %s0 = inlined_call_operand.vmem [shape: f32[2,8,8,4], index: 0, kind: input, shape index: {}]
  %s1 = inlined_call_operand.vmem [shape: f32[2,1,8], index: 1, kind: input, shape index: {}]
  %s2 = inlined_call_operand.vmem [shape: f32[1,1,8], index: 2, kind: input, shape index: {}]
  %s3 = inlined_call_operand.vmem [shape: f32[2,8,8,8], index: 3, kind: input, shape index: {}]
  %s4 = inlined_call_operand.vmem [shape: f32[2,8,8,8], index: 4, kind: output, shape index: {}]
  %s5 = sld [smem:[#allocation0]]
  $region49: #{basic_block_forward.7} parent=0
    _
  %s7 = ssub.s32 1, %s5
  %s8 = scalar_select 0, %s7, %s5
  loop: start=0, step=1, limit=4
  $region2: #{basic_block_forward.7} parent=0 // loop_pre_header
    _
  $region3: #{basic_block_forward.7} parent=0 // loop_header
    %s10 = sphi 0, %s14
    %p11 = scmp.ge.s32.totalorder %s10, 4
    %s17 = sphi 0, %s29
    %s18 = sphi 0, %s25
    %s19 = sphi 0, %s17
    %s20 = sphi 0, %s18
    %s21 = sphi 0, %s19
    %s22 = sphi 0, %s20
    %s34 = sphi 0, %s36
    %s37 = sphi 0, %s34
    %s38 = sphi 0, %s37
    %s54 = sphi 0, %s38
    %s60 = sphi 0, %s62
    %s63 = sphi 0, %s60
    %s64 = sphi 0, %s63
    %s80 = sphi 0, %s64
    %s84 = sphi 0, %s84
    %s86 = sphi 0, %s84
    %s87 = sphi 0, %s86
    %s101 = sphi 0, %s87
    %s109 = sphi 0, %s111
    %s112 = sphi 0, %s109
    %s113 = sphi 0, %s112
    %s129 = sphi 0, %s113
    %s137 = sphi 0, %s139
    %s140 = sphi 0, %s137
    %s141 = sphi 0, %s140
    %s157 = sphi 0, %s141
  $region4: #{basic_block_forward.7} parent=0 // loop_header_branch
    %13 = sbr.rel (%p11) target = $region8
  $region5: #{basic_block_forward.7} parent=0 // loop_body
    %s15 = ssub.s32 %s10, 1
    %s16 = ssub.s32 %s10, 2
    %s23 = sadd.s32 1, %s18
    %p24 = scmp.ge.s32.totalorder %s23, 1
    %s25 = scalar_select %p24, 0, %s23
    %s26 = sadd.s32 1, %s17
    %s27 = scalar_select %p24, %s26, %s17
    %p28 = scmp.ge.s32.totalorder %s27, 2
    %s29 = scalar_select %p28, 0, %s27
    %s30 = ssub.s32 %s17, %s29
    %s31 = ssub.s32 %s18, %s25
    %s32 = sor.u32 %s30, %s31
    %p33 = scmp.eq.s32.totalorder %s32, 0
    %s35 = sadd.s32 %s34, 1
    %s36 = scalar_select %p33, %s34, %s35
    %p39 = pneg %p33
    %p40 = scmp.eq.s32.totalorder %s10, 1
    %p41 = por %p39, %p40
    %p42 = scmp.ne.s32.totalorder %s34, %s37
    %p43 = scmp.eq.s32.totalorder %s10, 0
    %p44 = por %p42, %p43
    %p45 = scmp.ne.s32.totalorder %s34, %s37
    %p46 = scmp.eq.s32.totalorder %s15, 1
    %p47 = por %p45, %p46
    %p48 = scmp.ne.s32.totalorder %s37, %s38
    %p49 = scmp.eq.s32.totalorder %s15, 0
    %p50 = por %p48, %p49
    %p51 = scmp.ne.s32.totalorder %s37, %s38
    %p52 = scmp.eq.s32.totalorder %s16, 1
    %p53 = por %p51, %p52
    %p55 = scmp.ne.s32.totalorder %s38, %s54
    %p56 = scmp.eq.s32.totalorder %s16, 0
    %p57 = por %p55, %p56
    %s58 = ssub.s32 %s17, %s29
    %p59 = scmp.eq.s32.totalorder %s58, 0
    %s61 = sadd.s32 %s60, 1
    %s62 = scalar_select %p59, %s60, %s61
    %p65 = pneg %p59
    %p66 = scmp.eq.s32.totalorder %s10, 1
    %p67 = por %p65, %p66
    %p68 = scmp.ne.s32.totalorder %s60, %s63
    %p69 = scmp.eq.s32.totalorder %s10, 0
    %p70 = por %p68, %p69
    %p71 = scmp.ne.s32.totalorder %s60, %s63
    %p72 = scmp.eq.s32.totalorder %s15, 1
    %p73 = por %p71, %p72
    %p74 = scmp.ne.s32.totalorder %s63, %s64
    %p75 = scmp.eq.s32.totalorder %s15, 0
    %p76 = por %p74, %p75
    %p77 = scmp.ne.s32.totalorder %s63, %s64
    %p78 = scmp.eq.s32.totalorder %s16, 1
    %p79 = por %p77, %p78
    %p81 = scmp.ne.s32.totalorder %s64, %s80
    %p82 = scmp.eq.s32.totalorder %s16, 0
    %p83 = por %p81, %p82
    %s85 = sadd.s32 %s84, 1
    %p88 = scmp.eq.s32.totalorder %s10, 1
    %p89 = scmp.ne.s32.totalorder %s84, %s86
    %p90 = scmp.eq.s32.totalorder %s10, 0
    %p91 = por %p89, %p90
    %p92 = scmp.ne.s32.totalorder %s84, %s86
    %p93 = scmp.eq.s32.totalorder %s15, 1
    %p94 = por %p92, %p93
    %p95 = scmp.ne.s32.totalorder %s86, %s87
    %p96 = scmp.eq.s32.totalorder %s15, 0
    %p97 = por %p95, %p96
    %p98 = scmp.ne.s32.totalorder %s86, %s87
    %p99 = scmp.eq.s32.totalorder %s16, 1
    %p100 = por %p98, %p99
    %p102 = scmp.ne.s32.totalorder %s87, %s101
    %p103 = scmp.eq.s32.totalorder %s16, 0
    %p104 = por %p102, %p103
    %s105 = ssub.s32 %s17, %s29
    %s106 = ssub.s32 %s18, %s25
    %s107 = sor.u32 %s105, %s106
    %p108 = scmp.eq.s32.totalorder %s107, 0
    %s110 = sadd.s32 %s109, 1
    %s111 = scalar_select %p108, %s109, %s110
    %p114 = pneg %p108
    %p115 = scmp.eq.s32.totalorder %s10, 1
    %p116 = por %p114, %p115
    %p117 = scmp.ne.s32.totalorder %s109, %s112
    %p118 = scmp.eq.s32.totalorder %s10, 0
    %p119 = por %p117, %p118
    %p120 = scmp.ne.s32.totalorder %s109, %s112
    %p121 = scmp.eq.s32.totalorder %s15, 1
    %p122 = por %p120, %p121
    %p123 = scmp.ne.s32.totalorder %s112, %s113
    %p124 = scmp.eq.s32.totalorder %s15, 0
    %p125 = por %p123, %p124
    %p126 = scmp.ne.s32.totalorder %s112, %s113
    %p127 = scmp.eq.s32.totalorder %s16, 1
    %p128 = por %p126, %p127
    %p130 = scmp.ne.s32.totalorder %s113, %s129
    %p131 = scmp.eq.s32.totalorder %s16, 0
    %p132 = por %p130, %p131
    %s133 = ssub.s32 %s17, %s29
    %s134 = ssub.s32 %s18, %s25
    %s135 = sor.u32 %s133, %s134
    %p136 = scmp.eq.s32.totalorder %s135, 0
    %s138 = sadd.s32 %s137, 1
    %s139 = scalar_select %p136, %s137, %s138
    %p142 = pneg %p136
    %p143 = scmp.eq.s32.totalorder %s10, 1
    %p144 = por %p142, %p143
    %p145 = scmp.ne.s32.totalorder %s137, %s140
    %p146 = scmp.eq.s32.totalorder %s10, 0
    %p147 = por %p145, %p146
    %p148 = scmp.ne.s32.totalorder %s137, %s140
    %p149 = scmp.eq.s32.totalorder %s15, 1
    %p150 = por %p148, %p149
    %p151 = scmp.ne.s32.totalorder %s140, %s141
    %p152 = scmp.eq.s32.totalorder %s15, 0
    %p153 = por %p151, %p152
    %p154 = scmp.ne.s32.totalorder %s140, %s141
    %p155 = scmp.eq.s32.totalorder %s16, 1
    %p156 = por %p154, %p155
    %p158 = scmp.ne.s32.totalorder %s141, %s157
    %p159 = scmp.eq.s32.totalorder %s16, 0
    %p160 = por %p158, %p159
    %p161 = scmp.le.s32.totalorder 1, %s10
    %p162 = scmp.lt.s32.totalorder %s10, 3
    %p163 = pnand %p161, %p162
    %p164 = pneg %p163
    // Predicated region
    $region9: #{basic_block_forward.7} parent=5 // pred_check
      _
    $region10: #{basic_block_forward.7} parent=5 // pred_check_branch
      %166 = sbr.rel (%p163) target = $region12
    $region11: #{basic_block_forward.7} parent=5 // pred_region
      %s167 = ssub.s32 %s10, 1
      // Predicated region
      $region13: #{basic_block_forward.7} parent=11 // pred_check
        %p168 = pneg %p97
      $region14: #{basic_block_forward.7} parent=11 // pred_check_branch
        %170 = sbr.rel (%p168) target = $region16
      $region15: #{basic_block_forward.7} parent=11 // pred_region
        _
      $region16: #{basic_block_forward.7} parent=11 // pred_fallthru
        _
    $region12: #{basic_block_forward.7} parent=5 // pred_fallthru
      _
    %p171 = scmp.lt.s32.totalorder %s10, 2
    // Predicated region
    $region17: #{basic_block_forward.7} parent=5 // pred_check
      %p172 = pneg %p171
    $region18: #{basic_block_forward.7} parent=5 // pred_check_branch
      %174 = sbr.rel (%p172) target = $region20
    $region19: #{basic_block_forward.7} parent=5 // pred_region
      // Predicated region
      $region21: #{basic_block_forward.7} parent=19 // pred_check
        %p175 = pneg %p44
      $region22: #{basic_block_forward.7} parent=19 // pred_check_branch
        %177 = sbr.rel (%p175) target = $region24
      $region23: #{basic_block_forward.7} parent=19 // pred_region
        %s178 = smul.u32 8, %s18
        %p179 = scmp.lt.s32.totalorder %s17, 1
        %s180 = scalar_select %p179, %s17, 1
        %p181 = scmp.lt.s32.totalorder %s178, 7
        %s182 = scalar_select %p181, %s178, 7
        %s183 = smul.addr %s180, 8
        %s184 = sadd.s32 %s182, %s183
        %s185 = smul.addr %s184, 8
        %s186 = scalar_lea.vmem %s0, %s185
        %s187 = smul.u32 8, %s18
      $region24: #{basic_block_forward.7} parent=19 // pred_fallthru
        _
      // Predicated region
      $region25: #{basic_block_forward.7} parent=19 // pred_check
        %p188 = pneg %p70
      $region26: #{basic_block_forward.7} parent=19 // pred_check_branch
        %190 = sbr.rel (%p188) target = $region28
      $region27: #{basic_block_forward.7} parent=19 // pred_region
        %p191 = scmp.lt.s32.totalorder %s17, 1
        %s192 = scalar_select %p191, %s17, 1
        %s193 = scalar_lea.vmem %s1, %s192
      $region28: #{basic_block_forward.7} parent=19 // pred_fallthru
        _
      // Predicated region
      $region29: #{basic_block_forward.7} parent=19 // pred_check
        %p194 = pneg %p119
      $region30: #{basic_block_forward.7} parent=19 // pred_check_branch
        %196 = sbr.rel (%p194) target = $region32
      $region31: #{basic_block_forward.7} parent=19 // pred_region
        %s197 = smul.u32 8, %s18
        %p198 = scmp.lt.s32.totalorder %s17, 1
        %s199 = scalar_select %p198, %s17, 1
        %p200 = scmp.lt.s32.totalorder %s197, 7
        %s201 = scalar_select %p200, %s197, 7
        %s202 = smul.addr %s199, 8
        %s203 = sadd.s32 %s201, %s202
        %s204 = smul.addr %s203, 8
        %s205 = scalar_lea.vmem %s3, %s204
        %s206 = smul.u32 8, %s18
      $region32: #{basic_block_forward.7} parent=19 // pred_fallthru
        _
    $region20: #{basic_block_forward.7} parent=5 // pred_fallthru
      _
    %p207 = scmp.le.s32.totalorder 1, %s10
    %p208 = scmp.lt.s32.totalorder %s10, 3
    %p209 = pnand %p207, %p208
    %p210 = pneg %p209
    // Predicated region
    $region33: #{basic_block_forward.7} parent=5 // pred_check
      _
    $region34: #{basic_block_forward.7} parent=5 // pred_check_branch
      %212 = sbr.rel (%p209) target = $region36
    $region35: #{basic_block_forward.7} parent=5 // pred_region
      %s213 = ssub.s32 %s10, 1
      %s214 = smul.u32 8, %s20
      %p215 = scmp.lt.s32.totalorder %s19, 1
      %s216 = scalar_select %p215, %s19, 1
      %p217 = scmp.lt.s32.totalorder %s214, 7
      %s218 = scalar_select %p217, %s214, 7
      %s219 = smul.addr %s216, 8
      %s220 = sadd.s32 %s218, %s219
      %s221 = smul.addr %s220, 8
      %s222 = scalar_lea.vmem %s0, %s221
      %p223 = pneg %p50
      %p224 = pneg %p47
      %p225 = scmp.lt.s32.totalorder %s19, 1
      %s226 = scalar_select %p225, %s19, 1
      %s227 = scalar_lea.vmem %s1, %s226
      %p228 = pneg %p76
      %p229 = pneg %p73
      %p230 = pneg %p97
      %p231 = pneg %p94
      %s232 = smul.u32 8, %s20
      %p233 = scmp.lt.s32.totalorder %s19, 1
      %s234 = scalar_select %p233, %s19, 1
      %p235 = scmp.lt.s32.totalorder %s232, 7
      %s236 = scalar_select %p235, %s232, 7
      %s237 = smul.addr %s234, 8
      %s238 = sadd.s32 %s236, %s237
      %s239 = smul.addr %s238, 8
      %s240 = scalar_lea.vmem %s3, %s239
      %p241 = pneg %p125
      %p242 = pneg %p122
      %p243 = pneg %p153
      %p244 = pneg %p150
      %s245 = smul.u32 8, %s20
      %p246 = scmp.lt.s32.totalorder %s19, 1
      %s247 = scalar_select %p246, %s19, 1
      %p248 = scmp.lt.s32.totalorder %s245, 7
      %s249 = scalar_select %p248, %s245, 7
      %s250 = smul.addr %s247, 8
      %s251 = sadd.s32 %s249, %s250
      %s252 = smul.addr %s251, 8
      %s253 = scalar_lea.vmem %s4, %s252
      %s254 = smul.u32 8, %s20
      %p255 = scmp.lt.s32.totalorder %s19, 1
      %s256 = scalar_select %p255, %s19, 1
      %p257 = scmp.lt.s32.totalorder %s254, 7
      %s258 = scalar_select %p257, %s254, 7
      %s259 = smul.addr %s256, 8
      %s260 = sadd.s32 %s258, %s259
      %s261 = smul.addr %s260, 8
      %s262 = scalar_lea.vmem %s0, %s261
      %s263 = smul.u32 8, %s20
      %p264 = scmp.lt.s32.totalorder %s19, 1
      %s265 = scalar_select %p264, %s19, 1
      %s266 = scalar_lea.vmem %s1, %s265
      %s267 = smul.u32 8, %s20
      %p268 = scmp.lt.s32.totalorder %s19, 1
      %s269 = scalar_select %p268, %s19, 1
      %p270 = scmp.lt.s32.totalorder %s267, 7
      %s271 = scalar_select %p270, %s267, 7
      %s272 = smul.addr %s269, 8
      %s273 = sadd.s32 %s271, %s272
      %s274 = smul.addr %s273, 8
      %s275 = scalar_lea.vmem %s3, %s274
      %s276 = smul.u32 8, %s20
      %s277 = smul.u32 8, %s20
      %p278 = scmp.lt.s32.totalorder %s19, 1
      %s279 = scalar_select %p278, %s19, 1
      %p280 = scmp.lt.s32.totalorder %s277, 7
      %s281 = scalar_select %p280, %s277, 7
      %s282 = smul.addr %s279, 8
      %s283 = sadd.s32 %s281, %s282
      %s284 = smul.addr %s283, 8
      %s285 = scalar_lea.vmem %s4, %s284
      %s286 = smul.u32 8, %s20
      %v287 = vld [vmem:[%s262] sm:$0xff]
      %v288 = vld [vmem:[%s262 + $0x8] sm:$0xff]
      %v289 = vld [vmem:[%s262 + $0x10] sm:$0xff]
      %v290 = vld [vmem:[%s262 + $0x18] sm:$0xff]
      %v291 = vld [vmem:[%s262 + $0x20] sm:$0xff]
      %v292 = vld [vmem:[%s262 + $0x28] sm:$0xff]
      %v293 = vld [vmem:[%s262 + $0x30] sm:$0xff]
      %v294 = vld [vmem:[%s262 + $0x38] sm:$0xff]
      %303 = vrot.lane.b32.xlu0 %v287, 4
      %v304 = vpop.permute.xlu0 %303
      %305 = vrot.lane.b32.xlu0 %v288, 4
      %v306 = vpop.permute.xlu0 %305
      %307 = vrot.lane.b32.xlu0 %v289, 4
      %v308 = vpop.permute.xlu0 %307
      %309 = vrot.lane.b32.xlu0 %v290, 4
      %v310 = vpop.permute.xlu0 %309
      %311 = vrot.lane.b32.xlu0 %v291, 4
      %v312 = vpop.permute.xlu0 %311
      %313 = vrot.lane.b32.xlu0 %v292, 4
      %v314 = vpop.permute.xlu0 %313
      %315 = vrot.lane.b32.xlu0 %v293, 4
      %v316 = vpop.permute.xlu0 %315
      %317 = vrot.lane.b32.xlu0 %v294, 4
      %v318 = vpop.permute.xlu0 %317
      %vm327 = vcmask 31744
      %v328 = vsel %vm327, %v287, %v304
      %v329 = vsel %vm327, %v288, %v306
      %v330 = vsel %vm327, %v289, %v308
      %v331 = vsel %vm327, %v290, %v310
      %v332 = vsel %vm327, %v291, %v312
      %v333 = vsel %vm327, %v292, %v314
      %v334 = vsel %vm327, %v293, %v316
      %v335 = vsel %vm327, %v294, %v318
      %v336 = vld [vmem:[%s266] sm:$0x1]
      %v338 = vlaneseq
      %v339 = vshrl.u32 %v338, 7
      %v340 = vsub.s32 0, %v339
      %v341 = vrot.slane %v336, %v340
      %v343 = vmul.f32 %v328, %v341
      %v344 = vmul.f32 %v329, %v341
      %v345 = vmul.f32 %v330, %v341
      %v346 = vmul.f32 %v331, %v341
      %v347 = vmul.f32 %v332, %v341
      %v348 = vmul.f32 %v333, %v341
      %v349 = vmul.f32 %v334, %v341
      %v350 = vmul.f32 %v335, %v341
      %v351 = vld [vmem:[%s2] sm:$0x1]
      %v353 = vlaneseq
      %v354 = vshrl.u32 %v353, 7
      %v355 = vsub.s32 0, %v354
      %v356 = vrot.slane %v351, %v355
      %v358 = vadd.f32 %v343, %v356
      %v359 = vadd.f32 %v344, %v356
      %v360 = vadd.f32 %v345, %v356
      %v361 = vadd.f32 %v346, %v356
      %v362 = vadd.f32 %v347, %v356
      %v363 = vadd.f32 %v348, %v356
      %v364 = vadd.f32 %v349, %v356
      %v365 = vadd.f32 %v350, %v356
      %v366 = vld [vmem:[%s275] sm:$0xff]
      %v367 = vld [vmem:[%s275 + $0x8] sm:$0xff]
      %v368 = vld [vmem:[%s275 + $0x10] sm:$0xff]
      %v369 = vld [vmem:[%s275 + $0x18] sm:$0xff]
      %v370 = vld [vmem:[%s275 + $0x20] sm:$0xff]
      %v371 = vld [vmem:[%s275 + $0x28] sm:$0xff]
      %v372 = vld [vmem:[%s275 + $0x30] sm:$0xff]
      %v373 = vld [vmem:[%s275 + $0x38] sm:$0xff]
      %v374 = vadd.f32 %v358, %v366
      %v375 = vadd.f32 %v359, %v367
      %v376 = vadd.f32 %v360, %v368
      %v377 = vadd.f32 %v361, %v369
      %v378 = vadd.f32 %v362, %v370
      %v379 = vadd.f32 %v363, %v371
      %v380 = vadd.f32 %v364, %v372
      %v381 = vadd.f32 %v365, %v373
      %v382 = vmax.f32 %v374, 0.0
      %v383 = vmax.f32 %v375, 0.0
      %v384 = vmax.f32 %v376, 0.0
      %v385 = vmax.f32 %v377, 0.0
      %v386 = vmax.f32 %v378, 0.0
      %v387 = vmax.f32 %v379, 0.0
      %v388 = vmax.f32 %v380, 0.0
      %v389 = vmax.f32 %v381, 0.0
      %vm390 = vcmask 64512
      %391 = vst.msk [vmem:[%s285] sm:$0xff] %vm390, %v382
      %392 = vst.msk [vmem:[%s285 + $0x8] sm:$0xff] %vm390, %v383
      %393 = vst.msk [vmem:[%s285 + $0x10] sm:$0xff] %vm390, %v384
      %394 = vst.msk [vmem:[%s285 + $0x18] sm:$0xff] %vm390, %v385
      %395 = vst.msk [vmem:[%s285 + $0x20] sm:$0xff] %vm390, %v386
      %396 = vst.msk [vmem:[%s285 + $0x28] sm:$0xff] %vm390, %v387
      %397 = vst.msk [vmem:[%s285 + $0x30] sm:$0xff] %vm390, %v388
      %398 = vst.msk [vmem:[%s285 + $0x38] sm:$0xff] %vm390, %v389
      %s399 = smul.u32 8, %s20
      %p400 = scmp.lt.s32.totalorder %s19, 1
      %s401 = scalar_select %p400, %s19, 1
      %p402 = scmp.lt.s32.totalorder %s399, 7
      %s403 = scalar_select %p402, %s399, 7
      %s404 = smul.addr %s401, 8
      %s405 = sadd.s32 %s403, %s404
      %s406 = smul.addr %s405, 8
      %s407 = scalar_lea.vmem %s4, %s406
      // Predicated region
      $region37: #{basic_block_forward.7} parent=35 // pred_check
        %p408 = pneg %p150
      $region38: #{basic_block_forward.7} parent=35 // pred_check_branch
        %410 = sbr.rel (%p408) target = $region40
      $region39: #{basic_block_forward.7} parent=35 // pred_region
        %s411 = smul.u32 8, %s20
      $region40: #{basic_block_forward.7} parent=35 // pred_fallthru
        _
    $region36: #{basic_block_forward.7} parent=5 // pred_fallthru
      _
    %p412 = scmp.le.s32.totalorder 2, %s10
    // Predicated region
    $region41: #{basic_block_forward.7} parent=5 // pred_check
      %p413 = pneg %p412
    $region42: #{basic_block_forward.7} parent=5 // pred_check_branch
      %415 = sbr.rel (%p413) target = $region44
    $region43: #{basic_block_forward.7} parent=5 // pred_region
      %s416 = ssub.s32 %s10, 2
      // Predicated region
      $region45: #{basic_block_forward.7} parent=43 // pred_check
        %p417 = pneg %p156
      $region46: #{basic_block_forward.7} parent=43 // pred_check_branch
        %419 = sbr.rel (%p417) target = $region48
      $region47: #{basic_block_forward.7} parent=43 // pred_region
        %s420 = smul.u32 8, %s22
        %p421 = scmp.lt.s32.totalorder %s21, 1
        %s422 = scalar_select %p421, %s21, 1
        %p423 = scmp.lt.s32.totalorder %s420, 7
        %s424 = scalar_select %p423, %s420, 7
        %s425 = smul.addr %s422, 8
        %s426 = sadd.s32 %s424, %s425
        %s427 = smul.addr %s426, 8
        %s428 = scalar_lea.vmem %s4, %s427
      $region48: #{basic_block_forward.7} parent=43 // pred_fallthru
        _
    $region44: #{basic_block_forward.7} parent=5 // pred_fallthru
      _
  $region6: #{basic_block_forward.7} parent=0 // loop_footer
    %s14 = sadd.s32 1, %s10
  $region7: #{basic_block_forward.7} parent=0 // loop_footer_branch
    %9 = sbr.rel target = $region3
  $region8: #{basic_block_forward.7} parent=0 // loop_exit
    _

</llo_original>
